<compile_context>
chip_gen: v7x
topology: tpu7x:2x2x1
jax: 0.10.0
libtpu: 0.0.40
codegen_flags: <defaults>
</compile_context>

<pallas_src>
import jax
import jax.numpy as jnp
from jax.experimental import pallas as pl
from jax.experimental.pallas import tpu as pltpu

D_MODEL = 512
N_GCN_LAYERS = 5
N_HIDDEN_LAYERS = 3                               # MLP Linear+ReLU layers
N_LAYERS = N_GCN_LAYERS + N_HIDDEN_LAYERS         # 8 (Linear+ReLU) layers
LAYERS_PER_STEP = 4                               # layers fused per grid step
NUM_STEPS = N_LAYERS // LAYERS_PER_STEP           # grid=(2,)
assert N_LAYERS % LAYERS_PER_STEP == 0
OUT_DIM = 2
OUT_PAD = 128                                     # lane-dense padded head width


# ---------------------------------------------------------------------------
# Fused Pallas kernel
# ---------------------------------------------------------------------------
def fused_gcn_mlp_kernel(x_ref, a_ref, dnorm_ref, w_ref, b_ref,
                         wout_ref, bout_ref, o_ref, x_sc, ahat_sc):
    """One grid step == LAYERS_PER_STEP layers (statically unrolled).

    Global layer l < 5 : GCN layer   x <- relu((D@A) @ (x @ W_l + b_l))
    Global layer l >= 5: MLP hidden  x <- relu(x @ W_l + b_l)
    The last step additionally applies the Linear(D, 2) head (padded to 128
    lanes) and writes the output.
    """
    step = pl.program_id(0)

    @pl.when(step == 0)
    def _init():
        # Fold D_normalizer @ A once; cache in bf16 for single-pass MXU
        # aggregation on all later layers/steps.
        ahat = jnp.dot(dnorm_ref[...], a_ref[...],
                       preferred_element_type=jnp.float32)
        ahat_sc[...] = ahat.astype(jnp.bfloat16)
        x_sc[...] = x_ref[...].astype(jnp.bfloat16)

    # Statically unrolled layer loop; w_ref holds this step's (LPS, d, d)
    # bf16 weight block, biases are resident and indexed by global layer id.
    for j in range(LAYERS_PER_STEP):
        gl = step * LAYERS_PER_STEP + j            # global layer index (dynamic)

        # Linear: X @ W + b  (bf16 MXU inputs, f32 accumulation)
        h = jnp.dot(x_sc[...], w_ref[j],
                    preferred_element_type=jnp.float32) + b_ref[gl]

        @pl.when(gl < N_GCN_LAYERS)                # GCN: aggregate, then ReLU
        def _gcn():
            agg = jnp.dot(ahat_sc[...], h.astype(jnp.bfloat16),
                          preferred_element_type=jnp.float32)
            x_sc[...] = jnp.maximum(agg, 0.0).astype(jnp.bfloat16)

        @pl.when(gl >= N_GCN_LAYERS)               # MLP hidden: ReLU only
        def _mlp():
            x_sc[...] = jnp.maximum(h, 0.0).astype(jnp.bfloat16)

    # Final Linear(D, OUT_DIM) head on the last step (lane-dense padded store).
    # NOTE: o_ref is written only here.  This is safe ONLY because the output
    # index_map is constant, so HBM writeback happens once at grid end; do not
    # change the out index_map to per-step without also writing every step.
    @pl.when(step == pl.num_programs(0) - 1)
    def _final():
        o = jnp.dot(x_sc[...], wout_ref[...],
                    preferred_element_type=jnp.float32) + bout_ref[...]
        o_ref[...] = o.astype(o_ref.dtype)


# ---------------------------------------------------------------------------
# Wrapper
# ---------------------------------------------------------------------------
@jax.jit
def gcn_forward(params, image_features, A, D_normalizer):
    """image_features: (N, 512)   A, D_normalizer: (1, N, N)
    Returns (1, N, 2), matching the PyTorch module's output."""
    n, d = image_features.shape
    # Resident (N,N)/(N,512) blocks are fine for small graphs only: A/A_hat
    # VMEM use grows as O(N^2).  Add an N-tiling path before large graphs
    # (v7x's 64 MiB VMEM is the first to stop fitting).
    assert n <= 1024, "resident-A design: add N-tiling for large graphs"

    out_pad = pl.pallas_call(
        fused_gcn_mlp_kernel,
        out_shape=jax.ShapeDtypeStruct((n, OUT_PAD), jnp.float32),
        grid_spec=pltpu.PrefetchScalarGridSpec(
            num_scalar_prefetch=0,
            grid=(NUM_STEPS,),
            in_specs=[
                pl.BlockSpec((n, d), lambda s: (0, 0)),             # X (resident)
                pl.BlockSpec((n, n), lambda s: (0, 0)),             # A (resident)
                pl.BlockSpec((n, n), lambda s: (0, 0)),             # D_norm (resident)
                pl.BlockSpec((LAYERS_PER_STEP, d, d),
                             lambda s: (s, 0, 0)),                  # W (streamed, dbl-buffered)
                pl.BlockSpec((N_LAYERS, 1, d), lambda s: (0, 0, 0)),  # b (resident)
                pl.BlockSpec((d, OUT_PAD), lambda s: (0, 0)),       # head W (resident)
                pl.BlockSpec((1, OUT_PAD), lambda s: (0, 0)),       # head b (resident)
            ],
            out_specs=pl.BlockSpec((n, OUT_PAD), lambda s: (0, 0)),
            scratch_shapes=[
                pltpu.VMEM((n, d), jnp.bfloat16),   # resident activations
                pltpu.VMEM((n, n), jnp.bfloat16),   # cached A_hat = D @ A
            ],
        ),
        compiler_params=pltpu.CompilerParams(
            dimension_semantics=("arbitrary",)),    # layer axis is sequential
    )(image_features, A[0], D_normalizer[0],
      params["w_stack"], params["b_stack"], params["w_out"], params["b_out"])

    return out_pad[:, :OUT_DIM][None]               # (1, N, 2)


def init_params(key, d=D_MODEL):
    """nn.Linear weights ~ N(0, 0.01) (use_small_weights=False), biases zero.
    Weights are stored pre-transposed to (in, out); the 512x512 layers are
    stacked and cast to bf16, the final head is padded to 128 output lanes."""
    keys = jax.random.split(key, N_LAYERS + 1)
    ws = []
    for i in range(N_LAYERS):
        w = jax.random.normal(keys[i], (d, d), jnp.float32) * 0.01   # torch (out, in)
        ws.append(w.T)                                               # store (in, out)
    w_stack = jnp.stack(ws).astype(jnp.bfloat16)                     # (8, d, d)
    b_stack = jnp.zeros((N_LAYERS, 1, d), jnp.float32)

    w_final = jax.random.normal(keys[N_LAYERS], (OUT_DIM, d), jnp.float32) * 0.01
    w_out = jnp.zeros((d, OUT_PAD), jnp.float32).at[:, :OUT_DIM].set(w_final.T)
    w_out = w_out.astype(jnp.bfloat16)
    b_out = jnp.zeros((1, OUT_PAD), jnp.float32)

    return {"w_stack": w_stack, "b_stack": b_stack,
            "w_out": w_out, "b_out": b_out}


def gcn_forward_ref(params, image_features, A, D_normalizer):
    """Pure-JAX reference doing the identical bf16-input / f32-accum math."""
    a_hat = jnp.dot(D_normalizer[0], A[0],
                    preferred_element_type=jnp.float32).astype(jnp.bfloat16)
    x = image_features.astype(jnp.bfloat16)
    for l in range(N_LAYERS):
        h = jnp.dot(x, params["w_stack"][l],
                    preferred_element_type=jnp.float32) + params["b_stack"][l]
        if l < N_GCN_LAYERS:
            h = jnp.dot(a_hat, h.astype(jnp.bfloat16),
                        preferred_element_type=jnp.float32)
        x = jnp.maximum(h, 0.0).astype(jnp.bfloat16)
    o = jnp.dot(x, params["w_out"],
                preferred_element_type=jnp.float32) + params["b_out"]
    return o[:, :OUT_DIM][None]


# ---------------------------------------------------------------------------
if __name__ == "__main__":
    key = jax.random.PRNGKey(0)
    k_param, k_feat, k_adj = jax.random.split(key, 3)

    N = 8  # number of graph nodes (batch of images through the feature extractor)

    params = init_params(k_param)

    # Stand-in for resnet18(images) -> (N, 512, 1, 1) -> view(1, N, 512)
    image_features = jax.random.normal(k_feat, (N, D_MODEL), jnp.float32)

    # Deterministic symmetric adjacency with self-loops, and D_normalizer = D^-1
    raw = jax.random.uniform(k_adj, (N, N)) > 0.5
    adj = jnp.logical_or(raw, raw.T).astype(jnp.float32)
    adj = adj + jnp.eye(N, dtype=jnp.float32) * (1.0 - jnp.diag(adj))
    deg = jnp.sum(adj, axis=1)
    d_norm = jnp.diag(1.0 / deg)
    A = adj[None]                # (1, N, N)
    D_normalizer = d_norm[None]  # (1, N, N)

    # node_indices is only read (no-op) in the reference forward; x is unused.
    out = gcn_forward(params, image_features, A, D_normalizer)
    out = jax.block_until_ready(out)
    assert out.shape == (1, N, OUT_DIM)
    assert bool(jnp.all(jnp.isfinite(out)))

    ref = gcn_forward_ref(params, image_features, A, D_normalizer)
    # Normalized error budget: kernel and reference run identical bf16/f32
    # math, so any drift beyond accumulation-order noise (~1e-6 relative)
    # indicates a real bug.  Outputs are tiny (weights ~N(0,0.01)), so an
    # absolute tolerance would be vacuous — normalize by max |ref| instead.
    denom = jnp.maximum(jnp.max(jnp.abs(ref)), 1e-30)
    rel_err = float(jnp.max(jnp.abs(out - ref)) / denom)
    assert rel_err < 1e-3, f"kernel diverges from reference: rel_err={rel_err}"

    print("KERNEL_OK")
</pallas_src>

<mosaic_0001>
module attributes {stable_mosaic.version = 11 : i64} {
  func.func @fused_gcn_mlp_kernel(%arg0: i32, %arg1: memref<8x512xf32, #tpu.memory_space<vmem>>, %arg2: memref<8x8xf32, #tpu.memory_space<vmem>>, %arg3: memref<8x8xf32, #tpu.memory_space<vmem>>, %arg4: memref<4x512x512xbf16, #tpu.memory_space<vmem>>, %arg5: memref<8x1x512xf32, #tpu.memory_space<vmem>>, %arg6: memref<512x128xbf16, #tpu.memory_space<vmem>>, %arg7: memref<1x128xf32, #tpu.memory_space<vmem>>, %arg8: memref<8x128xf32, #tpu.memory_space<vmem>>, %arg9: memref<8x512xbf16, #tpu.memory_space<vmem>>, %arg10: memref<8x8xbf16, #tpu.memory_space<vmem>>) attributes {dimension_semantics = [#tpu.dimension_semantics<arbitrary>], iteration_bounds = array<i64: 2>, scalar_prefetch = 0 : i64, scratch_operands = 2 : i64, tpu.core_type = #tpu.core_type<tc>, window_params = [{pipeline_mode = #tpu.pipeline_mode<synchronous>, transform_indices = @transform_0, window_bounds = array<i64: 8, 512>}, {pipeline_mode = #tpu.pipeline_mode<synchronous>, transform_indices = @transform_1, window_bounds = array<i64: 8, 8>}, {pipeline_mode = #tpu.pipeline_mode<synchronous>, transform_indices = @transform_2, window_bounds = array<i64: 8, 8>}, {transform_indices = @transform_3, window_bounds = array<i64: 4, 512, 512>}, {pipeline_mode = #tpu.pipeline_mode<synchronous>, transform_indices = @transform_4, window_bounds = array<i64: 8, 1, 512>}, {pipeline_mode = #tpu.pipeline_mode<synchronous>, transform_indices = @transform_5, window_bounds = array<i64: 512, 128>}, {pipeline_mode = #tpu.pipeline_mode<synchronous>, transform_indices = @transform_6, window_bounds = array<i64: 1, 128>}, {pipeline_mode = #tpu.pipeline_mode<synchronous>, transform_indices = @transform_7, window_bounds = array<i64: 8, 128>}]} {
    %c0_i32 = arith.constant 0 : i32
    %0 = arith.cmpi eq, %arg0, %c0_i32 : i32
    %1 = arith.extui %0 : i1 to i32
    %c0_i32_0 = arith.constant 0 : i32
    %2 = arith.cmpi ne, %1, %c0_i32_0 : i32
    scf.if %2 {
      %c0_49 = arith.constant 0 : index
      %c0_50 = arith.constant 0 : index
      %74 = vector.load %arg3[%c0_49, %c0_50] : memref<8x8xf32, #tpu.memory_space<vmem>>, vector<8x8xf32>
      %c0_51 = arith.constant 0 : index
      %c0_52 = arith.constant 0 : index
      %75 = vector.load %arg2[%c0_51, %c0_52] : memref<8x8xf32, #tpu.memory_space<vmem>>, vector<8x8xf32>
      %cst_53 = arith.constant dense<0.000000e+00> : vector<8x8xf32>
      %76 = tpu.matmul %74, %75, %cst_53 {dimension_numbers = #tpu.dot_dimension_numbers<[1], [0], [0], [1], [0, 0, 1, 1], [], []>} : vector<8x8xf32>, vector<8x8xf32>, vector<8x8xf32> -> vector<8x8xf32>
      %77 = arith.truncf %76 : vector<8x8xf32> to vector<8x8xbf16>
      %c0_54 = arith.constant 0 : index
      %c0_55 = arith.constant 0 : index
      %78 = vector.load %arg10[%c0_54, %c0_55] : memref<8x8xbf16, #tpu.memory_space<vmem>>, vector<8x8xbf16>
      tpu.vector_store %arg10[%c0_54, %c0_55], %77 {strides = array<i32>} : memref<8x8xbf16, #tpu.memory_space<vmem>>, vector<8x8xbf16>,
      %c0_56 = arith.constant 0 : index
      %c0_57 = arith.constant 0 : index
      %79 = vector.load %arg1[%c0_56, %c0_57] : memref<8x512xf32, #tpu.memory_space<vmem>>, vector<8x512xf32>
      %80 = arith.truncf %79 : vector<8x512xf32> to vector<8x512xbf16>
      %c0_58 = arith.constant 0 : index
      %c0_59 = arith.constant 0 : index
      %81 = vector.load %arg9[%c0_58, %c0_59] : memref<8x512xbf16, #tpu.memory_space<vmem>>, vector<8x512xbf16>
      tpu.vector_store %arg9[%c0_58, %c0_59], %80 {strides = array<i32>} : memref<8x512xbf16, #tpu.memory_space<vmem>>, vector<8x512xbf16>,
    } else {
    }
    %c4_i32 = arith.constant 4 : i32
    %3 = arith.muli %arg0, %c4_i32 : i32
    %c0_i32_1 = arith.constant 0 : i32
    %4 = arith.addi %3, %c0_i32_1 : i32
    %c0 = arith.constant 0 : index
    %c0_2 = arith.constant 0 : index
    %5 = vector.load %arg9[%c0, %c0_2] : memref<8x512xbf16, #tpu.memory_space<vmem>>, vector<8x512xbf16>
    %c0_3 = arith.constant 0 : index
    %c0_4 = arith.constant 0 : index
    %c0_5 = arith.constant 0 : index
    %6 = vector.load %arg4[%c0_3, %c0_4, %c0_5] : memref<4x512x512xbf16, #tpu.memory_space<vmem>>, vector<1x512x512xbf16>
    %7 = vector.shape_cast %6 : vector<1x512x512xbf16> to vector<512x512xbf16>
    %cst = arith.constant dense<0.000000e+00> : vector<8x512xf32>
    %8 = tpu.matmul %5, %7, %cst {dimension_numbers = #tpu.dot_dimension_numbers<[1], [0], [0], [1], [0, 0, 1, 1], [], []>} : vector<8x512xbf16>, vector<512x512xbf16>, vector<8x512xf32> -> vector<8x512xf32>
    %9 = arith.index_cast %4 : i32 to index
    %c0_6 = arith.constant 0 : index
    %c0_7 = arith.constant 0 : index
    %10 = vector.load %arg5[%9, %c0_6, %c0_7] : memref<8x1x512xf32, #tpu.memory_space<vmem>>, vector<1x1x512xf32>
    %11 = vector.shape_cast %10 : vector<1x1x512xf32> to vector<1x512xf32>
    %12 = vector.broadcast %11 : vector<1x512xf32> to vector<8x512xf32>
    %13 = arith.addf %8, %12 : vector<8x512xf32>
    %c5_i32 = arith.constant 5 : i32
    %14 = arith.cmpi slt, %4, %c5_i32 : i32
    %15 = arith.extui %14 : i1 to i32
    %c0_i32_8 = arith.constant 0 : i32
    %16 = arith.cmpi ne, %15, %c0_i32_8 : i32
    scf.if %16 {
      %c0_49 = arith.constant 0 : index
      %c0_50 = arith.constant 0 : index
      %74 = vector.load %arg10[%c0_49, %c0_50] : memref<8x8xbf16, #tpu.memory_space<vmem>>, vector<8x8xbf16>
      %75 = arith.truncf %13 : vector<8x512xf32> to vector<8x512xbf16>
      %cst_51 = arith.constant dense<0.000000e+00> : vector<8x512xf32>
      %76 = tpu.matmul %74, %75, %cst_51 {dimension_numbers = #tpu.dot_dimension_numbers<[1], [0], [0], [1], [0, 0, 1, 1], [], []>} : vector<8x8xbf16>, vector<8x512xbf16>, vector<8x512xf32> -> vector<8x512xf32>
      %cst_52 = arith.constant 0.000000e+00 : f32
      %77 = vector.broadcast %cst_52 : f32 to vector<8x512xf32>
      %78 = arith.maximumf %76, %77 : vector<8x512xf32>
      %79 = arith.truncf %78 : vector<8x512xf32> to vector<8x512xbf16>
      %c0_53 = arith.constant 0 : index
      %c0_54 = arith.constant 0 : index
      %80 = vector.load %arg9[%c0_53, %c0_54] : memref<8x512xbf16, #tpu.memory_space<vmem>>, vector<8x512xbf16>
      tpu.vector_store %arg9[%c0_53, %c0_54], %79 {strides = array<i32>} : memref<8x512xbf16, #tpu.memory_space<vmem>>, vector<8x512xbf16>,
    } else {
    }
    %c5_i32_9 = arith.constant 5 : i32
    %17 = arith.cmpi sge, %4, %c5_i32_9 : i32
    %18 = arith.extui %17 : i1 to i32
    %c0_i32_10 = arith.constant 0 : i32
    %19 = arith.cmpi ne, %18, %c0_i32_10 : i32
    scf.if %19 {
      %cst_49 = arith.constant 0.000000e+00 : f32
      %74 = vector.broadcast %cst_49 : f32 to vector<8x512xf32>
      %75 = arith.maximumf %13, %74 : vector<8x512xf32>
      %76 = arith.truncf %75 : vector<8x512xf32> to vector<8x512xbf16>
      %c0_50 = arith.constant 0 : index
      %c0_51 = arith.constant 0 : index
      %77 = vector.load %arg9[%c0_50, %c0_51] : memref<8x512xbf16, #tpu.memory_space<vmem>>, vector<8x512xbf16>
      tpu.vector_store %arg9[%c0_50, %c0_51], %76 {strides = array<i32>} : memref<8x512xbf16, #tpu.memory_space<vmem>>, vector<8x512xbf16>,
    } else {
    }
    %c4_i32_11 = arith.constant 4 : i32
    %20 = arith.muli %arg0, %c4_i32_11 : i32
    %c1_i32 = arith.constant 1 : i32
    %21 = arith.addi %20, %c1_i32 : i32
    %c0_12 = arith.constant 0 : index
    %c0_13 = arith.constant 0 : index
    %22 = vector.load %arg9[%c0_12, %c0_13] : memref<8x512xbf16, #tpu.memory_space<vmem>>, vector<8x512xbf16>
    %c1 = arith.constant 1 : index
    %c0_14 = arith.constant 0 : index
    %c0_15 = arith.constant 0 : index
    %23 = vector.load %arg4[%c1, %c0_14, %c0_15] : memref<4x512x512xbf16, #tpu.memory_space<vmem>>, vector<1x512x512xbf16>
    %24 = vector.shape_cast %23 : vector<1x512x512xbf16> to vector<512x512xbf16>
    %cst_16 = arith.constant dense<0.000000e+00> : vector<8x512xf32>
    %25 = tpu.matmul %22, %24, %cst_16 {dimension_numbers = #tpu.dot_dimension_numbers<[1], [0], [0], [1], [0, 0, 1, 1], [], []>} : vector<8x512xbf16>, vector<512x512xbf16>, vector<8x512xf32> -> vector<8x512xf32>
    %26 = arith.index_cast %21 : i32 to index
    %c0_17 = arith.constant 0 : index
    %c0_18 = arith.constant 0 : index
    %27 = vector.load %arg5[%26, %c0_17, %c0_18] : memref<8x1x512xf32, #tpu.memory_space<vmem>>, vector<1x1x512xf32>
    %28 = vector.shape_cast %27 : vector<1x1x512xf32> to vector<1x512xf32>
    %29 = vector.broadcast %28 : vector<1x512xf32> to vector<8x512xf32>
    %30 = arith.addf %25, %29 : vector<8x512xf32>
    %c5_i32_19 = arith.constant 5 : i32
    %31 = arith.cmpi slt, %21, %c5_i32_19 : i32
    %32 = arith.extui %31 : i1 to i32
    %c0_i32_20 = arith.constant 0 : i32
    %33 = arith.cmpi ne, %32, %c0_i32_20 : i32
    scf.if %33 {
      %c0_49 = arith.constant 0 : index
      %c0_50 = arith.constant 0 : index
      %74 = vector.load %arg10[%c0_49, %c0_50] : memref<8x8xbf16, #tpu.memory_space<vmem>>, vector<8x8xbf16>
      %75 = arith.truncf %30 : vector<8x512xf32> to vector<8x512xbf16>
      %cst_51 = arith.constant dense<0.000000e+00> : vector<8x512xf32>
      %76 = tpu.matmul %74, %75, %cst_51 {dimension_numbers = #tpu.dot_dimension_numbers<[1], [0], [0], [1], [0, 0, 1, 1], [], []>} : vector<8x8xbf16>, vector<8x512xbf16>, vector<8x512xf32> -> vector<8x512xf32>
      %cst_52 = arith.constant 0.000000e+00 : f32
      %77 = vector.broadcast %cst_52 : f32 to vector<8x512xf32>
      %78 = arith.maximumf %76, %77 : vector<8x512xf32>
      %79 = arith.truncf %78 : vector<8x512xf32> to vector<8x512xbf16>
      %c0_53 = arith.constant 0 : index
      %c0_54 = arith.constant 0 : index
      %80 = vector.load %arg9[%c0_53, %c0_54] : memref<8x512xbf16, #tpu.memory_space<vmem>>, vector<8x512xbf16>
      tpu.vector_store %arg9[%c0_53, %c0_54], %79 {strides = array<i32>} : memref<8x512xbf16, #tpu.memory_space<vmem>>, vector<8x512xbf16>,
    } else {
    }
    %c5_i32_21 = arith.constant 5 : i32
    %34 = arith.cmpi sge, %21, %c5_i32_21 : i32
    %35 = arith.extui %34 : i1 to i32
    %c0_i32_22 = arith.constant 0 : i32
    %36 = arith.cmpi ne, %35, %c0_i32_22 : i32
    scf.if %36 {
      %cst_49 = arith.constant 0.000000e+00 : f32
      %74 = vector.broadcast %cst_49 : f32 to vector<8x512xf32>
      %75 = arith.maximumf %30, %74 : vector<8x512xf32>
      %76 = arith.truncf %75 : vector<8x512xf32> to vector<8x512xbf16>
      %c0_50 = arith.constant 0 : index
      %c0_51 = arith.constant 0 : index
      %77 = vector.load %arg9[%c0_50, %c0_51] : memref<8x512xbf16, #tpu.memory_space<vmem>>, vector<8x512xbf16>
      tpu.vector_store %arg9[%c0_50, %c0_51], %76 {strides = array<i32>} : memref<8x512xbf16, #tpu.memory_space<vmem>>, vector<8x512xbf16>,
    } else {
    }
    %c4_i32_23 = arith.constant 4 : i32
    %37 = arith.muli %arg0, %c4_i32_23 : i32
    %c2_i32 = arith.constant 2 : i32
    %38 = arith.addi %37, %c2_i32 : i32
    %c0_24 = arith.constant 0 : index
    %c0_25 = arith.constant 0 : index
    %39 = vector.load %arg9[%c0_24, %c0_25] : memref<8x512xbf16, #tpu.memory_space<vmem>>, vector<8x512xbf16>
    %c2 = arith.constant 2 : index
    %c0_26 = arith.constant 0 : index
    %c0_27 = arith.constant 0 : index
    %40 = vector.load %arg4[%c2, %c0_26, %c0_27] : memref<4x512x512xbf16, #tpu.memory_space<vmem>>, vector<1x512x512xbf16>
    %41 = vector.shape_cast %40 : vector<1x512x512xbf16> to vector<512x512xbf16>
    %cst_28 = arith.constant dense<0.000000e+00> : vector<8x512xf32>
    %42 = tpu.matmul %39, %41, %cst_28 {dimension_numbers = #tpu.dot_dimension_numbers<[1], [0], [0], [1], [0, 0, 1, 1], [], []>} : vector<8x512xbf16>, vector<512x512xbf16>, vector<8x512xf32> -> vector<8x512xf32>
    %43 = arith.index_cast %38 : i32 to index
    %c0_29 = arith.constant 0 : index
    %c0_30 = arith.constant 0 : index
    %44 = vector.load %arg5[%43, %c0_29, %c0_30] : memref<8x1x512xf32, #tpu.memory_space<vmem>>, vector<1x1x512xf32>
    %45 = vector.shape_cast %44 : vector<1x1x512xf32> to vector<1x512xf32>
    %46 = vector.broadcast %45 : vector<1x512xf32> to vector<8x512xf32>
    %47 = arith.addf %42, %46 : vector<8x512xf32>
    %c5_i32_31 = arith.constant 5 : i32
    %48 = arith.cmpi slt, %38, %c5_i32_31 : i32
    %49 = arith.extui %48 : i1 to i32
    %c0_i32_32 = arith.constant 0 : i32
    %50 = arith.cmpi ne, %49, %c0_i32_32 : i32
    scf.if %50 {
      %c0_49 = arith.constant 0 : index
      %c0_50 = arith.constant 0 : index
      %74 = vector.load %arg10[%c0_49, %c0_50] : memref<8x8xbf16, #tpu.memory_space<vmem>>, vector<8x8xbf16>
      %75 = arith.truncf %47 : vector<8x512xf32> to vector<8x512xbf16>
      %cst_51 = arith.constant dense<0.000000e+00> : vector<8x512xf32>
      %76 = tpu.matmul %74, %75, %cst_51 {dimension_numbers = #tpu.dot_dimension_numbers<[1], [0], [0], [1], [0, 0, 1, 1], [], []>} : vector<8x8xbf16>, vector<8x512xbf16>, vector<8x512xf32> -> vector<8x512xf32>
      %cst_52 = arith.constant 0.000000e+00 : f32
      %77 = vector.broadcast %cst_52 : f32 to vector<8x512xf32>
      %78 = arith.maximumf %76, %77 : vector<8x512xf32>
      %79 = arith.truncf %78 : vector<8x512xf32> to vector<8x512xbf16>
      %c0_53 = arith.constant 0 : index
      %c0_54 = arith.constant 0 : index
      %80 = vector.load %arg9[%c0_53, %c0_54] : memref<8x512xbf16, #tpu.memory_space<vmem>>, vector<8x512xbf16>
      tpu.vector_store %arg9[%c0_53, %c0_54], %79 {strides = array<i32>} : memref<8x512xbf16, #tpu.memory_space<vmem>>, vector<8x512xbf16>,
    } else {
    }
    %c5_i32_33 = arith.constant 5 : i32
    %51 = arith.cmpi sge, %38, %c5_i32_33 : i32
    %52 = arith.extui %51 : i1 to i32
    %c0_i32_34 = arith.constant 0 : i32
    %53 = arith.cmpi ne, %52, %c0_i32_34 : i32
    scf.if %53 {
      %cst_49 = arith.constant 0.000000e+00 : f32
      %74 = vector.broadcast %cst_49 : f32 to vector<8x512xf32>
      %75 = arith.maximumf %47, %74 : vector<8x512xf32>
      %76 = arith.truncf %75 : vector<8x512xf32> to vector<8x512xbf16>
      %c0_50 = arith.constant 0 : index
      %c0_51 = arith.constant 0 : index
      %77 = vector.load %arg9[%c0_50, %c0_51] : memref<8x512xbf16, #tpu.memory_space<vmem>>, vector<8x512xbf16>
      tpu.vector_store %arg9[%c0_50, %c0_51], %76 {strides = array<i32>} : memref<8x512xbf16, #tpu.memory_space<vmem>>, vector<8x512xbf16>,
    } else {
    }
    %c4_i32_35 = arith.constant 4 : i32
    %54 = arith.muli %arg0, %c4_i32_35 : i32
    %c3_i32 = arith.constant 3 : i32
    %55 = arith.addi %54, %c3_i32 : i32
    %c0_36 = arith.constant 0 : index
    %c0_37 = arith.constant 0 : index
    %56 = vector.load %arg9[%c0_36, %c0_37] : memref<8x512xbf16, #tpu.memory_space<vmem>>, vector<8x512xbf16>
    %c3 = arith.constant 3 : index
    %c0_38 = arith.constant 0 : index
    %c0_39 = arith.constant 0 : index
    %57 = vector.load %arg4[%c3, %c0_38, %c0_39] : memref<4x512x512xbf16, #tpu.memory_space<vmem>>, vector<1x512x512xbf16>
    %58 = vector.shape_cast %57 : vector<1x512x512xbf16> to vector<512x512xbf16>
    %cst_40 = arith.constant dense<0.000000e+00> : vector<8x512xf32>
    %59 = tpu.matmul %56, %58, %cst_40 {dimension_numbers = #tpu.dot_dimension_numbers<[1], [0], [0], [1], [0, 0, 1, 1], [], []>} : vector<8x512xbf16>, vector<512x512xbf16>, vector<8x512xf32> -> vector<8x512xf32>
    %60 = arith.index_cast %55 : i32 to index
    %c0_41 = arith.constant 0 : index
    %c0_42 = arith.constant 0 : index
    %61 = vector.load %arg5[%60, %c0_41, %c0_42] : memref<8x1x512xf32, #tpu.memory_space<vmem>>, vector<1x1x512xf32>
    %62 = vector.shape_cast %61 : vector<1x1x512xf32> to vector<1x512xf32>
    %63 = vector.broadcast %62 : vector<1x512xf32> to vector<8x512xf32>
    %64 = arith.addf %59, %63 : vector<8x512xf32>
    %c5_i32_43 = arith.constant 5 : i32
    %65 = arith.cmpi slt, %55, %c5_i32_43 : i32
    %66 = arith.extui %65 : i1 to i32
    %c0_i32_44 = arith.constant 0 : i32
    %67 = arith.cmpi ne, %66, %c0_i32_44 : i32
    scf.if %67 {
      %c0_49 = arith.constant 0 : index
      %c0_50 = arith.constant 0 : index
      %74 = vector.load %arg10[%c0_49, %c0_50] : memref<8x8xbf16, #tpu.memory_space<vmem>>, vector<8x8xbf16>
      %75 = arith.truncf %64 : vector<8x512xf32> to vector<8x512xbf16>
      %cst_51 = arith.constant dense<0.000000e+00> : vector<8x512xf32>
      %76 = tpu.matmul %74, %75, %cst_51 {dimension_numbers = #tpu.dot_dimension_numbers<[1], [0], [0], [1], [0, 0, 1, 1], [], []>} : vector<8x8xbf16>, vector<8x512xbf16>, vector<8x512xf32> -> vector<8x512xf32>
      %cst_52 = arith.constant 0.000000e+00 : f32
      %77 = vector.broadcast %cst_52 : f32 to vector<8x512xf32>
      %78 = arith.maximumf %76, %77 : vector<8x512xf32>
      %79 = arith.truncf %78 : vector<8x512xf32> to vector<8x512xbf16>
      %c0_53 = arith.constant 0 : index
      %c0_54 = arith.constant 0 : index
      %80 = vector.load %arg9[%c0_53, %c0_54] : memref<8x512xbf16, #tpu.memory_space<vmem>>, vector<8x512xbf16>
      tpu.vector_store %arg9[%c0_53, %c0_54], %79 {strides = array<i32>} : memref<8x512xbf16, #tpu.memory_space<vmem>>, vector<8x512xbf16>,
    } else {
    }
    %c5_i32_45 = arith.constant 5 : i32
    %68 = arith.cmpi sge, %55, %c5_i32_45 : i32
    %69 = arith.extui %68 : i1 to i32
    %c0_i32_46 = arith.constant 0 : i32
    %70 = arith.cmpi ne, %69, %c0_i32_46 : i32
    scf.if %70 {
      %cst_49 = arith.constant 0.000000e+00 : f32
      %74 = vector.broadcast %cst_49 : f32 to vector<8x512xf32>
      %75 = arith.maximumf %64, %74 : vector<8x512xf32>
      %76 = arith.truncf %75 : vector<8x512xf32> to vector<8x512xbf16>
      %c0_50 = arith.constant 0 : index
      %c0_51 = arith.constant 0 : index
      %77 = vector.load %arg9[%c0_50, %c0_51] : memref<8x512xbf16, #tpu.memory_space<vmem>>, vector<8x512xbf16>
      tpu.vector_store %arg9[%c0_50, %c0_51], %76 {strides = array<i32>} : memref<8x512xbf16, #tpu.memory_space<vmem>>, vector<8x512xbf16>,
    } else {
    }
    %c1_i32_47 = arith.constant 1 : i32
    %71 = arith.cmpi eq, %arg0, %c1_i32_47 : i32
    %72 = arith.extui %71 : i1 to i32
    %c0_i32_48 = arith.constant 0 : i32
    %73 = arith.cmpi ne, %72, %c0_i32_48 : i32
    scf.if %73 {
      %c0_49 = arith.constant 0 : index
      %c0_50 = arith.constant 0 : index
      %74 = vector.load %arg9[%c0_49, %c0_50] : memref<8x512xbf16, #tpu.memory_space<vmem>>, vector<8x512xbf16>
      %c0_51 = arith.constant 0 : index
      %c0_52 = arith.constant 0 : index
      %75 = vector.load %arg6[%c0_51, %c0_52] : memref<512x128xbf16, #tpu.memory_space<vmem>>, vector<512x128xbf16>
      %cst_53 = arith.constant dense<0.000000e+00> : vector<8x128xf32>
      %76 = tpu.matmul %74, %75, %cst_53 {dimension_numbers = #tpu.dot_dimension_numbers<[1], [0], [0], [1], [0, 0, 1, 1], [], []>} : vector<8x512xbf16>, vector<512x128xbf16>, vector<8x128xf32> -> vector<8x128xf32>
      %c0_54 = arith.constant 0 : index
      %c0_55 = arith.constant 0 : index
      %77 = vector.load %arg7[%c0_54, %c0_55] : memref<1x128xf32, #tpu.memory_space<vmem>>, vector<1x128xf32>
      %78 = vector.broadcast %77 : vector<1x128xf32> to vector<8x128xf32>
      %79 = arith.addf %76, %78 : vector<8x128xf32>
      %c0_56 = arith.constant 0 : index
      %c0_57 = arith.constant 0 : index
      %80 = vector.load %arg8[%c0_56, %c0_57] : memref<8x128xf32, #tpu.memory_space<vmem>>, vector<8x128xf32>
      tpu.vector_store %arg8[%c0_56, %c0_57], %79 {strides = array<i32>} : memref<8x128xf32, #tpu.memory_space<vmem>>, vector<8x128xf32>,
    } else {
    }
    return
  }
  func.func @transform_0(%arg0: i32) -> (i32, i32) {
    %c0_i32 = arith.constant 0 : i32
    %c0_i32_0 = arith.constant 0 : i32
    %c0_i32_1 = arith.constant 0 : i32
    return %c0_i32, %c0_i32_0 : i32, i32
  }
  func.func @transform_1(%arg0: i32) -> (i32, i32) {
    %c0_i32 = arith.constant 0 : i32
    %c0_i32_0 = arith.constant 0 : i32
    %c0_i32_1 = arith.constant 0 : i32
    return %c0_i32, %c0_i32_0 : i32, i32
  }
  func.func @transform_2(%arg0: i32) -> (i32, i32) {
    %c0_i32 = arith.constant 0 : i32
    %c0_i32_0 = arith.constant 0 : i32
    %c0_i32_1 = arith.constant 0 : i32
    return %c0_i32, %c0_i32_0 : i32, i32
  }
  func.func @transform_3(%arg0: i32) -> (i32, i32, i32) {
    %c0_i32 = arith.constant 0 : i32
    %c0_i32_0 = arith.constant 0 : i32
    %c0_i32_1 = arith.constant 0 : i32
    return %arg0, %c0_i32, %c0_i32_0 : i32, i32, i32
  }
  func.func @transform_4(%arg0: i32) -> (i32, i32, i32) {
    %c0_i32 = arith.constant 0 : i32
    %c0_i32_0 = arith.constant 0 : i32
    %c0_i32_1 = arith.constant 0 : i32
    %c0_i32_2 = arith.constant 0 : i32
    return %c0_i32, %c0_i32_0, %c0_i32_1 : i32, i32, i32
  }
  func.func @transform_5(%arg0: i32) -> (i32, i32) {
    %c0_i32 = arith.constant 0 : i32
    %c0_i32_0 = arith.constant 0 : i32
    %c0_i32_1 = arith.constant 0 : i32
    return %c0_i32, %c0_i32_0 : i32, i32
  }
  func.func @transform_6(%arg0: i32) -> (i32, i32) {
    %c0_i32 = arith.constant 0 : i32
    %c0_i32_0 = arith.constant 0 : i32
    %c0_i32_1 = arith.constant 0 : i32
    return %c0_i32, %c0_i32_0 : i32, i32
  }
  func.func @transform_7(%arg0: i32) -> (i32, i32) {
    %c0_i32 = arith.constant 0 : i32
    %c0_i32_0 = arith.constant 0 : i32
    %c0_i32_1 = arith.constant 0 : i32
    return %c0_i32, %c0_i32_0 : i32, i32
  }
}

</mosaic_0001>

<llo_original>
// kernel: gcn_forward.1
$region0: #{gcn_forward.1}
  #allocation0 [shape = 'u32[]', space=smem, size = 0x4, offset = 0x4, fixed_abs, tag = 'smem constant byte address 0x4 - core index']
  #allocation1 [shape = 'u32[144,128]{1,0:T(1,128)}', space=vmem, size = 0x12000, scoped, tag = 'internal scratch']
  #allocation2 [shape = 'bf16[8,512]{1,0:T(8,128)(2,1)}', space=vmem, size = 0x2000, scoped, tag = 'scratch operand']
  #allocation3 [shape = 'bf16[8,8]{1,0:T(8,128)(2,1)}', space=vmem, size = 0x800, scoped, tag = 'scratch operand']
  %s0 = inlined_call_operand.hbm [shape: f32[8,512], index: 0, kind: input, shape index: {}]
  %s1 = inlined_call_operand.hbm [shape: f32[8,8], index: 1, kind: input, shape index: {}]
  %s2 = inlined_call_operand.hbm [shape: f32[8,8], index: 2, kind: input, shape index: {}]
  %s3 = inlined_call_operand.hbm [shape: bf16[8,512,512], index: 3, kind: input, shape index: {}]
  %s4 = inlined_call_operand.hbm [shape: f32[8,1,512], index: 4, kind: input, shape index: {}]
  %s5 = inlined_call_operand.hbm [shape: bf16[512,128], index: 5, kind: input, shape index: {}]
  %s6 = inlined_call_operand.hbm [shape: f32[1,128], index: 6, kind: input, shape index: {}]
  %s7 = inlined_call_operand.vmem [shape: f32[8,128], index: 7, kind: output, shape index: {}]
  %s8 = sld [smem:[#allocation0]]
  $region129: #{gcn_forward.1} parent=0
    _
  %s10 = ssub.s32 1, %s8
  %s11 = scalar_select 0, %s10, %s8
  $region1: #{gcn_forward.1} parent=0
    #allocation4 [shape = 'u8[16384]{0}', space=vmem, size = 0x4000, scoped, tag = 'input window, operand 0, single buffered']
    #allocation5 [shape = 's32[2]{0}', space=sflag, size = 0x8, scoped, tag = 'scoped memory for gcn_forward.1']
    #allocation6 [shape = 'u8[4096]{0}', space=vmem, size = 0x1000, scoped, tag = 'input window, operand 1, single buffered']
    #allocation7 [shape = 's32[1]{0}', space=sflag, size = 0x4, scoped, tag = 'scoped memory for gcn_forward.1']
    #allocation8 [shape = 'u8[4096]{0}', space=vmem, size = 0x1000, scoped, tag = 'input window, operand 2, single buffered']
    #allocation9 [shape = 'u8[4194304]{0}', space=vmem, size = 0x400000, scoped, tag = 'input window, operand 3']
    #allocation10 [shape = 's32[2]{0}', space=sflag, size = 0x8, scoped, tag = 'scoped memory for gcn_forward.1']
    #allocation11 [shape = 'u8[16384]{0}', space=vmem, size = 0x4000, scoped, tag = 'input window, operand 4, single buffered']
    #allocation12 [shape = 'u8[131072]{0}', space=vmem, size = 0x20000, scoped, tag = 'input window, operand 5, single buffered']
    #allocation13 [shape = 's32[1]{0}', space=sflag, size = 0x4, scoped, tag = 'scoped memory for gcn_forward.1']
    #allocation14 [shape = 'u8[512]{0}', space=vmem, size = 0x400, scoped, tag = 'input window, operand 6, single buffered']
    %12 = vsyncpa [#allocation5], 0
    %13 = vsyncpa [#allocation7], 0
    %14 = vsyncpa [#allocation10], 0
    %s15 = scalar_lea.sflag [#allocation10], 1
    %16 = vsyncpa %s15, 0
    %17 = vsyncpa [#allocation13], 0
    loop: start=0, step=1, limit=4
    $region2: #{gcn_forward.1} parent=1 // loop_pre_header
      _
    $region3: #{gcn_forward.1} parent=1 // loop_header
      %s19 = sphi 0, %s23
      %p20 = scmp.ge.s32.totalorder %s19, 4
      %s27 = sphi 0, %s27
      %s29 = sphi 0, %s27
      %s30 = sphi 0, %s29
      %s44 = sphi 0, %s30
      %s48 = sphi 0, %s48
      %s50 = sphi 0, %s48
      %s51 = sphi 0, %s50
      %s65 = sphi 0, %s51
      %s69 = sphi 0, %s69
      %s71 = sphi 0, %s69
      %s72 = sphi 0, %s71
      %s86 = sphi 0, %s72
      %s92 = sphi 0, %s94
      %s95 = sphi 0, %s92
      %s96 = sphi 0, %s95
      %s112 = sphi 0, %s96
      %s116 = sphi 0, %s116
      %s118 = sphi 0, %s116
      %s119 = sphi 0, %s118
      %s133 = sphi 0, %s119
      %s137 = sphi 0, %s137
      %s139 = sphi 0, %s137
      %s140 = sphi 0, %s139
      %s154 = sphi 0, %s140
      %s158 = sphi 0, %s158
      %s160 = sphi 0, %s158
      %s161 = sphi 0, %s160
      %s175 = sphi 0, %s161
      %s179 = sphi 0, %s179
      %s181 = sphi 0, %s179
      %s182 = sphi 0, %s181
      %s196 = sphi 0, %s182
    $region4: #{gcn_forward.1} parent=1 // loop_header_branch
      %22 = sbr.rel (%p20) target = $region8
    $region5: #{gcn_forward.1} parent=1 // loop_body
      %s24 = ssub.s32 %s19, 1
      %s25 = ssub.s32 %s19, 2
      %s26 = sadd.s32 %s19, 1
      %s28 = sadd.s32 %s27, 1
      %p31 = scmp.eq.s32.totalorder %s19, 1
      %p32 = scmp.ne.s32.totalorder %s27, %s29
      %p33 = scmp.eq.s32.totalorder %s19, 0
      %p34 = por %p32, %p33
      %p35 = scmp.ne.s32.totalorder %s27, %s29
      %p36 = scmp.eq.s32.totalorder %s24, 1
      %p37 = por %p35, %p36
      %p38 = scmp.ne.s32.totalorder %s29, %s30
      %p39 = scmp.eq.s32.totalorder %s24, 0
      %p40 = por %p38, %p39
      %p41 = scmp.ne.s32.totalorder %s29, %s30
      %p42 = scmp.eq.s32.totalorder %s25, 1
      %p43 = por %p41, %p42
      %p45 = scmp.ne.s32.totalorder %s30, %s44
      %p46 = scmp.eq.s32.totalorder %s25, 0
      %p47 = por %p45, %p46
      %s49 = sadd.s32 %s48, 1
      %p52 = scmp.eq.s32.totalorder %s19, 1
      %p53 = scmp.ne.s32.totalorder %s48, %s50
      %p54 = scmp.eq.s32.totalorder %s19, 0
      %p55 = por %p53, %p54
      %p56 = scmp.ne.s32.totalorder %s48, %s50
      %p57 = scmp.eq.s32.totalorder %s24, 1
      %p58 = por %p56, %p57
      %p59 = scmp.ne.s32.totalorder %s50, %s51
      %p60 = scmp.eq.s32.totalorder %s24, 0
      %p61 = por %p59, %p60
      %p62 = scmp.ne.s32.totalorder %s50, %s51
      %p63 = scmp.eq.s32.totalorder %s25, 1
      %p64 = por %p62, %p63
      %p66 = scmp.ne.s32.totalorder %s51, %s65
      %p67 = scmp.eq.s32.totalorder %s25, 0
      %p68 = por %p66, %p67
      %s70 = sadd.s32 %s69, 1
      %p73 = scmp.eq.s32.totalorder %s19, 1
      %p74 = scmp.ne.s32.totalorder %s69, %s71
      %p75 = scmp.eq.s32.totalorder %s19, 0
      %p76 = por %p74, %p75
      %p77 = scmp.ne.s32.totalorder %s69, %s71
      %p78 = scmp.eq.s32.totalorder %s24, 1
      %p79 = por %p77, %p78
      %p80 = scmp.ne.s32.totalorder %s71, %s72
      %p81 = scmp.eq.s32.totalorder %s24, 0
      %p82 = por %p80, %p81
      %p83 = scmp.ne.s32.totalorder %s71, %s72
      %p84 = scmp.eq.s32.totalorder %s25, 1
      %p85 = por %p83, %p84
      %p87 = scmp.ne.s32.totalorder %s72, %s86
      %p88 = scmp.eq.s32.totalorder %s25, 0
      %p89 = por %p87, %p88
      %s90 = ssub.s32 %s19, %s26
      %p91 = scmp.eq.s32.totalorder %s90, 0
      %s93 = sadd.s32 %s92, 1
      %s94 = scalar_select %p91, %s92, %s93
      %p97 = pneg %p91
      %p98 = scmp.eq.s32.totalorder %s19, 1
      %p99 = por %p97, %p98
      %p100 = scmp.ne.s32.totalorder %s92, %s95
      %p101 = scmp.eq.s32.totalorder %s19, 0
      %p102 = por %p100, %p101
      %p103 = scmp.ne.s32.totalorder %s92, %s95
      %p104 = scmp.eq.s32.totalorder %s24, 1
      %p105 = por %p103, %p104
      %p106 = scmp.ne.s32.totalorder %s95, %s96
      %p107 = scmp.eq.s32.totalorder %s24, 0
      %p108 = por %p106, %p107
      %p109 = scmp.ne.s32.totalorder %s95, %s96
      %p110 = scmp.eq.s32.totalorder %s25, 1
      %p111 = por %p109, %p110
      %p113 = scmp.ne.s32.totalorder %s96, %s112
      %p114 = scmp.eq.s32.totalorder %s25, 0
      %p115 = por %p113, %p114
      %s117 = sadd.s32 %s116, 1
      %p120 = scmp.eq.s32.totalorder %s19, 1
      %p121 = scmp.ne.s32.totalorder %s116, %s118
      %p122 = scmp.eq.s32.totalorder %s19, 0
      %p123 = por %p121, %p122
      %p124 = scmp.ne.s32.totalorder %s116, %s118
      %p125 = scmp.eq.s32.totalorder %s24, 1
      %p126 = por %p124, %p125
      %p127 = scmp.ne.s32.totalorder %s118, %s119
      %p128 = scmp.eq.s32.totalorder %s24, 0
      %p129 = por %p127, %p128
      %p130 = scmp.ne.s32.totalorder %s118, %s119
      %p131 = scmp.eq.s32.totalorder %s25, 1
      %p132 = por %p130, %p131
      %p134 = scmp.ne.s32.totalorder %s119, %s133
      %p135 = scmp.eq.s32.totalorder %s25, 0
      %p136 = por %p134, %p135
      %s138 = sadd.s32 %s137, 1
      %p141 = scmp.eq.s32.totalorder %s19, 1
      %p142 = scmp.ne.s32.totalorder %s137, %s139
      %p143 = scmp.eq.s32.totalorder %s19, 0
      %p144 = por %p142, %p143
      %p145 = scmp.ne.s32.totalorder %s137, %s139
      %p146 = scmp.eq.s32.totalorder %s24, 1
      %p147 = por %p145, %p146
      %p148 = scmp.ne.s32.totalorder %s139, %s140
      %p149 = scmp.eq.s32.totalorder %s24, 0
      %p150 = por %p148, %p149
      %p151 = scmp.ne.s32.totalorder %s139, %s140
      %p152 = scmp.eq.s32.totalorder %s25, 1
      %p153 = por %p151, %p152
      %p155 = scmp.ne.s32.totalorder %s140, %s154
      %p156 = scmp.eq.s32.totalorder %s25, 0
      %p157 = por %p155, %p156
      %s159 = sadd.s32 %s158, 1
      %p162 = scmp.eq.s32.totalorder %s19, 1
      %p163 = scmp.ne.s32.totalorder %s158, %s160
      %p164 = scmp.eq.s32.totalorder %s19, 0
      %p165 = por %p163, %p164
      %p166 = scmp.ne.s32.totalorder %s158, %s160
      %p167 = scmp.eq.s32.totalorder %s24, 1
      %p168 = por %p166, %p167
      %p169 = scmp.ne.s32.totalorder %s160, %s161
      %p170 = scmp.eq.s32.totalorder %s24, 0
      %p171 = por %p169, %p170
      %p172 = scmp.ne.s32.totalorder %s160, %s161
      %p173 = scmp.eq.s32.totalorder %s25, 1
      %p174 = por %p172, %p173
      %p176 = scmp.ne.s32.totalorder %s161, %s175
      %p177 = scmp.eq.s32.totalorder %s25, 0
      %p178 = por %p176, %p177
      %s180 = sadd.s32 %s179, 1
      %p183 = scmp.eq.s32.totalorder %s19, 1
      %p184 = scmp.ne.s32.totalorder %s179, %s181
      %p185 = scmp.eq.s32.totalorder %s19, 0
      %p186 = por %p184, %p185
      %p187 = scmp.ne.s32.totalorder %s179, %s181
      %p188 = scmp.eq.s32.totalorder %s24, 1
      %p189 = por %p187, %p188
      %p190 = scmp.ne.s32.totalorder %s181, %s182
      %p191 = scmp.eq.s32.totalorder %s24, 0
      %p192 = por %p190, %p191
      %p193 = scmp.ne.s32.totalorder %s181, %s182
      %p194 = scmp.eq.s32.totalorder %s25, 1
      %p195 = por %p193, %p194
      %p197 = scmp.ne.s32.totalorder %s182, %s196
      %p198 = scmp.eq.s32.totalorder %s25, 0
      %p199 = por %p197, %p198
      %p200 = scmp.le.s32.totalorder 1, %s19
      %p201 = scmp.lt.s32.totalorder %s19, 3
      %p202 = pnand %p200, %p201
      %p203 = pneg %p202
      // Predicated region
      $region9: #{gcn_forward.1} parent=5 // pred_check
        _
      $region10: #{gcn_forward.1} parent=5 // pred_check_branch
        %205 = sbr.rel (%p202) target = $region12
      $region11: #{gcn_forward.1} parent=5 // pred_region
        %s206 = ssub.s32 %s19, 1
        // Predicated region
        $region13: #{gcn_forward.1} parent=11 // pred_check
          %p207 = pneg %p40
        $region14: #{gcn_forward.1} parent=11 // pred_check_branch
          %209 = sbr.rel (%p207) target = $region16
        $region15: #{gcn_forward.1} parent=11 // pred_region
          %s211 = ssub.s32 512, 512
          %212 = vsyncadd [#allocation5], %s211
          %s214 = sshll.u32 [#allocation4], 4
          %s215 = int_to_ptr.vmem [resolvable:$true] %s214
          %217 = dma.hbm_to_vmem [thread:$0]  %s0, 512, %s215, [#allocation5]
        $region16: #{gcn_forward.1} parent=11 // pred_fallthru
          _
        // Predicated region
        $region17: #{gcn_forward.1} parent=11 // pred_check
          %p218 = pneg %p61
        $region18: #{gcn_forward.1} parent=11 // pred_check_branch
          %220 = sbr.rel (%p218) target = $region20
        $region19: #{gcn_forward.1} parent=11 // pred_region
          %s222 = ssub.s32 128, 128
          %223 = vsyncadd [#allocation7], %s222
          %s225 = sshll.u32 [#allocation6], 4
          %s226 = int_to_ptr.vmem [resolvable:$true] %s225
          %228 = dma.hbm_to_vmem [thread:$0]  %s1, 128, %s226, [#allocation7]
        $region20: #{gcn_forward.1} parent=11 // pred_fallthru
          _
        // Predicated region
        $region21: #{gcn_forward.1} parent=11 // pred_check
          %p229 = pneg %p82
        $region22: #{gcn_forward.1} parent=11 // pred_check_branch
          %231 = sbr.rel (%p229) target = $region24
        $region23: #{gcn_forward.1} parent=11 // pred_region
          %s233 = ssub.s32 128, 128
          %234 = vsyncadd [#allocation7], %s233
          %s236 = sshll.u32 [#allocation8], 4
          %s237 = int_to_ptr.vmem [resolvable:$true] %s236
          %239 = dma.hbm_to_vmem [thread:$0]  %s2, 128, %s237, [#allocation7]
        $region24: #{gcn_forward.1} parent=11 // pred_fallthru
          _
        // Predicated region
        $region25: #{gcn_forward.1} parent=11 // pred_check
          %p240 = pneg %p129
        $region26: #{gcn_forward.1} parent=11 // pred_check_branch
          %242 = sbr.rel (%p240) target = $region28
        $region27: #{gcn_forward.1} parent=11 // pred_region
          %s244 = ssub.s32 512, 512
          %245 = vsyncadd [#allocation10], %s244
          %s246 = sshll.u32 [#allocation11], 4
          %s247 = int_to_ptr.vmem [resolvable:$true] %s246
          %252 = dma.hbm_to_vmem [thread:$0]  %s4, 512, %s247, [#allocation10], 64, 64, 4
        $region28: #{gcn_forward.1} parent=11 // pred_fallthru
          _
        // Predicated region
        $region29: #{gcn_forward.1} parent=11 // pred_check
          %p253 = pneg %p150
        $region30: #{gcn_forward.1} parent=11 // pred_check_branch
          %255 = sbr.rel (%p253) target = $region32
        $region31: #{gcn_forward.1} parent=11 // pred_region
          %s257 = ssub.s32 4096, 4096
          %258 = vsyncadd [#allocation13], %s257
          %s259 = sshll.u32 [#allocation12], 4
          %s260 = int_to_ptr.vmem [resolvable:$true] %s259
          %265 = dma.hbm_to_vmem [thread:$0]  %s5, 4096, %s260, [#allocation13], 64, 64, 4
        $region32: #{gcn_forward.1} parent=11 // pred_fallthru
          _
        // Predicated region
        $region33: #{gcn_forward.1} parent=11 // pred_check
          %p266 = pneg %p171
        $region34: #{gcn_forward.1} parent=11 // pred_check_branch
          %268 = sbr.rel (%p266) target = $region36
        $region35: #{gcn_forward.1} parent=11 // pred_region
          %s270 = ssub.s32 16, 16
          %271 = vsyncadd [#allocation13], %s270
          %s273 = sshll.u32 [#allocation14], 4
          %s274 = int_to_ptr.vmem [resolvable:$true] %s273
          %276 = dma.hbm_to_vmem [thread:$0]  %s6, 16, %s274, [#allocation13]
        $region36: #{gcn_forward.1} parent=11 // pred_fallthru
          _
      $region12: #{gcn_forward.1} parent=5 // pred_fallthru
        _
      %p277 = scmp.lt.s32.totalorder %s19, 2
      // Predicated region
      $region37: #{gcn_forward.1} parent=5 // pred_check
        %p278 = pneg %p277
      $region38: #{gcn_forward.1} parent=5 // pred_check_branch
        %280 = sbr.rel (%p278) target = $region40
      $region39: #{gcn_forward.1} parent=5 // pred_region
        // Predicated region
        $region41: #{gcn_forward.1} parent=39 // pred_check
          %p281 = pneg %p102
        $region42: #{gcn_forward.1} parent=39 // pred_check_branch
          %283 = sbr.rel (%p281) target = $region44
        $region43: #{gcn_forward.1} parent=39 // pred_region
          %s284 = sand.u32 %s19, 1
          %s285 = scalar_lea.sflag [#allocation10], %s284
          %s286 = sand.u32 %s92, 1
          %s287 = smul.addr %s286, 4096
          %s288 = scalar_lea.vmem [#allocation9], %s287
          %s289 = smul.u32 4, %s19
          %s291 = ssub.s32 65536, 65536
          %292 = vsyncadd %s285, %s291
          %s293 = smul.addr %s289, 256
          %s294 = smul.addr %s293, 64
          %s295 = scalar_lea.hbm %s3, %s294
          %s296 = sshll.u32 %s288, 4
          %s297 = int_to_ptr.vmem [resolvable:$true] %s296
          %302 = dma.hbm_to_vmem [thread:$0]  %s295, 65536, %s297, %s285, 256, 256, 16
        $region44: #{gcn_forward.1} parent=39 // pred_fallthru
          _
      $region40: #{gcn_forward.1} parent=5 // pred_fallthru
        _
      %p303 = scmp.le.s32.totalorder 1, %s19
      %p304 = scmp.lt.s32.totalorder %s19, 3
      %p305 = pnand %p303, %p304
      %p306 = pneg %p305
      // Predicated region
      $region45: #{gcn_forward.1} parent=5 // pred_check
        _
      $region46: #{gcn_forward.1} parent=5 // pred_check_branch
        %308 = sbr.rel (%p305) target = $region48
      $region47: #{gcn_forward.1} parent=5 // pred_region
        %s309 = ssub.s32 %s19, 1
        // Predicated region
        $region49: #{gcn_forward.1} parent=47 // pred_check
          %p310 = pneg %p40
        $region50: #{gcn_forward.1} parent=47 // pred_check_branch
          %312 = sbr.rel (%p310) target = $region52
        $region51: #{gcn_forward.1} parent=47 // pred_region
          %313 = dma.done [#allocation5], 512
        $region52: #{gcn_forward.1} parent=47 // pred_fallthru
          _
        // Predicated region
        $region53: #{gcn_forward.1} parent=47 // pred_check
          %p314 = pneg %p61
        $region54: #{gcn_forward.1} parent=47 // pred_check_branch
          %316 = sbr.rel (%p314) target = $region56
        $region55: #{gcn_forward.1} parent=47 // pred_region
          %317 = dma.done [#allocation7], 128
        $region56: #{gcn_forward.1} parent=47 // pred_fallthru
          _
        // Predicated region
        $region57: #{gcn_forward.1} parent=47 // pred_check
          %p318 = pneg %p82
        $region58: #{gcn_forward.1} parent=47 // pred_check_branch
          %320 = sbr.rel (%p318) target = $region60
        $region59: #{gcn_forward.1} parent=47 // pred_region
          %321 = dma.done [#allocation7], 128
        $region60: #{gcn_forward.1} parent=47 // pred_fallthru
          _
        %s322 = sand.u32 %s24, 1
        %s323 = scalar_lea.sflag [#allocation10], %s322
        %s324 = sand.u32 %s95, 1
        %s325 = smul.addr %s324, 4096
        %s326 = scalar_lea.vmem [#allocation9], %s325
        // Predicated region
        $region61: #{gcn_forward.1} parent=47 // pred_check
          %p327 = pneg %p108
        $region62: #{gcn_forward.1} parent=47 // pred_check_branch
          %329 = sbr.rel (%p327) target = $region64
        $region63: #{gcn_forward.1} parent=47 // pred_region
          %330 = dma.done %s323, 65536
        $region64: #{gcn_forward.1} parent=47 // pred_fallthru
          _
        // Predicated region
        $region65: #{gcn_forward.1} parent=47 // pred_check
          %p331 = pneg %p129
        $region66: #{gcn_forward.1} parent=47 // pred_check_branch
          %333 = sbr.rel (%p331) target = $region68
        $region67: #{gcn_forward.1} parent=47 // pred_region
          %334 = dma.done [#allocation10], 512
        $region68: #{gcn_forward.1} parent=47 // pred_fallthru
          _
        // Predicated region
        $region69: #{gcn_forward.1} parent=47 // pred_check
          %p335 = pneg %p150
        $region70: #{gcn_forward.1} parent=47 // pred_check_branch
          %337 = sbr.rel (%p335) target = $region72
        $region71: #{gcn_forward.1} parent=47 // pred_region
          %338 = dma.done [#allocation13], 4096
        $region72: #{gcn_forward.1} parent=47 // pred_fallthru
          _
        // Predicated region
        $region73: #{gcn_forward.1} parent=47 // pred_check
          %p339 = pneg %p171
        $region74: #{gcn_forward.1} parent=47 // pred_check_branch
          %341 = sbr.rel (%p339) target = $region76
        $region75: #{gcn_forward.1} parent=47 // pred_region
          %342 = dma.done [#allocation13], 16
        $region76: #{gcn_forward.1} parent=47 // pred_fallthru
          _
        %p343 = pneg %p40
        %p344 = pneg %p37
        %p345 = pneg %p61
        %p346 = pneg %p58
        %p347 = pneg %p82
        %p348 = pneg %p79
        %s349 = sand.u32 %s24, 1
        %s350 = scalar_lea.sflag [#allocation10], %s349
        %s351 = sand.u32 %s95, 1
        %s352 = smul.addr %s351, 4096
        %s353 = scalar_lea.vmem [#allocation9], %s352
        %p354 = pneg %p108
        %p355 = pneg %p105
        %p356 = pneg %p129
        %p357 = pneg %p126
        %p358 = pneg %p150
        %p359 = pneg %p147
        %p360 = pneg %p171
        %p361 = pneg %p168
        %p362 = pneg %p192
        %p363 = pneg %p189
        %s364 = smul.u32 4, %s24
        %p366 = scmp.eq.s32.totalorder %s24, 0
        // Predicated region
        $region77: #{gcn_forward.1} parent=47 // pred_check
          %p367 = pneg %p366
        $region78: #{gcn_forward.1} parent=47 // pred_check_branch
          %369 = sbr.rel (%p367) target = $region80
        $region79: #{gcn_forward.1} parent=47 // pred_region
          %v370 = vld [vmem:[#allocation8] sm:$0xff]
          %v371 = vld [vmem:[#allocation6] sm:$0xff]
          %vm372 = vcmask 64512
          %v374 = vsel %vm372, %v370, 0
          %376 = vmatprep.subr.mxu0 0.0
          %377 = vmatpush1.msra.mxu0 %v371
          %378 = vmatprep.subr.mxu0 0.0
          %379 = vmatpush1.msra.mxu0 0.0
          %380 = vmatprep.subr.mxu0 0.0
          %381 = vmatpush1.msra.mxu0 0.0
          %382 = vmatprep.subr.mxu0 0.0
          %383 = vmatpush1.msra.mxu0 0.0
          %384 = vmatprep.subr.mxu0 0.0
          %385 = vmatpush1.msra.mxu0 0.0
          %386 = vmatprep.subr.mxu0 0.0
          %387 = vmatpush1.msra.mxu0 0.0
          %388 = vmatprep.subr.mxu0 0.0
          %389 = vmatpush1.msra.mxu0 0.0
          %390 = vmatprep.subr.mxu0 0.0
          %391 = vmatpush1.msra.mxu0 0.0
          %392 = vmatprep.subr.mxu0 0.0
          %393 = vmatpush1.msra.mxu0 0.0
          %394 = vmatprep.subr.mxu0 0.0
          %395 = vmatpush1.msra.mxu0 0.0
          %396 = vmatprep.subr.mxu0 0.0
          %397 = vmatpush1.msra.mxu0 0.0
          %398 = vmatprep.subr.mxu0 0.0
          %399 = vmatpush1.msra.mxu0 0.0
          %400 = vmatprep.subr.mxu0 0.0
          %401 = vmatpush1.msra.mxu0 0.0
          %402 = vmatprep.subr.mxu0 0.0
          %403 = vmatpush1.msra.mxu0 0.0
          %404 = vmatprep.subr.mxu0 0.0
          %405 = vmatpush1.msra.mxu0 0.0
          %406 = vmatprep.subr.mxu0 0.0
          %407 = vmatpush1.msra.mxu0 0.0
          %408 = vmatprep.subr.mxu0 0.0
          %409 = vmatpush1.msra.mxu0 0.0
          %410 = vmatprep.subr.mxu0 0.0
          %411 = vmatpush1.msra.mxu0 0.0
          %412 = vmatprep.subr.mxu0 0.0
          %413 = vmatpush1.msra.mxu0 0.0
          %414 = vmatprep.subr.mxu0 0.0
          %415 = vmatpush1.msra.mxu0 0.0
          %416 = vmatprep.subr.mxu0 0.0
          %417 = vmatpush1.msra.mxu0 0.0
          %418 = vmatprep.subr.mxu0 0.0
          %419 = vmatpush1.msra.mxu0 0.0
          %420 = vmatprep.subr.mxu0 0.0
          %421 = vmatpush1.msra.mxu0 0.0
          %422 = vmatprep.subr.mxu0 0.0
          %423 = vmatpush1.msra.mxu0 0.0
          %424 = vmatprep.subr.mxu0 0.0
          %425 = vmatpush1.msra.mxu0 0.0
          %426 = vmatprep.subr.mxu0 0.0
          %427 = vmatpush1.msra.mxu0 0.0
          %428 = vmatprep.subr.mxu0 0.0
          %429 = vmatpush1.msra.mxu0 0.0
          %430 = vmatprep.subr.mxu0 0.0
          %431 = vmatpush1.msra.mxu0 0.0
          %432 = vmatprep.subr.mxu0 0.0
          %433 = vmatpush1.msra.mxu0 0.0
          %434 = vmatprep.subr.mxu0 0.0
          %435 = vmatpush1.msra.mxu0 0.0
          %436 = vmatprep.subr.mxu0 0.0
          %437 = vmatpush1.msra.mxu0 0.0
          %438 = vmatprep.subr.mxu0 0.0
          %439 = vmatpush1.msra.mxu0 0.0
          %440 = vmatprep.mubr.f32.mxu0 0.0
          %441 = vmatmul.mubr.f32.gmra.mrb[0].mxu0 %v374
          %v442 = vpop.f32.mrb[0].mxu0
          %v443 = vadd.f32 0.0, %v442
          %v444 = vpop.f32.mrb[0].mxu0
          %445 = vdwg.mxu0
          %v446 = vpack.c.bf16 %v443, %v443
          %vm447 = vcmask 60416
          %448 = vst.msk [vmem:[#allocation3] sm:$0xf] %vm447, %v446
          %v449 = vld [vmem:[#allocation4] sm:$0xff]
          %v450 = vld [vmem:[#allocation4 + $0x8] sm:$0xff]
          %v451 = vld [vmem:[#allocation4 + $0x10] sm:$0xff]
          %v452 = vld [vmem:[#allocation4 + $0x18] sm:$0xff]
          %v453 = vpack.c.bf16 %v449, %v449
          %v454 = vpack.c.bf16 %v450, %v450
          %v455 = vpack.c.bf16 %v451, %v451
          %v456 = vpack.c.bf16 %v452, %v452
          %v461 = vunpack.c.l.b16 %v453
          %v462 = vunpack.c.l.b16 %v454
          %v463 = vunpack.c.l.b16 %v455
          %v464 = vunpack.c.l.b16 %v456
          %v465 = vpack.c.b16 %v462, %v461
          %v466 = vpack.c.b16 %v464, %v463
          %469 = vst [vmem:[#allocation2] sm:$0xff] %v465
          %470 = vst [vmem:[#allocation2 + $0x8] sm:$0xff] %v466
        $region80: #{gcn_forward.1} parent=47 // pred_fallthru
          _
        %s471 = smul.u32 %s24, 4
        %v472 = vld [vmem:[#allocation2] sm:$0xff]
        %v473 = vld [vmem:[#allocation2 + $0x8] sm:$0xff]
        %v474 = vld [vmem:[%s326] sm:$0xff]
        %v475 = vld [vmem:[%s326 + $0x8] sm:$0xff]
        %v476 = vld [vmem:[%s326 + $0x10] sm:$0xff]
        %v477 = vld [vmem:[%s326 + $0x18] sm:$0xff]
        %v478 = vld [vmem:[%s326 + $0x20] sm:$0xff]
        %v479 = vld [vmem:[%s326 + $0x28] sm:$0xff]
        %v480 = vld [vmem:[%s326 + $0x30] sm:$0xff]
        %v481 = vld [vmem:[%s326 + $0x38] sm:$0xff]
        %v482 = vld [vmem:[%s326 + $0x40] sm:$0xff]
        %v483 = vld [vmem:[%s326 + $0x48] sm:$0xff]
        %v484 = vld [vmem:[%s326 + $0x50] sm:$0xff]
        %v485 = vld [vmem:[%s326 + $0x58] sm:$0xff]
        %v486 = vld [vmem:[%s326 + $0x60] sm:$0xff]
        %v487 = vld [vmem:[%s326 + $0x68] sm:$0xff]
        %v488 = vld [vmem:[%s326 + $0x70] sm:$0xff]
        %v489 = vld [vmem:[%s326 + $0x78] sm:$0xff]
        %v490 = vld [vmem:[%s326 + $0x80] sm:$0xff]
        %v491 = vld [vmem:[%s326 + $0x88] sm:$0xff]
        %v492 = vld [vmem:[%s326 + $0x90] sm:$0xff]
        %v493 = vld [vmem:[%s326 + $0x98] sm:$0xff]
        %v494 = vld [vmem:[%s326 + $0xa0] sm:$0xff]
        %v495 = vld [vmem:[%s326 + $0xa8] sm:$0xff]
        %v496 = vld [vmem:[%s326 + $0xb0] sm:$0xff]
        %v497 = vld [vmem:[%s326 + $0xb8] sm:$0xff]
        %v498 = vld [vmem:[%s326 + $0xc0] sm:$0xff]
        %v499 = vld [vmem:[%s326 + $0xc8] sm:$0xff]
        %v500 = vld [vmem:[%s326 + $0xd0] sm:$0xff]
        %v501 = vld [vmem:[%s326 + $0xd8] sm:$0xff]
        %v502 = vld [vmem:[%s326 + $0xe0] sm:$0xff]
        %v503 = vld [vmem:[%s326 + $0xe8] sm:$0xff]
        %v504 = vld [vmem:[%s326 + $0xf0] sm:$0xff]
        %v505 = vld [vmem:[%s326 + $0xf8] sm:$0xff]
        %v506 = vld [vmem:[%s326 + $0x100] sm:$0xff]
        %v507 = vld [vmem:[%s326 + $0x108] sm:$0xff]
        %v508 = vld [vmem:[%s326 + $0x110] sm:$0xff]
        %v509 = vld [vmem:[%s326 + $0x118] sm:$0xff]
        %v510 = vld [vmem:[%s326 + $0x120] sm:$0xff]
        %v511 = vld [vmem:[%s326 + $0x128] sm:$0xff]
        %v512 = vld [vmem:[%s326 + $0x130] sm:$0xff]
        %v513 = vld [vmem:[%s326 + $0x138] sm:$0xff]
        %v514 = vld [vmem:[%s326 + $0x140] sm:$0xff]
        %v515 = vld [vmem:[%s326 + $0x148] sm:$0xff]
        %v516 = vld [vmem:[%s326 + $0x150] sm:$0xff]
        %v517 = vld [vmem:[%s326 + $0x158] sm:$0xff]
        %v518 = vld [vmem:[%s326 + $0x160] sm:$0xff]
        %v519 = vld [vmem:[%s326 + $0x168] sm:$0xff]
        %v520 = vld [vmem:[%s326 + $0x170] sm:$0xff]
        %v521 = vld [vmem:[%s326 + $0x178] sm:$0xff]
        %v522 = vld [vmem:[%s326 + $0x180] sm:$0xff]
        %v523 = vld [vmem:[%s326 + $0x188] sm:$0xff]
        %v524 = vld [vmem:[%s326 + $0x190] sm:$0xff]
        %v525 = vld [vmem:[%s326 + $0x198] sm:$0xff]
        %v526 = vld [vmem:[%s326 + $0x1a0] sm:$0xff]
        %v527 = vld [vmem:[%s326 + $0x1a8] sm:$0xff]
        %v528 = vld [vmem:[%s326 + $0x1b0] sm:$0xff]
        %v529 = vld [vmem:[%s326 + $0x1b8] sm:$0xff]
        %v530 = vld [vmem:[%s326 + $0x1c0] sm:$0xff]
        %v531 = vld [vmem:[%s326 + $0x1c8] sm:$0xff]
        %v532 = vld [vmem:[%s326 + $0x1d0] sm:$0xff]
        %v533 = vld [vmem:[%s326 + $0x1d8] sm:$0xff]
        %v534 = vld [vmem:[%s326 + $0x1e0] sm:$0xff]
        %v535 = vld [vmem:[%s326 + $0x1e8] sm:$0xff]
        %v536 = vld [vmem:[%s326 + $0x1f0] sm:$0xff]
        %v537 = vld [vmem:[%s326 + $0x1f8] sm:$0xff]
        %v538 = vld [vmem:[%s326 + $0x200] sm:$0xff]
        %v539 = vld [vmem:[%s326 + $0x208] sm:$0xff]
        %v540 = vld [vmem:[%s326 + $0x210] sm:$0xff]
        %v541 = vld [vmem:[%s326 + $0x218] sm:$0xff]
        %v542 = vld [vmem:[%s326 + $0x220] sm:$0xff]
        %v543 = vld [vmem:[%s326 + $0x228] sm:$0xff]
        %v544 = vld [vmem:[%s326 + $0x230] sm:$0xff]
        %v545 = vld [vmem:[%s326 + $0x238] sm:$0xff]
        %v546 = vld [vmem:[%s326 + $0x240] sm:$0xff]
        %v547 = vld [vmem:[%s326 + $0x248] sm:$0xff]
        %v548 = vld [vmem:[%s326 + $0x250] sm:$0xff]
        %v549 = vld [vmem:[%s326 + $0x258] sm:$0xff]
        %v550 = vld [vmem:[%s326 + $0x260] sm:$0xff]
        %v551 = vld [vmem:[%s326 + $0x268] sm:$0xff]
        %v552 = vld [vmem:[%s326 + $0x270] sm:$0xff]
        %v553 = vld [vmem:[%s326 + $0x278] sm:$0xff]
        %v554 = vld [vmem:[%s326 + $0x280] sm:$0xff]
        %v555 = vld [vmem:[%s326 + $0x288] sm:$0xff]
        %v556 = vld [vmem:[%s326 + $0x290] sm:$0xff]
        %v557 = vld [vmem:[%s326 + $0x298] sm:$0xff]
        %v558 = vld [vmem:[%s326 + $0x2a0] sm:$0xff]
        %v559 = vld [vmem:[%s326 + $0x2a8] sm:$0xff]
        %v560 = vld [vmem:[%s326 + $0x2b0] sm:$0xff]
        %v561 = vld [vmem:[%s326 + $0x2b8] sm:$0xff]
        %v562 = vld [vmem:[%s326 + $0x2c0] sm:$0xff]
        %v563 = vld [vmem:[%s326 + $0x2c8] sm:$0xff]
        %v564 = vld [vmem:[%s326 + $0x2d0] sm:$0xff]
        %v565 = vld [vmem:[%s326 + $0x2d8] sm:$0xff]
        %v566 = vld [vmem:[%s326 + $0x2e0] sm:$0xff]
        %v567 = vld [vmem:[%s326 + $0x2e8] sm:$0xff]
        %v568 = vld [vmem:[%s326 + $0x2f0] sm:$0xff]
        %v569 = vld [vmem:[%s326 + $0x2f8] sm:$0xff]
        %v570 = vld [vmem:[%s326 + $0x300] sm:$0xff]
        %v571 = vld [vmem:[%s326 + $0x308] sm:$0xff]
        %v572 = vld [vmem:[%s326 + $0x310] sm:$0xff]
        %v573 = vld [vmem:[%s326 + $0x318] sm:$0xff]
        %v574 = vld [vmem:[%s326 + $0x320] sm:$0xff]
        %v575 = vld [vmem:[%s326 + $0x328] sm:$0xff]
        %v576 = vld [vmem:[%s326 + $0x330] sm:$0xff]
        %v577 = vld [vmem:[%s326 + $0x338] sm:$0xff]
        %v578 = vld [vmem:[%s326 + $0x340] sm:$0xff]
        %v579 = vld [vmem:[%s326 + $0x348] sm:$0xff]
        %v580 = vld [vmem:[%s326 + $0x350] sm:$0xff]
        %v581 = vld [vmem:[%s326 + $0x358] sm:$0xff]
        %v582 = vld [vmem:[%s326 + $0x360] sm:$0xff]
        %v583 = vld [vmem:[%s326 + $0x368] sm:$0xff]
        %v584 = vld [vmem:[%s326 + $0x370] sm:$0xff]
        %v585 = vld [vmem:[%s326 + $0x378] sm:$0xff]
        %v586 = vld [vmem:[%s326 + $0x380] sm:$0xff]
        %v587 = vld [vmem:[%s326 + $0x388] sm:$0xff]
        %v588 = vld [vmem:[%s326 + $0x390] sm:$0xff]
        %v589 = vld [vmem:[%s326 + $0x398] sm:$0xff]
        %v590 = vld [vmem:[%s326 + $0x3a0] sm:$0xff]
        %v591 = vld [vmem:[%s326 + $0x3a8] sm:$0xff]
        %v592 = vld [vmem:[%s326 + $0x3b0] sm:$0xff]
        %v593 = vld [vmem:[%s326 + $0x3b8] sm:$0xff]
        %v594 = vld [vmem:[%s326 + $0x3c0] sm:$0xff]
        %v595 = vld [vmem:[%s326 + $0x3c8] sm:$0xff]
        %v596 = vld [vmem:[%s326 + $0x3d0] sm:$0xff]
        %v597 = vld [vmem:[%s326 + $0x3d8] sm:$0xff]
        %v598 = vld [vmem:[%s326 + $0x3e0] sm:$0xff]
        %v599 = vld [vmem:[%s326 + $0x3e8] sm:$0xff]
        %v600 = vld [vmem:[%s326 + $0x3f0] sm:$0xff]
        %v601 = vld [vmem:[%s326 + $0x3f8] sm:$0xff]
        %s602 = smul.u32 %s471, 4
        %s603 = scalar_lea.vmem [#allocation11], %s602
        %v604 = vld [vmem:[%s603] sm:$0xf]
        %v606 = vlaneseq
        %v607 = vshrl.u32 %v606, 7
        %v608 = vsub.s32 0, %v607
        %v609 = vrot.slane %v604, %v608
        %v610 = vlaneseq
        %v611 = vshrl.u32 %v610, 7
        %v612 = vsub.s32 1, %v611
        %v613 = vrot.slane %v604, %v612
        %v614 = vlaneseq
        %v615 = vshrl.u32 %v614, 7
        %v616 = vsub.s32 2, %v615
        %v617 = vrot.slane %v604, %v616
        %v618 = vlaneseq
        %v619 = vshrl.u32 %v618, 7
        %v620 = vsub.s32 3, %v619
        %v621 = vrot.slane %v604, %v620
        %v628 = vunpack.c.l.b16 %v472
        %v629 = vunpack.c.h.b16 %v472
        %v630 = vunpack.c.l.b16 %v473
        %v631 = vunpack.c.h.b16 %v473
        %v632 = vpack.c.b16 %v628, %v628
        %v633 = vpack.c.b16 %v629, %v629
        %v634 = vpack.c.b16 %v630, %v630
        %v635 = vpack.c.b16 %v631, %v631
        %v768 = vunpack.c.l.b16 %v474
        %v769 = vunpack.c.h.b16 %v474
        %v770 = vunpack.c.l.b16 %v475
        %v771 = vunpack.c.h.b16 %v475
        %v772 = vunpack.c.l.b16 %v476
        %v773 = vunpack.c.h.b16 %v476
        %v774 = vunpack.c.l.b16 %v477
        %v775 = vunpack.c.h.b16 %v477
        %v776 = vunpack.c.l.b16 %v478
        %v777 = vunpack.c.h.b16 %v478
        %v778 = vunpack.c.l.b16 %v479
        %v779 = vunpack.c.h.b16 %v479
        %v780 = vunpack.c.l.b16 %v480
        %v781 = vunpack.c.h.b16 %v480
        %v782 = vunpack.c.l.b16 %v481
        %v783 = vunpack.c.h.b16 %v481
        %v784 = vunpack.c.l.b16 %v482
        %v785 = vunpack.c.h.b16 %v482
        %v786 = vunpack.c.l.b16 %v483
        %v787 = vunpack.c.h.b16 %v483
        %v788 = vunpack.c.l.b16 %v484
        %v789 = vunpack.c.h.b16 %v484
        %v790 = vunpack.c.l.b16 %v485
        %v791 = vunpack.c.h.b16 %v485
        %v792 = vunpack.c.l.b16 %v486
        %v793 = vunpack.c.h.b16 %v486
        %v794 = vunpack.c.l.b16 %v487
        %v795 = vunpack.c.h.b16 %v487
        %v796 = vunpack.c.l.b16 %v488
        %v797 = vunpack.c.h.b16 %v488
        %v798 = vunpack.c.l.b16 %v489
        %v799 = vunpack.c.h.b16 %v489
        %v800 = vunpack.c.l.b16 %v490
        %v801 = vunpack.c.h.b16 %v490
        %v802 = vunpack.c.l.b16 %v491
        %v803 = vunpack.c.h.b16 %v491
        %v804 = vunpack.c.l.b16 %v492
        %v805 = vunpack.c.h.b16 %v492
        %v806 = vunpack.c.l.b16 %v493
        %v807 = vunpack.c.h.b16 %v493
        %v808 = vunpack.c.l.b16 %v494
        %v809 = vunpack.c.h.b16 %v494
        %v810 = vunpack.c.l.b16 %v495
        %v811 = vunpack.c.h.b16 %v495
        %v812 = vunpack.c.l.b16 %v496
        %v813 = vunpack.c.h.b16 %v496
        %v814 = vunpack.c.l.b16 %v497
        %v815 = vunpack.c.h.b16 %v497
        %v816 = vunpack.c.l.b16 %v498
        %v817 = vunpack.c.h.b16 %v498
        %v818 = vunpack.c.l.b16 %v499
        %v819 = vunpack.c.h.b16 %v499
        %v820 = vunpack.c.l.b16 %v500
        %v821 = vunpack.c.h.b16 %v500
        %v822 = vunpack.c.l.b16 %v501
        %v823 = vunpack.c.h.b16 %v501
        %v824 = vunpack.c.l.b16 %v502
        %v825 = vunpack.c.h.b16 %v502
        %v826 = vunpack.c.l.b16 %v503
        %v827 = vunpack.c.h.b16 %v503
        %v828 = vunpack.c.l.b16 %v504
        %v829 = vunpack.c.h.b16 %v504
        %v830 = vunpack.c.l.b16 %v505
        %v831 = vunpack.c.h.b16 %v505
        %v832 = vunpack.c.l.b16 %v506
        %v833 = vunpack.c.h.b16 %v506
        %v834 = vunpack.c.l.b16 %v507
        %v835 = vunpack.c.h.b16 %v507
        %v836 = vunpack.c.l.b16 %v508
        %v837 = vunpack.c.h.b16 %v508
        %v838 = vunpack.c.l.b16 %v509
        %v839 = vunpack.c.h.b16 %v509
        %v840 = vunpack.c.l.b16 %v510
        %v841 = vunpack.c.h.b16 %v510
        %v842 = vunpack.c.l.b16 %v511
        %v843 = vunpack.c.h.b16 %v511
        %v844 = vunpack.c.l.b16 %v512
        %v845 = vunpack.c.h.b16 %v512
        %v846 = vunpack.c.l.b16 %v513
        %v847 = vunpack.c.h.b16 %v513
        %v848 = vunpack.c.l.b16 %v514
        %v849 = vunpack.c.h.b16 %v514
        %v850 = vunpack.c.l.b16 %v515
        %v851 = vunpack.c.h.b16 %v515
        %v852 = vunpack.c.l.b16 %v516
        %v853 = vunpack.c.h.b16 %v516
        %v854 = vunpack.c.l.b16 %v517
        %v855 = vunpack.c.h.b16 %v517
        %v856 = vunpack.c.l.b16 %v518
        %v857 = vunpack.c.h.b16 %v518
        %v858 = vunpack.c.l.b16 %v519
        %v859 = vunpack.c.h.b16 %v519
        %v860 = vunpack.c.l.b16 %v520
        %v861 = vunpack.c.h.b16 %v520
        %v862 = vunpack.c.l.b16 %v521
        %v863 = vunpack.c.h.b16 %v521
        %v864 = vunpack.c.l.b16 %v522
        %v865 = vunpack.c.h.b16 %v522
        %v866 = vunpack.c.l.b16 %v523
        %v867 = vunpack.c.h.b16 %v523
        %v868 = vunpack.c.l.b16 %v524
        %v869 = vunpack.c.h.b16 %v524
        %v870 = vunpack.c.l.b16 %v525
        %v871 = vunpack.c.h.b16 %v525
        %v872 = vunpack.c.l.b16 %v526
        %v873 = vunpack.c.h.b16 %v526
        %v874 = vunpack.c.l.b16 %v527
        %v875 = vunpack.c.h.b16 %v527
        %v876 = vunpack.c.l.b16 %v528
        %v877 = vunpack.c.h.b16 %v528
        %v878 = vunpack.c.l.b16 %v529
        %v879 = vunpack.c.h.b16 %v529
        %v880 = vunpack.c.l.b16 %v530
        %v881 = vunpack.c.h.b16 %v530
        %v882 = vunpack.c.l.b16 %v531
        %v883 = vunpack.c.h.b16 %v531
        %v884 = vunpack.c.l.b16 %v532
        %v885 = vunpack.c.h.b16 %v532
        %v886 = vunpack.c.l.b16 %v533
        %v887 = vunpack.c.h.b16 %v533
        %v888 = vunpack.c.l.b16 %v534
        %v889 = vunpack.c.h.b16 %v534
        %v890 = vunpack.c.l.b16 %v535
        %v891 = vunpack.c.h.b16 %v535
        %v892 = vunpack.c.l.b16 %v536
        %v893 = vunpack.c.h.b16 %v536
        %v894 = vunpack.c.l.b16 %v537
        %v895 = vunpack.c.h.b16 %v537
        %v896 = vunpack.c.l.b16 %v538
        %v897 = vunpack.c.h.b16 %v538
        %v898 = vunpack.c.l.b16 %v539
        %v899 = vunpack.c.h.b16 %v539
        %v900 = vunpack.c.l.b16 %v540
        %v901 = vunpack.c.h.b16 %v540
        %v902 = vunpack.c.l.b16 %v541
        %v903 = vunpack.c.h.b16 %v541
        %v904 = vunpack.c.l.b16 %v542
        %v905 = vunpack.c.h.b16 %v542
        %v906 = vunpack.c.l.b16 %v543
        %v907 = vunpack.c.h.b16 %v543
        %v908 = vunpack.c.l.b16 %v544
        %v909 = vunpack.c.h.b16 %v544
        %v910 = vunpack.c.l.b16 %v545
        %v911 = vunpack.c.h.b16 %v545
        %v912 = vunpack.c.l.b16 %v546
        %v913 = vunpack.c.h.b16 %v546
        %v914 = vunpack.c.l.b16 %v547
        %v915 = vunpack.c.h.b16 %v547
        %v916 = vunpack.c.l.b16 %v548
        %v917 = vunpack.c.h.b16 %v548
        %v918 = vunpack.c.l.b16 %v549
        %v919 = vunpack.c.h.b16 %v549
        %v920 = vunpack.c.l.b16 %v550
        %v921 = vunpack.c.h.b16 %v550
        %v922 = vunpack.c.l.b16 %v551
        %v923 = vunpack.c.h.b16 %v551
        %v924 = vunpack.c.l.b16 %v552
        %v925 = vunpack.c.h.b16 %v552
        %v926 = vunpack.c.l.b16 %v553
        %v927 = vunpack.c.h.b16 %v553
        %v928 = vunpack.c.l.b16 %v554
        %v929 = vunpack.c.h.b16 %v554
        %v930 = vunpack.c.l.b16 %v555
        %v931 = vunpack.c.h.b16 %v555
        %v932 = vunpack.c.l.b16 %v556
        %v933 = vunpack.c.h.b16 %v556
        %v934 = vunpack.c.l.b16 %v557
        %v935 = vunpack.c.h.b16 %v557
        %v936 = vunpack.c.l.b16 %v558
        %v937 = vunpack.c.h.b16 %v558
        %v938 = vunpack.c.l.b16 %v559
        %v939 = vunpack.c.h.b16 %v559
        %v940 = vunpack.c.l.b16 %v560
        %v941 = vunpack.c.h.b16 %v560
        %v942 = vunpack.c.l.b16 %v561
        %v943 = vunpack.c.h.b16 %v561
        %v944 = vunpack.c.l.b16 %v562
        %v945 = vunpack.c.h.b16 %v562
        %v946 = vunpack.c.l.b16 %v563
        %v947 = vunpack.c.h.b16 %v563
        %v948 = vunpack.c.l.b16 %v564
        %v949 = vunpack.c.h.b16 %v564
        %v950 = vunpack.c.l.b16 %v565
        %v951 = vunpack.c.h.b16 %v565
        %v952 = vunpack.c.l.b16 %v566
        %v953 = vunpack.c.h.b16 %v566
        %v954 = vunpack.c.l.b16 %v567
        %v955 = vunpack.c.h.b16 %v567
        %v956 = vunpack.c.l.b16 %v568
        %v957 = vunpack.c.h.b16 %v568
        %v958 = vunpack.c.l.b16 %v569
        %v959 = vunpack.c.h.b16 %v569
        %v960 = vunpack.c.l.b16 %v570
        %v961 = vunpack.c.h.b16 %v570
        %v962 = vunpack.c.l.b16 %v571
        %v963 = vunpack.c.h.b16 %v571
        %v964 = vunpack.c.l.b16 %v572
        %v965 = vunpack.c.h.b16 %v572
        %v966 = vunpack.c.l.b16 %v573
        %v967 = vunpack.c.h.b16 %v573
        %v968 = vunpack.c.l.b16 %v574
        %v969 = vunpack.c.h.b16 %v574
        %v970 = vunpack.c.l.b16 %v575
        %v971 = vunpack.c.h.b16 %v575
        %v972 = vunpack.c.l.b16 %v576
        %v973 = vunpack.c.h.b16 %v576
        %v974 = vunpack.c.l.b16 %v577
        %v975 = vunpack.c.h.b16 %v577
        %v976 = vunpack.c.l.b16 %v578
        %v977 = vunpack.c.h.b16 %v578
        %v978 = vunpack.c.l.b16 %v579
        %v979 = vunpack.c.h.b16 %v579
        %v980 = vunpack.c.l.b16 %v580
        %v981 = vunpack.c.h.b16 %v580
        %v982 = vunpack.c.l.b16 %v581
        %v983 = vunpack.c.h.b16 %v581
        %v984 = vunpack.c.l.b16 %v582
        %v985 = vunpack.c.h.b16 %v582
        %v986 = vunpack.c.l.b16 %v583
        %v987 = vunpack.c.h.b16 %v583
        %v988 = vunpack.c.l.b16 %v584
        %v989 = vunpack.c.h.b16 %v584
        %v990 = vunpack.c.l.b16 %v585
        %v991 = vunpack.c.h.b16 %v585
        %v992 = vunpack.c.l.b16 %v586
        %v993 = vunpack.c.h.b16 %v586
        %v994 = vunpack.c.l.b16 %v587
        %v995 = vunpack.c.h.b16 %v587
        %v996 = vunpack.c.l.b16 %v588
        %v997 = vunpack.c.h.b16 %v588
        %v998 = vunpack.c.l.b16 %v589
        %v999 = vunpack.c.h.b16 %v589
        %v1000 = vunpack.c.l.b16 %v590
        %v1001 = vunpack.c.h.b16 %v590
        %v1002 = vunpack.c.l.b16 %v591
        %v1003 = vunpack.c.h.b16 %v591
        %v1004 = vunpack.c.l.b16 %v592
        %v1005 = vunpack.c.h.b16 %v592
        %v1006 = vunpack.c.l.b16 %v593
        %v1007 = vunpack.c.h.b16 %v593
        %v1008 = vunpack.c.l.b16 %v594
        %v1009 = vunpack.c.h.b16 %v594
        %v1010 = vunpack.c.l.b16 %v595
        %v1011 = vunpack.c.h.b16 %v595
        %v1012 = vunpack.c.l.b16 %v596
        %v1013 = vunpack.c.h.b16 %v596
        %v1014 = vunpack.c.l.b16 %v597
        %v1015 = vunpack.c.h.b16 %v597
        %v1016 = vunpack.c.l.b16 %v598
        %v1017 = vunpack.c.h.b16 %v598
        %v1018 = vunpack.c.l.b16 %v599
        %v1019 = vunpack.c.h.b16 %v599
        %v1020 = vunpack.c.l.b16 %v600
        %v1021 = vunpack.c.h.b16 %v600
        %v1022 = vunpack.c.l.b16 %v601
        %v1023 = vunpack.c.h.b16 %v601
        %v1024 = vpack.c.b16 %v772, %v768
        %v1025 = vpack.c.b16 %v773, %v769
        %v1026 = vpack.c.b16 %v774, %v770
        %v1027 = vpack.c.b16 %v775, %v771
        %v1028 = vpack.c.b16 %v780, %v776
        %v1029 = vpack.c.b16 %v781, %v777
        %v1030 = vpack.c.b16 %v782, %v778
        %v1031 = vpack.c.b16 %v783, %v779
        %v1032 = vpack.c.b16 %v788, %v784
        %v1033 = vpack.c.b16 %v789, %v785
        %v1034 = vpack.c.b16 %v790, %v786
        %v1035 = vpack.c.b16 %v791, %v787
        %v1036 = vpack.c.b16 %v796, %v792
        %v1037 = vpack.c.b16 %v797, %v793
        %v1038 = vpack.c.b16 %v798, %v794
        %v1039 = vpack.c.b16 %v799, %v795
        %v1040 = vpack.c.b16 %v804, %v800
        %v1041 = vpack.c.b16 %v805, %v801
        %v1042 = vpack.c.b16 %v806, %v802
        %v1043 = vpack.c.b16 %v807, %v803
        %v1044 = vpack.c.b16 %v812, %v808
        %v1045 = vpack.c.b16 %v813, %v809
        %v1046 = vpack.c.b16 %v814, %v810
        %v1047 = vpack.c.b16 %v815, %v811
        %v1048 = vpack.c.b16 %v820, %v816
        %v1049 = vpack.c.b16 %v821, %v817
        %v1050 = vpack.c.b16 %v822, %v818
        %v1051 = vpack.c.b16 %v823, %v819
        %v1052 = vpack.c.b16 %v828, %v824
        %v1053 = vpack.c.b16 %v829, %v825
        %v1054 = vpack.c.b16 %v830, %v826
        %v1055 = vpack.c.b16 %v831, %v827
        %v1056 = vpack.c.b16 %v836, %v832
        %v1057 = vpack.c.b16 %v837, %v833
        %v1058 = vpack.c.b16 %v838, %v834
        %v1059 = vpack.c.b16 %v839, %v835
        %v1060 = vpack.c.b16 %v844, %v840
        %v1061 = vpack.c.b16 %v845, %v841
        %v1062 = vpack.c.b16 %v846, %v842
        %v1063 = vpack.c.b16 %v847, %v843
        %v1064 = vpack.c.b16 %v852, %v848
        %v1065 = vpack.c.b16 %v853, %v849
        %v1066 = vpack.c.b16 %v854, %v850
        %v1067 = vpack.c.b16 %v855, %v851
        %v1068 = vpack.c.b16 %v860, %v856
        %v1069 = vpack.c.b16 %v861, %v857
        %v1070 = vpack.c.b16 %v862, %v858
        %v1071 = vpack.c.b16 %v863, %v859
        %v1072 = vpack.c.b16 %v868, %v864
        %v1073 = vpack.c.b16 %v869, %v865
        %v1074 = vpack.c.b16 %v870, %v866
        %v1075 = vpack.c.b16 %v871, %v867
        %v1076 = vpack.c.b16 %v876, %v872
        %v1077 = vpack.c.b16 %v877, %v873
        %v1078 = vpack.c.b16 %v878, %v874
        %v1079 = vpack.c.b16 %v879, %v875
        %v1080 = vpack.c.b16 %v884, %v880
        %v1081 = vpack.c.b16 %v885, %v881
        %v1082 = vpack.c.b16 %v886, %v882
        %v1083 = vpack.c.b16 %v887, %v883
        %v1084 = vpack.c.b16 %v892, %v888
        %v1085 = vpack.c.b16 %v893, %v889
        %v1086 = vpack.c.b16 %v894, %v890
        %v1087 = vpack.c.b16 %v895, %v891
        %v1088 = vpack.c.b16 %v900, %v896
        %v1089 = vpack.c.b16 %v901, %v897
        %v1090 = vpack.c.b16 %v902, %v898
        %v1091 = vpack.c.b16 %v903, %v899
        %v1092 = vpack.c.b16 %v908, %v904
        %v1093 = vpack.c.b16 %v909, %v905
        %v1094 = vpack.c.b16 %v910, %v906
        %v1095 = vpack.c.b16 %v911, %v907
        %v1096 = vpack.c.b16 %v916, %v912
        %v1097 = vpack.c.b16 %v917, %v913
        %v1098 = vpack.c.b16 %v918, %v914
        %v1099 = vpack.c.b16 %v919, %v915
        %v1100 = vpack.c.b16 %v924, %v920
        %v1101 = vpack.c.b16 %v925, %v921
        %v1102 = vpack.c.b16 %v926, %v922
        %v1103 = vpack.c.b16 %v927, %v923
        %v1104 = vpack.c.b16 %v932, %v928
        %v1105 = vpack.c.b16 %v933, %v929
        %v1106 = vpack.c.b16 %v934, %v930
        %v1107 = vpack.c.b16 %v935, %v931
        %v1108 = vpack.c.b16 %v940, %v936
        %v1109 = vpack.c.b16 %v941, %v937
        %v1110 = vpack.c.b16 %v942, %v938
        %v1111 = vpack.c.b16 %v943, %v939
        %v1112 = vpack.c.b16 %v948, %v944
        %v1113 = vpack.c.b16 %v949, %v945
        %v1114 = vpack.c.b16 %v950, %v946
        %v1115 = vpack.c.b16 %v951, %v947
        %v1116 = vpack.c.b16 %v956, %v952
        %v1117 = vpack.c.b16 %v957, %v953
        %v1118 = vpack.c.b16 %v958, %v954
        %v1119 = vpack.c.b16 %v959, %v955
        %v1120 = vpack.c.b16 %v964, %v960
        %v1121 = vpack.c.b16 %v965, %v961
        %v1122 = vpack.c.b16 %v966, %v962
        %v1123 = vpack.c.b16 %v967, %v963
        %v1124 = vpack.c.b16 %v972, %v968
        %v1125 = vpack.c.b16 %v973, %v969
        %v1126 = vpack.c.b16 %v974, %v970
        %v1127 = vpack.c.b16 %v975, %v971
        %v1128 = vpack.c.b16 %v980, %v976
        %v1129 = vpack.c.b16 %v981, %v977
        %v1130 = vpack.c.b16 %v982, %v978
        %v1131 = vpack.c.b16 %v983, %v979
        %v1132 = vpack.c.b16 %v988, %v984
        %v1133 = vpack.c.b16 %v989, %v985
        %v1134 = vpack.c.b16 %v990, %v986
        %v1135 = vpack.c.b16 %v991, %v987
        %v1136 = vpack.c.b16 %v996, %v992
        %v1137 = vpack.c.b16 %v997, %v993
        %v1138 = vpack.c.b16 %v998, %v994
        %v1139 = vpack.c.b16 %v999, %v995
        %v1140 = vpack.c.b16 %v1004, %v1000
        %v1141 = vpack.c.b16 %v1005, %v1001
        %v1142 = vpack.c.b16 %v1006, %v1002
        %v1143 = vpack.c.b16 %v1007, %v1003
        %v1144 = vpack.c.b16 %v1012, %v1008
        %v1145 = vpack.c.b16 %v1013, %v1009
        %v1146 = vpack.c.b16 %v1014, %v1010
        %v1147 = vpack.c.b16 %v1015, %v1011
        %v1148 = vpack.c.b16 %v1020, %v1016
        %v1149 = vpack.c.b16 %v1021, %v1017
        %v1150 = vpack.c.b16 %v1022, %v1018
        %v1151 = vpack.c.b16 %v1023, %v1019
        %1280 = vmatprep.subr.bf16.mxu0 %v1025
        %1281 = vmatpush1.bf16.msra.mxu0 %v1024
        %1282 = vmatprep.subr.bf16.mxu0 %v1029
        %1283 = vmatpush1.bf16.msra.mxu0 %v1028
        %1284 = vmatprep.subr.bf16.mxu0 %v1033
        %1285 = vmatpush1.bf16.msra.mxu0 %v1032
        %1286 = vmatprep.subr.bf16.mxu0 %v1037
        %1287 = vmatpush1.bf16.msra.mxu0 %v1036
        %1288 = vmatprep.subr.bf16.mxu0 %v1041
        %1289 = vmatpush1.bf16.msra.mxu0 %v1040
        %1290 = vmatprep.subr.bf16.mxu0 %v1045
        %1291 = vmatpush1.bf16.msra.mxu0 %v1044
        %1292 = vmatprep.subr.bf16.mxu0 %v1049
        %1293 = vmatpush1.bf16.msra.mxu0 %v1048
        %1294 = vmatprep.subr.bf16.mxu0 %v1053
        %1295 = vmatpush1.bf16.msra.mxu0 %v1052
        %1296 = vmatprep.subr.bf16.mxu0 %v1057
        %1297 = vmatpush1.bf16.msra.mxu0 %v1056
        %1298 = vmatprep.subr.bf16.mxu0 %v1061
        %1299 = vmatpush1.bf16.msra.mxu0 %v1060
        %1300 = vmatprep.subr.bf16.mxu0 %v1065
        %1301 = vmatpush1.bf16.msra.mxu0 %v1064
        %1302 = vmatprep.subr.bf16.mxu0 %v1069
        %1303 = vmatpush1.bf16.msra.mxu0 %v1068
        %1304 = vmatprep.subr.bf16.mxu0 %v1073
        %1305 = vmatpush1.bf16.msra.mxu0 %v1072
        %1306 = vmatprep.subr.bf16.mxu0 %v1077
        %1307 = vmatpush1.bf16.msra.mxu0 %v1076
        %1308 = vmatprep.subr.bf16.mxu0 %v1081
        %1309 = vmatpush1.bf16.msra.mxu0 %v1080
        %1310 = vmatprep.subr.bf16.mxu0 %v1085
        %1311 = vmatpush1.bf16.msra.mxu0 %v1084
        %1312 = vmatprep.mubr.bf16.mxu0 %v633
        %1313 = vmatmul.mubr.bf16.gmra.mrb[0].mxu0 %v632
        %v1314 = vpop.f32.mrb[0].mxu0
        %v1315 = vadd.f32 %v609, %v1314
        %v1316 = vpop.f32.mrb[0].mxu0
        %v1317 = vadd.f32 %v613, %v1316
        %v1318 = vpop.f32.mrb[0].mxu0
        %v1319 = vpop.f32.mrb[0].mxu0
        %1320 = vdwg.mxu0
        %1321 = vmatprep.subr.bf16.mxu0 %v1089
        %1322 = vmatpush1.bf16.msra.mxu0 %v1088
        %1323 = vmatprep.subr.bf16.mxu0 %v1093
        %1324 = vmatpush1.bf16.msra.mxu0 %v1092
        %1325 = vmatprep.subr.bf16.mxu0 %v1097
        %1326 = vmatpush1.bf16.msra.mxu0 %v1096
        %1327 = vmatprep.subr.bf16.mxu0 %v1101
        %1328 = vmatpush1.bf16.msra.mxu0 %v1100
        %1329 = vmatprep.subr.bf16.mxu0 %v1105
        %1330 = vmatpush1.bf16.msra.mxu0 %v1104
        %1331 = vmatprep.subr.bf16.mxu0 %v1109
        %1332 = vmatpush1.bf16.msra.mxu0 %v1108
        %1333 = vmatprep.subr.bf16.mxu0 %v1113
        %1334 = vmatpush1.bf16.msra.mxu0 %v1112
        %1335 = vmatprep.subr.bf16.mxu0 %v1117
        %1336 = vmatpush1.bf16.msra.mxu0 %v1116
        %1337 = vmatprep.subr.bf16.mxu0 %v1121
        %1338 = vmatpush1.bf16.msra.mxu0 %v1120
        %1339 = vmatprep.subr.bf16.mxu0 %v1125
        %1340 = vmatpush1.bf16.msra.mxu0 %v1124
        %1341 = vmatprep.subr.bf16.mxu0 %v1129
        %1342 = vmatpush1.bf16.msra.mxu0 %v1128
        %1343 = vmatprep.subr.bf16.mxu0 %v1133
        %1344 = vmatpush1.bf16.msra.mxu0 %v1132
        %1345 = vmatprep.subr.bf16.mxu0 %v1137
        %1346 = vmatpush1.bf16.msra.mxu0 %v1136
        %1347 = vmatprep.subr.bf16.mxu0 %v1141
        %1348 = vmatpush1.bf16.msra.mxu0 %v1140
        %1349 = vmatprep.subr.bf16.mxu0 %v1145
        %1350 = vmatpush1.bf16.msra.mxu0 %v1144
        %1351 = vmatprep.subr.bf16.mxu0 %v1149
        %1352 = vmatpush1.bf16.msra.mxu0 %v1148
        %1353 = vmatprep.mubr.bf16.mxu0 %v635
        %1354 = vmatmul.mubr.bf16.gmra.mrb[0].mxu0 %v634
        %v1355 = vpop.f32.mrb[0].mxu0
        %v1356 = vadd.f32 %v1315, %v1355
        %v1357 = vpop.f32.mrb[0].mxu0
        %v1358 = vadd.f32 %v1317, %v1357
        %v1359 = vpop.f32.mrb[0].mxu0
        %v1360 = vpop.f32.mrb[0].mxu0
        %1361 = vdwg.mxu0
        %1362 = vmatprep.subr.bf16.mxu0 %v1027
        %1363 = vmatpush1.bf16.msra.mxu0 %v1026
        %1364 = vmatprep.subr.bf16.mxu0 %v1031
        %1365 = vmatpush1.bf16.msra.mxu0 %v1030
        %1366 = vmatprep.subr.bf16.mxu0 %v1035
        %1367 = vmatpush1.bf16.msra.mxu0 %v1034
        %1368 = vmatprep.subr.bf16.mxu0 %v1039
        %1369 = vmatpush1.bf16.msra.mxu0 %v1038
        %1370 = vmatprep.subr.bf16.mxu0 %v1043
        %1371 = vmatpush1.bf16.msra.mxu0 %v1042
        %1372 = vmatprep.subr.bf16.mxu0 %v1047
        %1373 = vmatpush1.bf16.msra.mxu0 %v1046
        %1374 = vmatprep.subr.bf16.mxu0 %v1051
        %1375 = vmatpush1.bf16.msra.mxu0 %v1050
        %1376 = vmatprep.subr.bf16.mxu0 %v1055
        %1377 = vmatpush1.bf16.msra.mxu0 %v1054
        %1378 = vmatprep.subr.bf16.mxu0 %v1059
        %1379 = vmatpush1.bf16.msra.mxu0 %v1058
        %1380 = vmatprep.subr.bf16.mxu0 %v1063
        %1381 = vmatpush1.bf16.msra.mxu0 %v1062
        %1382 = vmatprep.subr.bf16.mxu0 %v1067
        %1383 = vmatpush1.bf16.msra.mxu0 %v1066
        %1384 = vmatprep.subr.bf16.mxu0 %v1071
        %1385 = vmatpush1.bf16.msra.mxu0 %v1070
        %1386 = vmatprep.subr.bf16.mxu0 %v1075
        %1387 = vmatpush1.bf16.msra.mxu0 %v1074
        %1388 = vmatprep.subr.bf16.mxu0 %v1079
        %1389 = vmatpush1.bf16.msra.mxu0 %v1078
        %1390 = vmatprep.subr.bf16.mxu0 %v1083
        %1391 = vmatpush1.bf16.msra.mxu0 %v1082
        %1392 = vmatprep.subr.bf16.mxu0 %v1087
        %1393 = vmatpush1.bf16.msra.mxu0 %v1086
        %1394 = vmatprep.mubr.bf16.mxu0 %v633
        %1395 = vmatmul.mubr.bf16.gmra.mrb[0].mxu0 %v632
        %v1396 = vpop.f32.mrb[0].mxu0
        %v1397 = vadd.f32 %v617, %v1396
        %v1398 = vpop.f32.mrb[0].mxu0
        %v1399 = vadd.f32 %v621, %v1398
        %v1400 = vpop.f32.mrb[0].mxu0
        %v1401 = vpop.f32.mrb[0].mxu0
        %1402 = vdwg.mxu0
        %1403 = vmatprep.subr.bf16.mxu0 %v1091
        %1404 = vmatpush1.bf16.msra.mxu0 %v1090
        %1405 = vmatprep.subr.bf16.mxu0 %v1095
        %1406 = vmatpush1.bf16.msra.mxu0 %v1094
        %1407 = vmatprep.subr.bf16.mxu0 %v1099
        %1408 = vmatpush1.bf16.msra.mxu0 %v1098
        %1409 = vmatprep.subr.bf16.mxu0 %v1103
        %1410 = vmatpush1.bf16.msra.mxu0 %v1102
        %1411 = vmatprep.subr.bf16.mxu0 %v1107
        %1412 = vmatpush1.bf16.msra.mxu0 %v1106
        %1413 = vmatprep.subr.bf16.mxu0 %v1111
        %1414 = vmatpush1.bf16.msra.mxu0 %v1110
        %1415 = vmatprep.subr.bf16.mxu0 %v1115
        %1416 = vmatpush1.bf16.msra.mxu0 %v1114
        %1417 = vmatprep.subr.bf16.mxu0 %v1119
        %1418 = vmatpush1.bf16.msra.mxu0 %v1118
        %1419 = vmatprep.subr.bf16.mxu0 %v1123
        %1420 = vmatpush1.bf16.msra.mxu0 %v1122
        %1421 = vmatprep.subr.bf16.mxu0 %v1127
        %1422 = vmatpush1.bf16.msra.mxu0 %v1126
        %1423 = vmatprep.subr.bf16.mxu0 %v1131
        %1424 = vmatpush1.bf16.msra.mxu0 %v1130
        %1425 = vmatprep.subr.bf16.mxu0 %v1135
        %1426 = vmatpush1.bf16.msra.mxu0 %v1134
        %1427 = vmatprep.subr.bf16.mxu0 %v1139
        %1428 = vmatpush1.bf16.msra.mxu0 %v1138
        %1429 = vmatprep.subr.bf16.mxu0 %v1143
        %1430 = vmatpush1.bf16.msra.mxu0 %v1142
        %1431 = vmatprep.subr.bf16.mxu0 %v1147
        %1432 = vmatpush1.bf16.msra.mxu0 %v1146
        %1433 = vmatprep.subr.bf16.mxu0 %v1151
        %1434 = vmatpush1.bf16.msra.mxu0 %v1150
        %1435 = vmatprep.mubr.bf16.mxu0 %v635
        %1436 = vmatmul.mubr.bf16.gmra.mrb[0].mxu0 %v634
        %v1437 = vpop.f32.mrb[0].mxu0
        %v1438 = vadd.f32 %v1397, %v1437
        %v1439 = vpop.f32.mrb[0].mxu0
        %v1440 = vadd.f32 %v1399, %v1439
        %v1441 = vpop.f32.mrb[0].mxu0
        %v1442 = vpop.f32.mrb[0].mxu0
        %1443 = vdwg.mxu0
        %p1444 = scmp.lt.s32.totalorder %s471, 5
        // Predicated region
        $region81: #{gcn_forward.1} parent=47 // pred_check
          %p1445 = pneg %p1444
        $region82: #{gcn_forward.1} parent=47 // pred_check_branch
          %1447 = sbr.rel (%p1445) target = $region84
        $region83: #{gcn_forward.1} parent=47 // pred_region
          %v1448 = vld [vmem:[#allocation3] sm:$0xf]
          %v1449 = vpack.c.bf16 %v1356, %v1356
          %v1450 = vpack.c.bf16 %v1358, %v1358
          %v1451 = vpack.c.bf16 %v1438, %v1438
          %v1452 = vpack.c.bf16 %v1440, %v1440
          %vm1453 = vcmask 64512
          %v1455 = vsel %vm1453, %v1448, 0
          %vm1457 = vcmask 1043456
          %v1459 = vsel %vm1457, %v1449, 0
          %v1462 = vsel %vm1457, %v1450, 0
          %v1465 = vsel %vm1457, %v1451, 0
          %v1468 = vsel %vm1457, %v1452, 0
          %1470 = vmatprep.subr.bf16.mxu0 %v1462
          %1471 = vmatpush1.bf16.msra.mxu0 %v1459
          %1472 = vmatprep.subr.bf16.mxu0 0
          %1473 = vmatpush1.bf16.msra.mxu0 0
          %1474 = vmatprep.subr.bf16.mxu0 0
          %1475 = vmatpush1.bf16.msra.mxu0 0
          %1476 = vmatprep.subr.bf16.mxu0 0
          %1477 = vmatpush1.bf16.msra.mxu0 0
          %1478 = vmatprep.subr.bf16.mxu0 0
          %1479 = vmatpush1.bf16.msra.mxu0 0
          %1480 = vmatprep.subr.bf16.mxu0 0
          %1481 = vmatpush1.bf16.msra.mxu0 0
          %1482 = vmatprep.subr.bf16.mxu0 0
          %1483 = vmatpush1.bf16.msra.mxu0 0
          %1484 = vmatprep.subr.bf16.mxu0 0
          %1485 = vmatpush1.bf16.msra.mxu0 0
          %1486 = vmatprep.subr.bf16.mxu0 0
          %1487 = vmatpush1.bf16.msra.mxu0 0
          %1488 = vmatprep.subr.bf16.mxu0 0
          %1489 = vmatpush1.bf16.msra.mxu0 0
          %1490 = vmatprep.subr.bf16.mxu0 0
          %1491 = vmatpush1.bf16.msra.mxu0 0
          %1492 = vmatprep.subr.bf16.mxu0 0
          %1493 = vmatpush1.bf16.msra.mxu0 0
          %1494 = vmatprep.subr.bf16.mxu0 0
          %1495 = vmatpush1.bf16.msra.mxu0 0
          %1496 = vmatprep.subr.bf16.mxu0 0
          %1497 = vmatpush1.bf16.msra.mxu0 0
          %1498 = vmatprep.subr.bf16.mxu0 0
          %1499 = vmatpush1.bf16.msra.mxu0 0
          %1500 = vmatprep.subr.bf16.mxu0 0
          %1501 = vmatpush1.bf16.msra.mxu0 0
          %1502 = vmatprep.mubr.bf16.mxu0 0
          %1503 = vmatmul.mubr.bf16.gmra.mrb[0].mxu0 %v1455
          %v1504 = vpop.f32.mrb[0].mxu0
          %v1505 = vadd.f32 0.0, %v1504
          %v1506 = vpop.f32.mrb[0].mxu0
          %v1507 = vadd.f32 0.0, %v1506
          %v1508 = vpop.f32.mrb[0].mxu0
          %v1509 = vpop.f32.mrb[0].mxu0
          %1510 = vdwg.mxu0
          %1511 = vmatprep.subr.bf16.mxu0 %v1468
          %1512 = vmatpush1.bf16.msra.mxu0 %v1465
          %1513 = vmatprep.subr.bf16.mxu0 0
          %1514 = vmatpush1.bf16.msra.mxu0 0
          %1515 = vmatprep.subr.bf16.mxu0 0
          %1516 = vmatpush1.bf16.msra.mxu0 0
          %1517 = vmatprep.subr.bf16.mxu0 0
          %1518 = vmatpush1.bf16.msra.mxu0 0
          %1519 = vmatprep.subr.bf16.mxu0 0
          %1520 = vmatpush1.bf16.msra.mxu0 0
          %1521 = vmatprep.subr.bf16.mxu0 0
          %1522 = vmatpush1.bf16.msra.mxu0 0
          %1523 = vmatprep.subr.bf16.mxu0 0
          %1524 = vmatpush1.bf16.msra.mxu0 0
          %1525 = vmatprep.subr.bf16.mxu0 0
          %1526 = vmatpush1.bf16.msra.mxu0 0
          %1527 = vmatprep.subr.bf16.mxu0 0
          %1528 = vmatpush1.bf16.msra.mxu0 0
          %1529 = vmatprep.subr.bf16.mxu0 0
          %1530 = vmatpush1.bf16.msra.mxu0 0
          %1531 = vmatprep.subr.bf16.mxu0 0
          %1532 = vmatpush1.bf16.msra.mxu0 0
          %1533 = vmatprep.subr.bf16.mxu0 0
          %1534 = vmatpush1.bf16.msra.mxu0 0
          %1535 = vmatprep.subr.bf16.mxu0 0
          %1536 = vmatpush1.bf16.msra.mxu0 0
          %1537 = vmatprep.subr.bf16.mxu0 0
          %1538 = vmatpush1.bf16.msra.mxu0 0
          %1539 = vmatprep.subr.bf16.mxu0 0
          %1540 = vmatpush1.bf16.msra.mxu0 0
          %1541 = vmatprep.subr.bf16.mxu0 0
          %1542 = vmatpush1.bf16.msra.mxu0 0
          %1543 = vmatprep.mubr.bf16.mxu0 0
          %1544 = vmatmul.mubr.bf16.gmra.mrb[0].mxu0 %v1455
          %v1545 = vpop.f32.mrb[0].mxu0
          %v1546 = vadd.f32 0.0, %v1545
          %v1547 = vpop.f32.mrb[0].mxu0
          %v1548 = vadd.f32 0.0, %v1547
          %v1549 = vpop.f32.mrb[0].mxu0
          %v1550 = vpop.f32.mrb[0].mxu0
          %1551 = vdwg.mxu0
          %v1552 = vmax.f32 %v1505, 0.0
          %v1553 = vmax.f32 %v1507, 0.0
          %v1554 = vmax.f32 %v1546, 0.0
          %v1555 = vmax.f32 %v1548, 0.0
          %v1556 = vpack.c.bf16 %v1552, %v1552
          %v1557 = vpack.c.bf16 %v1553, %v1553
          %v1558 = vpack.c.bf16 %v1554, %v1554
          %v1559 = vpack.c.bf16 %v1555, %v1555
          %v1564 = vunpack.c.l.b16 %v1556
          %v1565 = vunpack.c.l.b16 %v1557
          %v1566 = vunpack.c.l.b16 %v1558
          %v1567 = vunpack.c.l.b16 %v1559
          %v1568 = vpack.c.b16 %v1565, %v1564
          %v1569 = vpack.c.b16 %v1567, %v1566
          %1572 = vst [vmem:[#allocation2] sm:$0xff] %v1568
          %1573 = vst [vmem:[#allocation2 + $0x8] sm:$0xff] %v1569
        $region84: #{gcn_forward.1} parent=47 // pred_fallthru
          _
        %p1574 = scmp.ge.s32.totalorder %s471, 5
        // Predicated region
        $region85: #{gcn_forward.1} parent=47 // pred_check
          %p1575 = pneg %p1574
        $region86: #{gcn_forward.1} parent=47 // pred_check_branch
          %1577 = sbr.rel (%p1575) target = $region88
        $region87: #{gcn_forward.1} parent=47 // pred_region
          %v1578 = vmax.f32 %v1356, 0.0
          %v1579 = vmax.f32 %v1358, 0.0
          %v1580 = vmax.f32 %v1438, 0.0
          %v1581 = vmax.f32 %v1440, 0.0
          %v1582 = vpack.c.bf16 %v1578, %v1578
          %v1583 = vpack.c.bf16 %v1579, %v1579
          %v1584 = vpack.c.bf16 %v1580, %v1580
          %v1585 = vpack.c.bf16 %v1581, %v1581
          %v1590 = vunpack.c.l.b16 %v1582
          %v1591 = vunpack.c.l.b16 %v1583
          %v1592 = vunpack.c.l.b16 %v1584
          %v1593 = vunpack.c.l.b16 %v1585
          %v1594 = vpack.c.b16 %v1591, %v1590
          %v1595 = vpack.c.b16 %v1593, %v1592
          %1598 = vst [vmem:[#allocation2] sm:$0xff] %v1594
          %1599 = vst [vmem:[#allocation2 + $0x8] sm:$0xff] %v1595
        $region88: #{gcn_forward.1} parent=47 // pred_fallthru
          _
        %s1600 = sadd.s32 %s471, 1
        %v1601 = vld [vmem:[#allocation2] sm:$0xff]
        %v1602 = vld [vmem:[#allocation2 + $0x8] sm:$0xff]
        %s1603 = scalar_lea.vmem %s326, 1024 [#allocation9]
        %v1604 = vld [vmem:[%s1603] sm:$0xff]
        %v1605 = vld [vmem:[%s1603 + $0x8] sm:$0xff]
        %v1606 = vld [vmem:[%s1603 + $0x10] sm:$0xff]
        %v1607 = vld [vmem:[%s1603 + $0x18] sm:$0xff]
        %v1608 = vld [vmem:[%s1603 + $0x20] sm:$0xff]
        %v1609 = vld [vmem:[%s1603 + $0x28] sm:$0xff]
        %v1610 = vld [vmem:[%s1603 + $0x30] sm:$0xff]
        %v1611 = vld [vmem:[%s1603 + $0x38] sm:$0xff]
        %v1612 = vld [vmem:[%s1603 + $0x40] sm:$0xff]
        %v1613 = vld [vmem:[%s1603 + $0x48] sm:$0xff]
        %v1614 = vld [vmem:[%s1603 + $0x50] sm:$0xff]
        %v1615 = vld [vmem:[%s1603 + $0x58] sm:$0xff]
        %v1616 = vld [vmem:[%s1603 + $0x60] sm:$0xff]
        %v1617 = vld [vmem:[%s1603 + $0x68] sm:$0xff]
        %v1618 = vld [vmem:[%s1603 + $0x70] sm:$0xff]
        %v1619 = vld [vmem:[%s1603 + $0x78] sm:$0xff]
        %v1620 = vld [vmem:[%s1603 + $0x80] sm:$0xff]
        %v1621 = vld [vmem:[%s1603 + $0x88] sm:$0xff]
        %v1622 = vld [vmem:[%s1603 + $0x90] sm:$0xff]
        %v1623 = vld [vmem:[%s1603 + $0x98] sm:$0xff]
        %v1624 = vld [vmem:[%s1603 + $0xa0] sm:$0xff]
        %v1625 = vld [vmem:[%s1603 + $0xa8] sm:$0xff]
        %v1626 = vld [vmem:[%s1603 + $0xb0] sm:$0xff]
        %v1627 = vld [vmem:[%s1603 + $0xb8] sm:$0xff]
        %v1628 = vld [vmem:[%s1603 + $0xc0] sm:$0xff]
        %v1629 = vld [vmem:[%s1603 + $0xc8] sm:$0xff]
        %v1630 = vld [vmem:[%s1603 + $0xd0] sm:$0xff]
        %v1631 = vld [vmem:[%s1603 + $0xd8] sm:$0xff]
        %v1632 = vld [vmem:[%s1603 + $0xe0] sm:$0xff]
        %v1633 = vld [vmem:[%s1603 + $0xe8] sm:$0xff]
        %v1634 = vld [vmem:[%s1603 + $0xf0] sm:$0xff]
        %v1635 = vld [vmem:[%s1603 + $0xf8] sm:$0xff]
        %v1636 = vld [vmem:[%s1603 + $0x100] sm:$0xff]
        %v1637 = vld [vmem:[%s1603 + $0x108] sm:$0xff]
        %v1638 = vld [vmem:[%s1603 + $0x110] sm:$0xff]
        %v1639 = vld [vmem:[%s1603 + $0x118] sm:$0xff]
        %v1640 = vld [vmem:[%s1603 + $0x120] sm:$0xff]
        %v1641 = vld [vmem:[%s1603 + $0x128] sm:$0xff]
        %v1642 = vld [vmem:[%s1603 + $0x130] sm:$0xff]
        %v1643 = vld [vmem:[%s1603 + $0x138] sm:$0xff]
        %v1644 = vld [vmem:[%s1603 + $0x140] sm:$0xff]
        %v1645 = vld [vmem:[%s1603 + $0x148] sm:$0xff]
        %v1646 = vld [vmem:[%s1603 + $0x150] sm:$0xff]
        %v1647 = vld [vmem:[%s1603 + $0x158] sm:$0xff]
        %v1648 = vld [vmem:[%s1603 + $0x160] sm:$0xff]
        %v1649 = vld [vmem:[%s1603 + $0x168] sm:$0xff]
        %v1650 = vld [vmem:[%s1603 + $0x170] sm:$0xff]
        %v1651 = vld [vmem:[%s1603 + $0x178] sm:$0xff]
        %v1652 = vld [vmem:[%s1603 + $0x180] sm:$0xff]
        %v1653 = vld [vmem:[%s1603 + $0x188] sm:$0xff]
        %v1654 = vld [vmem:[%s1603 + $0x190] sm:$0xff]
        %v1655 = vld [vmem:[%s1603 + $0x198] sm:$0xff]
        %v1656 = vld [vmem:[%s1603 + $0x1a0] sm:$0xff]
        %v1657 = vld [vmem:[%s1603 + $0x1a8] sm:$0xff]
        %v1658 = vld [vmem:[%s1603 + $0x1b0] sm:$0xff]
        %v1659 = vld [vmem:[%s1603 + $0x1b8] sm:$0xff]
        %v1660 = vld [vmem:[%s1603 + $0x1c0] sm:$0xff]
        %v1661 = vld [vmem:[%s1603 + $0x1c8] sm:$0xff]
        %v1662 = vld [vmem:[%s1603 + $0x1d0] sm:$0xff]
        %v1663 = vld [vmem:[%s1603 + $0x1d8] sm:$0xff]
        %v1664 = vld [vmem:[%s1603 + $0x1e0] sm:$0xff]
        %v1665 = vld [vmem:[%s1603 + $0x1e8] sm:$0xff]
        %v1666 = vld [vmem:[%s1603 + $0x1f0] sm:$0xff]
        %v1667 = vld [vmem:[%s1603 + $0x1f8] sm:$0xff]
        %v1668 = vld [vmem:[%s1603 + $0x200] sm:$0xff]
        %v1669 = vld [vmem:[%s1603 + $0x208] sm:$0xff]
        %v1670 = vld [vmem:[%s1603 + $0x210] sm:$0xff]
        %v1671 = vld [vmem:[%s1603 + $0x218] sm:$0xff]
        %v1672 = vld [vmem:[%s1603 + $0x220] sm:$0xff]
        %v1673 = vld [vmem:[%s1603 + $0x228] sm:$0xff]
        %v1674 = vld [vmem:[%s1603 + $0x230] sm:$0xff]
        %v1675 = vld [vmem:[%s1603 + $0x238] sm:$0xff]
        %v1676 = vld [vmem:[%s1603 + $0x240] sm:$0xff]
        %v1677 = vld [vmem:[%s1603 + $0x248] sm:$0xff]
        %v1678 = vld [vmem:[%s1603 + $0x250] sm:$0xff]
        %v1679 = vld [vmem:[%s1603 + $0x258] sm:$0xff]
        %v1680 = vld [vmem:[%s1603 + $0x260] sm:$0xff]
        %v1681 = vld [vmem:[%s1603 + $0x268] sm:$0xff]
        %v1682 = vld [vmem:[%s1603 + $0x270] sm:$0xff]
        %v1683 = vld [vmem:[%s1603 + $0x278] sm:$0xff]
        %v1684 = vld [vmem:[%s1603 + $0x280] sm:$0xff]
        %v1685 = vld [vmem:[%s1603 + $0x288] sm:$0xff]
        %v1686 = vld [vmem:[%s1603 + $0x290] sm:$0xff]
        %v1687 = vld [vmem:[%s1603 + $0x298] sm:$0xff]
        %v1688 = vld [vmem:[%s1603 + $0x2a0] sm:$0xff]
        %v1689 = vld [vmem:[%s1603 + $0x2a8] sm:$0xff]
        %v1690 = vld [vmem:[%s1603 + $0x2b0] sm:$0xff]
        %v1691 = vld [vmem:[%s1603 + $0x2b8] sm:$0xff]
        %v1692 = vld [vmem:[%s1603 + $0x2c0] sm:$0xff]
        %v1693 = vld [vmem:[%s1603 + $0x2c8] sm:$0xff]
        %v1694 = vld [vmem:[%s1603 + $0x2d0] sm:$0xff]
        %v1695 = vld [vmem:[%s1603 + $0x2d8] sm:$0xff]
        %v1696 = vld [vmem:[%s1603 + $0x2e0] sm:$0xff]
        %v1697 = vld [vmem:[%s1603 + $0x2e8] sm:$0xff]
        %v1698 = vld [vmem:[%s1603 + $0x2f0] sm:$0xff]
        %v1699 = vld [vmem:[%s1603 + $0x2f8] sm:$0xff]
        %v1700 = vld [vmem:[%s1603 + $0x300] sm:$0xff]
        %v1701 = vld [vmem:[%s1603 + $0x308] sm:$0xff]
        %v1702 = vld [vmem:[%s1603 + $0x310] sm:$0xff]
        %v1703 = vld [vmem:[%s1603 + $0x318] sm:$0xff]
        %v1704 = vld [vmem:[%s1603 + $0x320] sm:$0xff]
        %v1705 = vld [vmem:[%s1603 + $0x328] sm:$0xff]
        %v1706 = vld [vmem:[%s1603 + $0x330] sm:$0xff]
        %v1707 = vld [vmem:[%s1603 + $0x338] sm:$0xff]
        %v1708 = vld [vmem:[%s1603 + $0x340] sm:$0xff]
        %v1709 = vld [vmem:[%s1603 + $0x348] sm:$0xff]
        %v1710 = vld [vmem:[%s1603 + $0x350] sm:$0xff]
        %v1711 = vld [vmem:[%s1603 + $0x358] sm:$0xff]
        %v1712 = vld [vmem:[%s1603 + $0x360] sm:$0xff]
        %v1713 = vld [vmem:[%s1603 + $0x368] sm:$0xff]
        %v1714 = vld [vmem:[%s1603 + $0x370] sm:$0xff]
        %v1715 = vld [vmem:[%s1603 + $0x378] sm:$0xff]
        %v1716 = vld [vmem:[%s1603 + $0x380] sm:$0xff]
        %v1717 = vld [vmem:[%s1603 + $0x388] sm:$0xff]
        %v1718 = vld [vmem:[%s1603 + $0x390] sm:$0xff]
        %v1719 = vld [vmem:[%s1603 + $0x398] sm:$0xff]
        %v1720 = vld [vmem:[%s1603 + $0x3a0] sm:$0xff]
        %v1721 = vld [vmem:[%s1603 + $0x3a8] sm:$0xff]
        %v1722 = vld [vmem:[%s1603 + $0x3b0] sm:$0xff]
        %v1723 = vld [vmem:[%s1603 + $0x3b8] sm:$0xff]
        %v1724 = vld [vmem:[%s1603 + $0x3c0] sm:$0xff]
        %v1725 = vld [vmem:[%s1603 + $0x3c8] sm:$0xff]
        %v1726 = vld [vmem:[%s1603 + $0x3d0] sm:$0xff]
        %v1727 = vld [vmem:[%s1603 + $0x3d8] sm:$0xff]
        %v1728 = vld [vmem:[%s1603 + $0x3e0] sm:$0xff]
        %v1729 = vld [vmem:[%s1603 + $0x3e8] sm:$0xff]
        %v1730 = vld [vmem:[%s1603 + $0x3f0] sm:$0xff]
        %v1731 = vld [vmem:[%s1603 + $0x3f8] sm:$0xff]
        %s1732 = smul.u32 %s1600, 4
        %s1733 = scalar_lea.vmem [#allocation11], %s1732
        %v1734 = vld [vmem:[%s1733] sm:$0xf]
        %v1736 = vlaneseq
        %v1737 = vshrl.u32 %v1736, 7
        %v1738 = vsub.s32 0, %v1737
        %v1739 = vrot.slane %v1734, %v1738
        %v1740 = vlaneseq
        %v1741 = vshrl.u32 %v1740, 7
        %v1742 = vsub.s32 1, %v1741
        %v1743 = vrot.slane %v1734, %v1742
        %v1744 = vlaneseq
        %v1745 = vshrl.u32 %v1744, 7
        %v1746 = vsub.s32 2, %v1745
        %v1747 = vrot.slane %v1734, %v1746
        %v1748 = vlaneseq
        %v1749 = vshrl.u32 %v1748, 7
        %v1750 = vsub.s32 3, %v1749
        %v1751 = vrot.slane %v1734, %v1750
        %v1758 = vunpack.c.l.b16 %v1601
        %v1759 = vunpack.c.h.b16 %v1601
        %v1760 = vunpack.c.l.b16 %v1602
        %v1761 = vunpack.c.h.b16 %v1602
        %v1762 = vpack.c.b16 %v1758, %v1758
        %v1763 = vpack.c.b16 %v1759, %v1759
        %v1764 = vpack.c.b16 %v1760, %v1760
        %v1765 = vpack.c.b16 %v1761, %v1761
        %v1898 = vunpack.c.l.b16 %v1604
        %v1899 = vunpack.c.h.b16 %v1604
        %v1900 = vunpack.c.l.b16 %v1605
        %v1901 = vunpack.c.h.b16 %v1605
        %v1902 = vunpack.c.l.b16 %v1606
        %v1903 = vunpack.c.h.b16 %v1606
        %v1904 = vunpack.c.l.b16 %v1607
        %v1905 = vunpack.c.h.b16 %v1607
        %v1906 = vunpack.c.l.b16 %v1608
        %v1907 = vunpack.c.h.b16 %v1608
        %v1908 = vunpack.c.l.b16 %v1609
        %v1909 = vunpack.c.h.b16 %v1609
        %v1910 = vunpack.c.l.b16 %v1610
        %v1911 = vunpack.c.h.b16 %v1610
        %v1912 = vunpack.c.l.b16 %v1611
        %v1913 = vunpack.c.h.b16 %v1611
        %v1914 = vunpack.c.l.b16 %v1612
        %v1915 = vunpack.c.h.b16 %v1612
        %v1916 = vunpack.c.l.b16 %v1613
        %v1917 = vunpack.c.h.b16 %v1613
        %v1918 = vunpack.c.l.b16 %v1614
        %v1919 = vunpack.c.h.b16 %v1614
        %v1920 = vunpack.c.l.b16 %v1615
        %v1921 = vunpack.c.h.b16 %v1615
        %v1922 = vunpack.c.l.b16 %v1616
        %v1923 = vunpack.c.h.b16 %v1616
        %v1924 = vunpack.c.l.b16 %v1617
        %v1925 = vunpack.c.h.b16 %v1617
        %v1926 = vunpack.c.l.b16 %v1618
        %v1927 = vunpack.c.h.b16 %v1618
        %v1928 = vunpack.c.l.b16 %v1619
        %v1929 = vunpack.c.h.b16 %v1619
        %v1930 = vunpack.c.l.b16 %v1620
        %v1931 = vunpack.c.h.b16 %v1620
        %v1932 = vunpack.c.l.b16 %v1621
        %v1933 = vunpack.c.h.b16 %v1621
        %v1934 = vunpack.c.l.b16 %v1622
        %v1935 = vunpack.c.h.b16 %v1622
        %v1936 = vunpack.c.l.b16 %v1623
        %v1937 = vunpack.c.h.b16 %v1623
        %v1938 = vunpack.c.l.b16 %v1624
        %v1939 = vunpack.c.h.b16 %v1624
        %v1940 = vunpack.c.l.b16 %v1625
        %v1941 = vunpack.c.h.b16 %v1625
        %v1942 = vunpack.c.l.b16 %v1626
        %v1943 = vunpack.c.h.b16 %v1626
        %v1944 = vunpack.c.l.b16 %v1627
        %v1945 = vunpack.c.h.b16 %v1627
        %v1946 = vunpack.c.l.b16 %v1628
        %v1947 = vunpack.c.h.b16 %v1628
        %v1948 = vunpack.c.l.b16 %v1629
        %v1949 = vunpack.c.h.b16 %v1629
        %v1950 = vunpack.c.l.b16 %v1630
        %v1951 = vunpack.c.h.b16 %v1630
        %v1952 = vunpack.c.l.b16 %v1631
        %v1953 = vunpack.c.h.b16 %v1631
        %v1954 = vunpack.c.l.b16 %v1632
        %v1955 = vunpack.c.h.b16 %v1632
        %v1956 = vunpack.c.l.b16 %v1633
        %v1957 = vunpack.c.h.b16 %v1633
        %v1958 = vunpack.c.l.b16 %v1634
        %v1959 = vunpack.c.h.b16 %v1634
        %v1960 = vunpack.c.l.b16 %v1635
        %v1961 = vunpack.c.h.b16 %v1635
        %v1962 = vunpack.c.l.b16 %v1636
        %v1963 = vunpack.c.h.b16 %v1636
        %v1964 = vunpack.c.l.b16 %v1637
        %v1965 = vunpack.c.h.b16 %v1637
        %v1966 = vunpack.c.l.b16 %v1638
        %v1967 = vunpack.c.h.b16 %v1638
        %v1968 = vunpack.c.l.b16 %v1639
        %v1969 = vunpack.c.h.b16 %v1639
        %v1970 = vunpack.c.l.b16 %v1640
        %v1971 = vunpack.c.h.b16 %v1640
        %v1972 = vunpack.c.l.b16 %v1641
        %v1973 = vunpack.c.h.b16 %v1641
        %v1974 = vunpack.c.l.b16 %v1642
        %v1975 = vunpack.c.h.b16 %v1642
        %v1976 = vunpack.c.l.b16 %v1643
        %v1977 = vunpack.c.h.b16 %v1643
        %v1978 = vunpack.c.l.b16 %v1644
        %v1979 = vunpack.c.h.b16 %v1644
        %v1980 = vunpack.c.l.b16 %v1645
        %v1981 = vunpack.c.h.b16 %v1645
        %v1982 = vunpack.c.l.b16 %v1646
        %v1983 = vunpack.c.h.b16 %v1646
        %v1984 = vunpack.c.l.b16 %v1647
        %v1985 = vunpack.c.h.b16 %v1647
        %v1986 = vunpack.c.l.b16 %v1648
        %v1987 = vunpack.c.h.b16 %v1648
        %v1988 = vunpack.c.l.b16 %v1649
        %v1989 = vunpack.c.h.b16 %v1649
        %v1990 = vunpack.c.l.b16 %v1650
        %v1991 = vunpack.c.h.b16 %v1650
        %v1992 = vunpack.c.l.b16 %v1651
        %v1993 = vunpack.c.h.b16 %v1651
        %v1994 = vunpack.c.l.b16 %v1652
        %v1995 = vunpack.c.h.b16 %v1652
        %v1996 = vunpack.c.l.b16 %v1653
        %v1997 = vunpack.c.h.b16 %v1653
        %v1998 = vunpack.c.l.b16 %v1654
        %v1999 = vunpack.c.h.b16 %v1654
        %v2000 = vunpack.c.l.b16 %v1655
        %v2001 = vunpack.c.h.b16 %v1655
        %v2002 = vunpack.c.l.b16 %v1656
        %v2003 = vunpack.c.h.b16 %v1656
        %v2004 = vunpack.c.l.b16 %v1657
        %v2005 = vunpack.c.h.b16 %v1657
        %v2006 = vunpack.c.l.b16 %v1658
        %v2007 = vunpack.c.h.b16 %v1658
        %v2008 = vunpack.c.l.b16 %v1659
        %v2009 = vunpack.c.h.b16 %v1659
        %v2010 = vunpack.c.l.b16 %v1660
        %v2011 = vunpack.c.h.b16 %v1660
        %v2012 = vunpack.c.l.b16 %v1661
        %v2013 = vunpack.c.h.b16 %v1661
        %v2014 = vunpack.c.l.b16 %v1662
        %v2015 = vunpack.c.h.b16 %v1662
        %v2016 = vunpack.c.l.b16 %v1663
        %v2017 = vunpack.c.h.b16 %v1663
        %v2018 = vunpack.c.l.b16 %v1664
        %v2019 = vunpack.c.h.b16 %v1664
        %v2020 = vunpack.c.l.b16 %v1665
        %v2021 = vunpack.c.h.b16 %v1665
        %v2022 = vunpack.c.l.b16 %v1666
        %v2023 = vunpack.c.h.b16 %v1666
        %v2024 = vunpack.c.l.b16 %v1667
        %v2025 = vunpack.c.h.b16 %v1667
        %v2026 = vunpack.c.l.b16 %v1668
        %v2027 = vunpack.c.h.b16 %v1668
        %v2028 = vunpack.c.l.b16 %v1669
        %v2029 = vunpack.c.h.b16 %v1669
        %v2030 = vunpack.c.l.b16 %v1670
        %v2031 = vunpack.c.h.b16 %v1670
        %v2032 = vunpack.c.l.b16 %v1671
        %v2033 = vunpack.c.h.b16 %v1671
        %v2034 = vunpack.c.l.b16 %v1672
        %v2035 = vunpack.c.h.b16 %v1672
        %v2036 = vunpack.c.l.b16 %v1673
        %v2037 = vunpack.c.h.b16 %v1673
        %v2038 = vunpack.c.l.b16 %v1674
        %v2039 = vunpack.c.h.b16 %v1674
        %v2040 = vunpack.c.l.b16 %v1675
        %v2041 = vunpack.c.h.b16 %v1675
        %v2042 = vunpack.c.l.b16 %v1676
        %v2043 = vunpack.c.h.b16 %v1676
        %v2044 = vunpack.c.l.b16 %v1677
        %v2045 = vunpack.c.h.b16 %v1677
        %v2046 = vunpack.c.l.b16 %v1678
        %v2047 = vunpack.c.h.b16 %v1678
        %v2048 = vunpack.c.l.b16 %v1679
        %v2049 = vunpack.c.h.b16 %v1679
        %v2050 = vunpack.c.l.b16 %v1680
        %v2051 = vunpack.c.h.b16 %v1680
        %v2052 = vunpack.c.l.b16 %v1681
        %v2053 = vunpack.c.h.b16 %v1681
        %v2054 = vunpack.c.l.b16 %v1682
        %v2055 = vunpack.c.h.b16 %v1682
        %v2056 = vunpack.c.l.b16 %v1683
        %v2057 = vunpack.c.h.b16 %v1683
        %v2058 = vunpack.c.l.b16 %v1684
        %v2059 = vunpack.c.h.b16 %v1684
        %v2060 = vunpack.c.l.b16 %v1685
        %v2061 = vunpack.c.h.b16 %v1685
        %v2062 = vunpack.c.l.b16 %v1686
        %v2063 = vunpack.c.h.b16 %v1686
        %v2064 = vunpack.c.l.b16 %v1687
        %v2065 = vunpack.c.h.b16 %v1687
        %v2066 = vunpack.c.l.b16 %v1688
        %v2067 = vunpack.c.h.b16 %v1688
        %v2068 = vunpack.c.l.b16 %v1689
        %v2069 = vunpack.c.h.b16 %v1689
        %v2070 = vunpack.c.l.b16 %v1690
        %v2071 = vunpack.c.h.b16 %v1690
        %v2072 = vunpack.c.l.b16 %v1691
        %v2073 = vunpack.c.h.b16 %v1691
        %v2074 = vunpack.c.l.b16 %v1692
        %v2075 = vunpack.c.h.b16 %v1692
        %v2076 = vunpack.c.l.b16 %v1693
        %v2077 = vunpack.c.h.b16 %v1693
        %v2078 = vunpack.c.l.b16 %v1694
        %v2079 = vunpack.c.h.b16 %v1694
        %v2080 = vunpack.c.l.b16 %v1695
        %v2081 = vunpack.c.h.b16 %v1695
        %v2082 = vunpack.c.l.b16 %v1696
        %v2083 = vunpack.c.h.b16 %v1696
        %v2084 = vunpack.c.l.b16 %v1697
        %v2085 = vunpack.c.h.b16 %v1697
        %v2086 = vunpack.c.l.b16 %v1698
        %v2087 = vunpack.c.h.b16 %v1698
        %v2088 = vunpack.c.l.b16 %v1699
        %v2089 = vunpack.c.h.b16 %v1699
        %v2090 = vunpack.c.l.b16 %v1700
        %v2091 = vunpack.c.h.b16 %v1700
        %v2092 = vunpack.c.l.b16 %v1701
        %v2093 = vunpack.c.h.b16 %v1701
        %v2094 = vunpack.c.l.b16 %v1702
        %v2095 = vunpack.c.h.b16 %v1702
        %v2096 = vunpack.c.l.b16 %v1703
        %v2097 = vunpack.c.h.b16 %v1703
        %v2098 = vunpack.c.l.b16 %v1704
        %v2099 = vunpack.c.h.b16 %v1704
        %v2100 = vunpack.c.l.b16 %v1705
        %v2101 = vunpack.c.h.b16 %v1705
        %v2102 = vunpack.c.l.b16 %v1706
        %v2103 = vunpack.c.h.b16 %v1706
        %v2104 = vunpack.c.l.b16 %v1707
        %v2105 = vunpack.c.h.b16 %v1707
        %v2106 = vunpack.c.l.b16 %v1708
        %v2107 = vunpack.c.h.b16 %v1708
        %v2108 = vunpack.c.l.b16 %v1709
        %v2109 = vunpack.c.h.b16 %v1709
        %v2110 = vunpack.c.l.b16 %v1710
        %v2111 = vunpack.c.h.b16 %v1710
        %v2112 = vunpack.c.l.b16 %v1711
        %v2113 = vunpack.c.h.b16 %v1711
        %v2114 = vunpack.c.l.b16 %v1712
        %v2115 = vunpack.c.h.b16 %v1712
        %v2116 = vunpack.c.l.b16 %v1713
        %v2117 = vunpack.c.h.b16 %v1713
        %v2118 = vunpack.c.l.b16 %v1714
        %v2119 = vunpack.c.h.b16 %v1714
        %v2120 = vunpack.c.l.b16 %v1715
        %v2121 = vunpack.c.h.b16 %v1715
        %v2122 = vunpack.c.l.b16 %v1716
        %v2123 = vunpack.c.h.b16 %v1716
        %v2124 = vunpack.c.l.b16 %v1717
        %v2125 = vunpack.c.h.b16 %v1717
        %v2126 = vunpack.c.l.b16 %v1718
        %v2127 = vunpack.c.h.b16 %v1718
        %v2128 = vunpack.c.l.b16 %v1719
        %v2129 = vunpack.c.h.b16 %v1719
        %v2130 = vunpack.c.l.b16 %v1720
        %v2131 = vunpack.c.h.b16 %v1720
        %v2132 = vunpack.c.l.b16 %v1721
        %v2133 = vunpack.c.h.b16 %v1721
        %v2134 = vunpack.c.l.b16 %v1722
        %v2135 = vunpack.c.h.b16 %v1722
        %v2136 = vunpack.c.l.b16 %v1723
        %v2137 = vunpack.c.h.b16 %v1723
        %v2138 = vunpack.c.l.b16 %v1724
        %v2139 = vunpack.c.h.b16 %v1724
        %v2140 = vunpack.c.l.b16 %v1725
        %v2141 = vunpack.c.h.b16 %v1725
        %v2142 = vunpack.c.l.b16 %v1726
        %v2143 = vunpack.c.h.b16 %v1726
        %v2144 = vunpack.c.l.b16 %v1727
        %v2145 = vunpack.c.h.b16 %v1727
        %v2146 = vunpack.c.l.b16 %v1728
        %v2147 = vunpack.c.h.b16 %v1728
        %v2148 = vunpack.c.l.b16 %v1729
        %v2149 = vunpack.c.h.b16 %v1729
        %v2150 = vunpack.c.l.b16 %v1730
        %v2151 = vunpack.c.h.b16 %v1730
        %v2152 = vunpack.c.l.b16 %v1731
        %v2153 = vunpack.c.h.b16 %v1731
        %v2154 = vpack.c.b16 %v1902, %v1898
        %v2155 = vpack.c.b16 %v1903, %v1899
        %v2156 = vpack.c.b16 %v1904, %v1900
        %v2157 = vpack.c.b16 %v1905, %v1901
        %v2158 = vpack.c.b16 %v1910, %v1906
        %v2159 = vpack.c.b16 %v1911, %v1907
        %v2160 = vpack.c.b16 %v1912, %v1908
        %v2161 = vpack.c.b16 %v1913, %v1909
        %v2162 = vpack.c.b16 %v1918, %v1914
        %v2163 = vpack.c.b16 %v1919, %v1915
        %v2164 = vpack.c.b16 %v1920, %v1916
        %v2165 = vpack.c.b16 %v1921, %v1917
        %v2166 = vpack.c.b16 %v1926, %v1922
        %v2167 = vpack.c.b16 %v1927, %v1923
        %v2168 = vpack.c.b16 %v1928, %v1924
        %v2169 = vpack.c.b16 %v1929, %v1925
        %v2170 = vpack.c.b16 %v1934, %v1930
        %v2171 = vpack.c.b16 %v1935, %v1931
        %v2172 = vpack.c.b16 %v1936, %v1932
        %v2173 = vpack.c.b16 %v1937, %v1933
        %v2174 = vpack.c.b16 %v1942, %v1938
        %v2175 = vpack.c.b16 %v1943, %v1939
        %v2176 = vpack.c.b16 %v1944, %v1940
        %v2177 = vpack.c.b16 %v1945, %v1941
        %v2178 = vpack.c.b16 %v1950, %v1946
        %v2179 = vpack.c.b16 %v1951, %v1947
        %v2180 = vpack.c.b16 %v1952, %v1948
        %v2181 = vpack.c.b16 %v1953, %v1949
        %v2182 = vpack.c.b16 %v1958, %v1954
        %v2183 = vpack.c.b16 %v1959, %v1955
        %v2184 = vpack.c.b16 %v1960, %v1956
        %v2185 = vpack.c.b16 %v1961, %v1957
        %v2186 = vpack.c.b16 %v1966, %v1962
        %v2187 = vpack.c.b16 %v1967, %v1963
        %v2188 = vpack.c.b16 %v1968, %v1964
        %v2189 = vpack.c.b16 %v1969, %v1965
        %v2190 = vpack.c.b16 %v1974, %v1970
        %v2191 = vpack.c.b16 %v1975, %v1971
        %v2192 = vpack.c.b16 %v1976, %v1972
        %v2193 = vpack.c.b16 %v1977, %v1973
        %v2194 = vpack.c.b16 %v1982, %v1978
        %v2195 = vpack.c.b16 %v1983, %v1979
        %v2196 = vpack.c.b16 %v1984, %v1980
        %v2197 = vpack.c.b16 %v1985, %v1981
        %v2198 = vpack.c.b16 %v1990, %v1986
        %v2199 = vpack.c.b16 %v1991, %v1987
        %v2200 = vpack.c.b16 %v1992, %v1988
        %v2201 = vpack.c.b16 %v1993, %v1989
        %v2202 = vpack.c.b16 %v1998, %v1994
        %v2203 = vpack.c.b16 %v1999, %v1995
        %v2204 = vpack.c.b16 %v2000, %v1996
        %v2205 = vpack.c.b16 %v2001, %v1997
        %v2206 = vpack.c.b16 %v2006, %v2002
        %v2207 = vpack.c.b16 %v2007, %v2003
        %v2208 = vpack.c.b16 %v2008, %v2004
        %v2209 = vpack.c.b16 %v2009, %v2005
        %v2210 = vpack.c.b16 %v2014, %v2010
        %v2211 = vpack.c.b16 %v2015, %v2011
        %v2212 = vpack.c.b16 %v2016, %v2012
        %v2213 = vpack.c.b16 %v2017, %v2013
        %v2214 = vpack.c.b16 %v2022, %v2018
        %v2215 = vpack.c.b16 %v2023, %v2019
        %v2216 = vpack.c.b16 %v2024, %v2020
        %v2217 = vpack.c.b16 %v2025, %v2021
        %v2218 = vpack.c.b16 %v2030, %v2026
        %v2219 = vpack.c.b16 %v2031, %v2027
        %v2220 = vpack.c.b16 %v2032, %v2028
        %v2221 = vpack.c.b16 %v2033, %v2029
        %v2222 = vpack.c.b16 %v2038, %v2034
        %v2223 = vpack.c.b16 %v2039, %v2035
        %v2224 = vpack.c.b16 %v2040, %v2036
        %v2225 = vpack.c.b16 %v2041, %v2037
        %v2226 = vpack.c.b16 %v2046, %v2042
        %v2227 = vpack.c.b16 %v2047, %v2043
        %v2228 = vpack.c.b16 %v2048, %v2044
        %v2229 = vpack.c.b16 %v2049, %v2045
        %v2230 = vpack.c.b16 %v2054, %v2050
        %v2231 = vpack.c.b16 %v2055, %v2051
        %v2232 = vpack.c.b16 %v2056, %v2052
        %v2233 = vpack.c.b16 %v2057, %v2053
        %v2234 = vpack.c.b16 %v2062, %v2058
        %v2235 = vpack.c.b16 %v2063, %v2059
        %v2236 = vpack.c.b16 %v2064, %v2060
        %v2237 = vpack.c.b16 %v2065, %v2061
        %v2238 = vpack.c.b16 %v2070, %v2066
        %v2239 = vpack.c.b16 %v2071, %v2067
        %v2240 = vpack.c.b16 %v2072, %v2068
        %v2241 = vpack.c.b16 %v2073, %v2069
        %v2242 = vpack.c.b16 %v2078, %v2074
        %v2243 = vpack.c.b16 %v2079, %v2075
        %v2244 = vpack.c.b16 %v2080, %v2076
        %v2245 = vpack.c.b16 %v2081, %v2077
        %v2246 = vpack.c.b16 %v2086, %v2082
        %v2247 = vpack.c.b16 %v2087, %v2083
        %v2248 = vpack.c.b16 %v2088, %v2084
        %v2249 = vpack.c.b16 %v2089, %v2085
        %v2250 = vpack.c.b16 %v2094, %v2090
        %v2251 = vpack.c.b16 %v2095, %v2091
        %v2252 = vpack.c.b16 %v2096, %v2092
        %v2253 = vpack.c.b16 %v2097, %v2093
        %v2254 = vpack.c.b16 %v2102, %v2098
        %v2255 = vpack.c.b16 %v2103, %v2099
        %v2256 = vpack.c.b16 %v2104, %v2100
        %v2257 = vpack.c.b16 %v2105, %v2101
        %v2258 = vpack.c.b16 %v2110, %v2106
        %v2259 = vpack.c.b16 %v2111, %v2107
        %v2260 = vpack.c.b16 %v2112, %v2108
        %v2261 = vpack.c.b16 %v2113, %v2109
        %v2262 = vpack.c.b16 %v2118, %v2114
        %v2263 = vpack.c.b16 %v2119, %v2115
        %v2264 = vpack.c.b16 %v2120, %v2116
        %v2265 = vpack.c.b16 %v2121, %v2117
        %v2266 = vpack.c.b16 %v2126, %v2122
        %v2267 = vpack.c.b16 %v2127, %v2123
        %v2268 = vpack.c.b16 %v2128, %v2124
        %v2269 = vpack.c.b16 %v2129, %v2125
        %v2270 = vpack.c.b16 %v2134, %v2130
        %v2271 = vpack.c.b16 %v2135, %v2131
        %v2272 = vpack.c.b16 %v2136, %v2132
        %v2273 = vpack.c.b16 %v2137, %v2133
        %v2274 = vpack.c.b16 %v2142, %v2138
        %v2275 = vpack.c.b16 %v2143, %v2139
        %v2276 = vpack.c.b16 %v2144, %v2140
        %v2277 = vpack.c.b16 %v2145, %v2141
        %v2278 = vpack.c.b16 %v2150, %v2146
        %v2279 = vpack.c.b16 %v2151, %v2147
        %v2280 = vpack.c.b16 %v2152, %v2148
        %v2281 = vpack.c.b16 %v2153, %v2149
        %2410 = vmatprep.subr.bf16.mxu0 %v2155
        %2411 = vmatpush1.bf16.msra.mxu0 %v2154
        %2412 = vmatprep.subr.bf16.mxu0 %v2159
        %2413 = vmatpush1.bf16.msra.mxu0 %v2158
        %2414 = vmatprep.subr.bf16.mxu0 %v2163
        %2415 = vmatpush1.bf16.msra.mxu0 %v2162
        %2416 = vmatprep.subr.bf16.mxu0 %v2167
        %2417 = vmatpush1.bf16.msra.mxu0 %v2166
        %2418 = vmatprep.subr.bf16.mxu0 %v2171
        %2419 = vmatpush1.bf16.msra.mxu0 %v2170
        %2420 = vmatprep.subr.bf16.mxu0 %v2175
        %2421 = vmatpush1.bf16.msra.mxu0 %v2174
        %2422 = vmatprep.subr.bf16.mxu0 %v2179
        %2423 = vmatpush1.bf16.msra.mxu0 %v2178
        %2424 = vmatprep.subr.bf16.mxu0 %v2183
        %2425 = vmatpush1.bf16.msra.mxu0 %v2182
        %2426 = vmatprep.subr.bf16.mxu0 %v2187
        %2427 = vmatpush1.bf16.msra.mxu0 %v2186
        %2428 = vmatprep.subr.bf16.mxu0 %v2191
        %2429 = vmatpush1.bf16.msra.mxu0 %v2190
        %2430 = vmatprep.subr.bf16.mxu0 %v2195
        %2431 = vmatpush1.bf16.msra.mxu0 %v2194
        %2432 = vmatprep.subr.bf16.mxu0 %v2199
        %2433 = vmatpush1.bf16.msra.mxu0 %v2198
        %2434 = vmatprep.subr.bf16.mxu0 %v2203
        %2435 = vmatpush1.bf16.msra.mxu0 %v2202
        %2436 = vmatprep.subr.bf16.mxu0 %v2207
        %2437 = vmatpush1.bf16.msra.mxu0 %v2206
        %2438 = vmatprep.subr.bf16.mxu0 %v2211
        %2439 = vmatpush1.bf16.msra.mxu0 %v2210
        %2440 = vmatprep.subr.bf16.mxu0 %v2215
        %2441 = vmatpush1.bf16.msra.mxu0 %v2214
        %2442 = vmatprep.mubr.bf16.mxu0 %v1763
        %2443 = vmatmul.mubr.bf16.gmra.mrb[0].mxu0 %v1762
        %v2444 = vpop.f32.mrb[0].mxu0
        %v2445 = vadd.f32 %v1739, %v2444
        %v2446 = vpop.f32.mrb[0].mxu0
        %v2447 = vadd.f32 %v1743, %v2446
        %v2448 = vpop.f32.mrb[0].mxu0
        %v2449 = vpop.f32.mrb[0].mxu0
        %2450 = vdwg.mxu0
        %2451 = vmatprep.subr.bf16.mxu0 %v2219
        %2452 = vmatpush1.bf16.msra.mxu0 %v2218
        %2453 = vmatprep.subr.bf16.mxu0 %v2223
        %2454 = vmatpush1.bf16.msra.mxu0 %v2222
        %2455 = vmatprep.subr.bf16.mxu0 %v2227
        %2456 = vmatpush1.bf16.msra.mxu0 %v2226
        %2457 = vmatprep.subr.bf16.mxu0 %v2231
        %2458 = vmatpush1.bf16.msra.mxu0 %v2230
        %2459 = vmatprep.subr.bf16.mxu0 %v2235
        %2460 = vmatpush1.bf16.msra.mxu0 %v2234
        %2461 = vmatprep.subr.bf16.mxu0 %v2239
        %2462 = vmatpush1.bf16.msra.mxu0 %v2238
        %2463 = vmatprep.subr.bf16.mxu0 %v2243
        %2464 = vmatpush1.bf16.msra.mxu0 %v2242
        %2465 = vmatprep.subr.bf16.mxu0 %v2247
        %2466 = vmatpush1.bf16.msra.mxu0 %v2246
        %2467 = vmatprep.subr.bf16.mxu0 %v2251
        %2468 = vmatpush1.bf16.msra.mxu0 %v2250
        %2469 = vmatprep.subr.bf16.mxu0 %v2255
        %2470 = vmatpush1.bf16.msra.mxu0 %v2254
        %2471 = vmatprep.subr.bf16.mxu0 %v2259
        %2472 = vmatpush1.bf16.msra.mxu0 %v2258
        %2473 = vmatprep.subr.bf16.mxu0 %v2263
        %2474 = vmatpush1.bf16.msra.mxu0 %v2262
        %2475 = vmatprep.subr.bf16.mxu0 %v2267
        %2476 = vmatpush1.bf16.msra.mxu0 %v2266
        %2477 = vmatprep.subr.bf16.mxu0 %v2271
        %2478 = vmatpush1.bf16.msra.mxu0 %v2270
        %2479 = vmatprep.subr.bf16.mxu0 %v2275
        %2480 = vmatpush1.bf16.msra.mxu0 %v2274
        %2481 = vmatprep.subr.bf16.mxu0 %v2279
        %2482 = vmatpush1.bf16.msra.mxu0 %v2278
        %2483 = vmatprep.mubr.bf16.mxu0 %v1765
        %2484 = vmatmul.mubr.bf16.gmra.mrb[0].mxu0 %v1764
        %v2485 = vpop.f32.mrb[0].mxu0
        %v2486 = vadd.f32 %v2445, %v2485
        %v2487 = vpop.f32.mrb[0].mxu0
        %v2488 = vadd.f32 %v2447, %v2487
        %v2489 = vpop.f32.mrb[0].mxu0
        %v2490 = vpop.f32.mrb[0].mxu0
        %2491 = vdwg.mxu0
        %2492 = vmatprep.subr.bf16.mxu0 %v2157
        %2493 = vmatpush1.bf16.msra.mxu0 %v2156
        %2494 = vmatprep.subr.bf16.mxu0 %v2161
        %2495 = vmatpush1.bf16.msra.mxu0 %v2160
        %2496 = vmatprep.subr.bf16.mxu0 %v2165
        %2497 = vmatpush1.bf16.msra.mxu0 %v2164
        %2498 = vmatprep.subr.bf16.mxu0 %v2169
        %2499 = vmatpush1.bf16.msra.mxu0 %v2168
        %2500 = vmatprep.subr.bf16.mxu0 %v2173
        %2501 = vmatpush1.bf16.msra.mxu0 %v2172
        %2502 = vmatprep.subr.bf16.mxu0 %v2177
        %2503 = vmatpush1.bf16.msra.mxu0 %v2176
        %2504 = vmatprep.subr.bf16.mxu0 %v2181
        %2505 = vmatpush1.bf16.msra.mxu0 %v2180
        %2506 = vmatprep.subr.bf16.mxu0 %v2185
        %2507 = vmatpush1.bf16.msra.mxu0 %v2184
        %2508 = vmatprep.subr.bf16.mxu0 %v2189
        %2509 = vmatpush1.bf16.msra.mxu0 %v2188
        %2510 = vmatprep.subr.bf16.mxu0 %v2193
        %2511 = vmatpush1.bf16.msra.mxu0 %v2192
        %2512 = vmatprep.subr.bf16.mxu0 %v2197
        %2513 = vmatpush1.bf16.msra.mxu0 %v2196
        %2514 = vmatprep.subr.bf16.mxu0 %v2201
        %2515 = vmatpush1.bf16.msra.mxu0 %v2200
        %2516 = vmatprep.subr.bf16.mxu0 %v2205
        %2517 = vmatpush1.bf16.msra.mxu0 %v2204
        %2518 = vmatprep.subr.bf16.mxu0 %v2209
        %2519 = vmatpush1.bf16.msra.mxu0 %v2208
        %2520 = vmatprep.subr.bf16.mxu0 %v2213
        %2521 = vmatpush1.bf16.msra.mxu0 %v2212
        %2522 = vmatprep.subr.bf16.mxu0 %v2217
        %2523 = vmatpush1.bf16.msra.mxu0 %v2216
        %2524 = vmatprep.mubr.bf16.mxu0 %v1763
        %2525 = vmatmul.mubr.bf16.gmra.mrb[0].mxu0 %v1762
        %v2526 = vpop.f32.mrb[0].mxu0
        %v2527 = vadd.f32 %v1747, %v2526
        %v2528 = vpop.f32.mrb[0].mxu0
        %v2529 = vadd.f32 %v1751, %v2528
        %v2530 = vpop.f32.mrb[0].mxu0
        %v2531 = vpop.f32.mrb[0].mxu0
        %2532 = vdwg.mxu0
        %2533 = vmatprep.subr.bf16.mxu0 %v2221
        %2534 = vmatpush1.bf16.msra.mxu0 %v2220
        %2535 = vmatprep.subr.bf16.mxu0 %v2225
        %2536 = vmatpush1.bf16.msra.mxu0 %v2224
        %2537 = vmatprep.subr.bf16.mxu0 %v2229
        %2538 = vmatpush1.bf16.msra.mxu0 %v2228
        %2539 = vmatprep.subr.bf16.mxu0 %v2233
        %2540 = vmatpush1.bf16.msra.mxu0 %v2232
        %2541 = vmatprep.subr.bf16.mxu0 %v2237
        %2542 = vmatpush1.bf16.msra.mxu0 %v2236
        %2543 = vmatprep.subr.bf16.mxu0 %v2241
        %2544 = vmatpush1.bf16.msra.mxu0 %v2240
        %2545 = vmatprep.subr.bf16.mxu0 %v2245
        %2546 = vmatpush1.bf16.msra.mxu0 %v2244
        %2547 = vmatprep.subr.bf16.mxu0 %v2249
        %2548 = vmatpush1.bf16.msra.mxu0 %v2248
        %2549 = vmatprep.subr.bf16.mxu0 %v2253
        %2550 = vmatpush1.bf16.msra.mxu0 %v2252
        %2551 = vmatprep.subr.bf16.mxu0 %v2257
        %2552 = vmatpush1.bf16.msra.mxu0 %v2256
        %2553 = vmatprep.subr.bf16.mxu0 %v2261
        %2554 = vmatpush1.bf16.msra.mxu0 %v2260
        %2555 = vmatprep.subr.bf16.mxu0 %v2265
        %2556 = vmatpush1.bf16.msra.mxu0 %v2264
        %2557 = vmatprep.subr.bf16.mxu0 %v2269
        %2558 = vmatpush1.bf16.msra.mxu0 %v2268
        %2559 = vmatprep.subr.bf16.mxu0 %v2273
        %2560 = vmatpush1.bf16.msra.mxu0 %v2272
        %2561 = vmatprep.subr.bf16.mxu0 %v2277
        %2562 = vmatpush1.bf16.msra.mxu0 %v2276
        %2563 = vmatprep.subr.bf16.mxu0 %v2281
        %2564 = vmatpush1.bf16.msra.mxu0 %v2280
        %2565 = vmatprep.mubr.bf16.mxu0 %v1765
        %2566 = vmatmul.mubr.bf16.gmra.mrb[0].mxu0 %v1764
        %v2567 = vpop.f32.mrb[0].mxu0
        %v2568 = vadd.f32 %v2527, %v2567
        %v2569 = vpop.f32.mrb[0].mxu0
        %v2570 = vadd.f32 %v2529, %v2569
        %v2571 = vpop.f32.mrb[0].mxu0
        %v2572 = vpop.f32.mrb[0].mxu0
        %2573 = vdwg.mxu0
        %p2574 = scmp.lt.s32.totalorder %s1600, 5
        // Predicated region
        $region89: #{gcn_forward.1} parent=47 // pred_check
          %p2575 = pneg %p2574
        $region90: #{gcn_forward.1} parent=47 // pred_check_branch
          %2577 = sbr.rel (%p2575) target = $region92
        $region91: #{gcn_forward.1} parent=47 // pred_region
          %v2578 = vld [vmem:[#allocation3] sm:$0xf]
          %v2579 = vpack.c.bf16 %v2486, %v2486
          %v2580 = vpack.c.bf16 %v2488, %v2488
          %v2581 = vpack.c.bf16 %v2568, %v2568
          %v2582 = vpack.c.bf16 %v2570, %v2570
          %vm2583 = vcmask 64512
          %v2585 = vsel %vm2583, %v2578, 0
          %vm2587 = vcmask 1043456
          %v2589 = vsel %vm2587, %v2579, 0
          %v2592 = vsel %vm2587, %v2580, 0
          %v2595 = vsel %vm2587, %v2581, 0
          %v2598 = vsel %vm2587, %v2582, 0
          %2600 = vmatprep.subr.bf16.mxu0 %v2592
          %2601 = vmatpush1.bf16.msra.mxu0 %v2589
          %2602 = vmatprep.subr.bf16.mxu0 0
          %2603 = vmatpush1.bf16.msra.mxu0 0
          %2604 = vmatprep.subr.bf16.mxu0 0
          %2605 = vmatpush1.bf16.msra.mxu0 0
          %2606 = vmatprep.subr.bf16.mxu0 0
          %2607 = vmatpush1.bf16.msra.mxu0 0
          %2608 = vmatprep.subr.bf16.mxu0 0
          %2609 = vmatpush1.bf16.msra.mxu0 0
          %2610 = vmatprep.subr.bf16.mxu0 0
          %2611 = vmatpush1.bf16.msra.mxu0 0
          %2612 = vmatprep.subr.bf16.mxu0 0
          %2613 = vmatpush1.bf16.msra.mxu0 0
          %2614 = vmatprep.subr.bf16.mxu0 0
          %2615 = vmatpush1.bf16.msra.mxu0 0
          %2616 = vmatprep.subr.bf16.mxu0 0
          %2617 = vmatpush1.bf16.msra.mxu0 0
          %2618 = vmatprep.subr.bf16.mxu0 0
          %2619 = vmatpush1.bf16.msra.mxu0 0
          %2620 = vmatprep.subr.bf16.mxu0 0
          %2621 = vmatpush1.bf16.msra.mxu0 0
          %2622 = vmatprep.subr.bf16.mxu0 0
          %2623 = vmatpush1.bf16.msra.mxu0 0
          %2624 = vmatprep.subr.bf16.mxu0 0
          %2625 = vmatpush1.bf16.msra.mxu0 0
          %2626 = vmatprep.subr.bf16.mxu0 0
          %2627 = vmatpush1.bf16.msra.mxu0 0
          %2628 = vmatprep.subr.bf16.mxu0 0
          %2629 = vmatpush1.bf16.msra.mxu0 0
          %2630 = vmatprep.subr.bf16.mxu0 0
          %2631 = vmatpush1.bf16.msra.mxu0 0
          %2632 = vmatprep.mubr.bf16.mxu0 0
          %2633 = vmatmul.mubr.bf16.gmra.mrb[0].mxu0 %v2585
          %v2634 = vpop.f32.mrb[0].mxu0
          %v2635 = vadd.f32 0.0, %v2634
          %v2636 = vpop.f32.mrb[0].mxu0
          %v2637 = vadd.f32 0.0, %v2636
          %v2638 = vpop.f32.mrb[0].mxu0
          %v2639 = vpop.f32.mrb[0].mxu0
          %2640 = vdwg.mxu0
          %2641 = vmatprep.subr.bf16.mxu0 %v2598
          %2642 = vmatpush1.bf16.msra.mxu0 %v2595
          %2643 = vmatprep.subr.bf16.mxu0 0
          %2644 = vmatpush1.bf16.msra.mxu0 0
          %2645 = vmatprep.subr.bf16.mxu0 0
          %2646 = vmatpush1.bf16.msra.mxu0 0
          %2647 = vmatprep.subr.bf16.mxu0 0
          %2648 = vmatpush1.bf16.msra.mxu0 0
          %2649 = vmatprep.subr.bf16.mxu0 0
          %2650 = vmatpush1.bf16.msra.mxu0 0
          %2651 = vmatprep.subr.bf16.mxu0 0
          %2652 = vmatpush1.bf16.msra.mxu0 0
          %2653 = vmatprep.subr.bf16.mxu0 0
          %2654 = vmatpush1.bf16.msra.mxu0 0
          %2655 = vmatprep.subr.bf16.mxu0 0
          %2656 = vmatpush1.bf16.msra.mxu0 0
          %2657 = vmatprep.subr.bf16.mxu0 0
          %2658 = vmatpush1.bf16.msra.mxu0 0
          %2659 = vmatprep.subr.bf16.mxu0 0
          %2660 = vmatpush1.bf16.msra.mxu0 0
          %2661 = vmatprep.subr.bf16.mxu0 0
          %2662 = vmatpush1.bf16.msra.mxu0 0
          %2663 = vmatprep.subr.bf16.mxu0 0
          %2664 = vmatpush1.bf16.msra.mxu0 0
          %2665 = vmatprep.subr.bf16.mxu0 0
          %2666 = vmatpush1.bf16.msra.mxu0 0
          %2667 = vmatprep.subr.bf16.mxu0 0
          %2668 = vmatpush1.bf16.msra.mxu0 0
          %2669 = vmatprep.subr.bf16.mxu0 0
          %2670 = vmatpush1.bf16.msra.mxu0 0
          %2671 = vmatprep.subr.bf16.mxu0 0
          %2672 = vmatpush1.bf16.msra.mxu0 0
          %2673 = vmatprep.mubr.bf16.mxu0 0
          %2674 = vmatmul.mubr.bf16.gmra.mrb[0].mxu0 %v2585
          %v2675 = vpop.f32.mrb[0].mxu0
          %v2676 = vadd.f32 0.0, %v2675
          %v2677 = vpop.f32.mrb[0].mxu0
          %v2678 = vadd.f32 0.0, %v2677
          %v2679 = vpop.f32.mrb[0].mxu0
          %v2680 = vpop.f32.mrb[0].mxu0
          %2681 = vdwg.mxu0
          %v2682 = vmax.f32 %v2635, 0.0
          %v2683 = vmax.f32 %v2637, 0.0
          %v2684 = vmax.f32 %v2676, 0.0
          %v2685 = vmax.f32 %v2678, 0.0
          %v2686 = vpack.c.bf16 %v2682, %v2682
          %v2687 = vpack.c.bf16 %v2683, %v2683
          %v2688 = vpack.c.bf16 %v2684, %v2684
          %v2689 = vpack.c.bf16 %v2685, %v2685
          %v2694 = vunpack.c.l.b16 %v2686
          %v2695 = vunpack.c.l.b16 %v2687
          %v2696 = vunpack.c.l.b16 %v2688
          %v2697 = vunpack.c.l.b16 %v2689
          %v2698 = vpack.c.b16 %v2695, %v2694
          %v2699 = vpack.c.b16 %v2697, %v2696
          %2702 = vst [vmem:[#allocation2] sm:$0xff] %v2698
          %2703 = vst [vmem:[#allocation2 + $0x8] sm:$0xff] %v2699
        $region92: #{gcn_forward.1} parent=47 // pred_fallthru
          _
        %p2704 = scmp.ge.s32.totalorder %s1600, 5
        // Predicated region
        $region93: #{gcn_forward.1} parent=47 // pred_check
          %p2705 = pneg %p2704
        $region94: #{gcn_forward.1} parent=47 // pred_check_branch
          %2707 = sbr.rel (%p2705) target = $region96
        $region95: #{gcn_forward.1} parent=47 // pred_region
          %v2708 = vmax.f32 %v2486, 0.0
          %v2709 = vmax.f32 %v2488, 0.0
          %v2710 = vmax.f32 %v2568, 0.0
          %v2711 = vmax.f32 %v2570, 0.0
          %v2712 = vpack.c.bf16 %v2708, %v2708
          %v2713 = vpack.c.bf16 %v2709, %v2709
          %v2714 = vpack.c.bf16 %v2710, %v2710
          %v2715 = vpack.c.bf16 %v2711, %v2711
          %v2720 = vunpack.c.l.b16 %v2712
          %v2721 = vunpack.c.l.b16 %v2713
          %v2722 = vunpack.c.l.b16 %v2714
          %v2723 = vunpack.c.l.b16 %v2715
          %v2724 = vpack.c.b16 %v2721, %v2720
          %v2725 = vpack.c.b16 %v2723, %v2722
          %2728 = vst [vmem:[#allocation2] sm:$0xff] %v2724
          %2729 = vst [vmem:[#allocation2 + $0x8] sm:$0xff] %v2725
        $region96: #{gcn_forward.1} parent=47 // pred_fallthru
          _
        %s2730 = sadd.s32 %s471, 2
        %v2731 = vld [vmem:[#allocation2] sm:$0xff]
        %v2732 = vld [vmem:[#allocation2 + $0x8] sm:$0xff]
        %s2733 = scalar_lea.vmem %s326, 2048 [#allocation9]
        %v2734 = vld [vmem:[%s2733] sm:$0xff]
        %v2735 = vld [vmem:[%s2733 + $0x8] sm:$0xff]
        %v2736 = vld [vmem:[%s2733 + $0x10] sm:$0xff]
        %v2737 = vld [vmem:[%s2733 + $0x18] sm:$0xff]
        %v2738 = vld [vmem:[%s2733 + $0x20] sm:$0xff]
        %v2739 = vld [vmem:[%s2733 + $0x28] sm:$0xff]
        %v2740 = vld [vmem:[%s2733 + $0x30] sm:$0xff]
        %v2741 = vld [vmem:[%s2733 + $0x38] sm:$0xff]
        %v2742 = vld [vmem:[%s2733 + $0x40] sm:$0xff]
        %v2743 = vld [vmem:[%s2733 + $0x48] sm:$0xff]
        %v2744 = vld [vmem:[%s2733 + $0x50] sm:$0xff]
        %v2745 = vld [vmem:[%s2733 + $0x58] sm:$0xff]
        %v2746 = vld [vmem:[%s2733 + $0x60] sm:$0xff]
        %v2747 = vld [vmem:[%s2733 + $0x68] sm:$0xff]
        %v2748 = vld [vmem:[%s2733 + $0x70] sm:$0xff]
        %v2749 = vld [vmem:[%s2733 + $0x78] sm:$0xff]
        %v2750 = vld [vmem:[%s2733 + $0x80] sm:$0xff]
        %v2751 = vld [vmem:[%s2733 + $0x88] sm:$0xff]
        %v2752 = vld [vmem:[%s2733 + $0x90] sm:$0xff]
        %v2753 = vld [vmem:[%s2733 + $0x98] sm:$0xff]
        %v2754 = vld [vmem:[%s2733 + $0xa0] sm:$0xff]
        %v2755 = vld [vmem:[%s2733 + $0xa8] sm:$0xff]
        %v2756 = vld [vmem:[%s2733 + $0xb0] sm:$0xff]
        %v2757 = vld [vmem:[%s2733 + $0xb8] sm:$0xff]
        %v2758 = vld [vmem:[%s2733 + $0xc0] sm:$0xff]
        %v2759 = vld [vmem:[%s2733 + $0xc8] sm:$0xff]
        %v2760 = vld [vmem:[%s2733 + $0xd0] sm:$0xff]
        %v2761 = vld [vmem:[%s2733 + $0xd8] sm:$0xff]
        %v2762 = vld [vmem:[%s2733 + $0xe0] sm:$0xff]
        %v2763 = vld [vmem:[%s2733 + $0xe8] sm:$0xff]
        %v2764 = vld [vmem:[%s2733 + $0xf0] sm:$0xff]
        %v2765 = vld [vmem:[%s2733 + $0xf8] sm:$0xff]
        %v2766 = vld [vmem:[%s2733 + $0x100] sm:$0xff]
        %v2767 = vld [vmem:[%s2733 + $0x108] sm:$0xff]
        %v2768 = vld [vmem:[%s2733 + $0x110] sm:$0xff]
        %v2769 = vld [vmem:[%s2733 + $0x118] sm:$0xff]
        %v2770 = vld [vmem:[%s2733 + $0x120] sm:$0xff]
        %v2771 = vld [vmem:[%s2733 + $0x128] sm:$0xff]
        %v2772 = vld [vmem:[%s2733 + $0x130] sm:$0xff]
        %v2773 = vld [vmem:[%s2733 + $0x138] sm:$0xff]
        %v2774 = vld [vmem:[%s2733 + $0x140] sm:$0xff]
        %v2775 = vld [vmem:[%s2733 + $0x148] sm:$0xff]
        %v2776 = vld [vmem:[%s2733 + $0x150] sm:$0xff]
        %v2777 = vld [vmem:[%s2733 + $0x158] sm:$0xff]
        %v2778 = vld [vmem:[%s2733 + $0x160] sm:$0xff]
        %v2779 = vld [vmem:[%s2733 + $0x168] sm:$0xff]
        %v2780 = vld [vmem:[%s2733 + $0x170] sm:$0xff]
        %v2781 = vld [vmem:[%s2733 + $0x178] sm:$0xff]
        %v2782 = vld [vmem:[%s2733 + $0x180] sm:$0xff]
        %v2783 = vld [vmem:[%s2733 + $0x188] sm:$0xff]
        %v2784 = vld [vmem:[%s2733 + $0x190] sm:$0xff]
        %v2785 = vld [vmem:[%s2733 + $0x198] sm:$0xff]
        %v2786 = vld [vmem:[%s2733 + $0x1a0] sm:$0xff]
        %v2787 = vld [vmem:[%s2733 + $0x1a8] sm:$0xff]
        %v2788 = vld [vmem:[%s2733 + $0x1b0] sm:$0xff]
        %v2789 = vld [vmem:[%s2733 + $0x1b8] sm:$0xff]
        %v2790 = vld [vmem:[%s2733 + $0x1c0] sm:$0xff]
        %v2791 = vld [vmem:[%s2733 + $0x1c8] sm:$0xff]
        %v2792 = vld [vmem:[%s2733 + $0x1d0] sm:$0xff]
        %v2793 = vld [vmem:[%s2733 + $0x1d8] sm:$0xff]
        %v2794 = vld [vmem:[%s2733 + $0x1e0] sm:$0xff]
        %v2795 = vld [vmem:[%s2733 + $0x1e8] sm:$0xff]
        %v2796 = vld [vmem:[%s2733 + $0x1f0] sm:$0xff]
        %v2797 = vld [vmem:[%s2733 + $0x1f8] sm:$0xff]
        %v2798 = vld [vmem:[%s2733 + $0x200] sm:$0xff]
        %v2799 = vld [vmem:[%s2733 + $0x208] sm:$0xff]
        %v2800 = vld [vmem:[%s2733 + $0x210] sm:$0xff]
        %v2801 = vld [vmem:[%s2733 + $0x218] sm:$0xff]
        %v2802 = vld [vmem:[%s2733 + $0x220] sm:$0xff]
        %v2803 = vld [vmem:[%s2733 + $0x228] sm:$0xff]
        %v2804 = vld [vmem:[%s2733 + $0x230] sm:$0xff]
        %v2805 = vld [vmem:[%s2733 + $0x238] sm:$0xff]
        %v2806 = vld [vmem:[%s2733 + $0x240] sm:$0xff]
        %v2807 = vld [vmem:[%s2733 + $0x248] sm:$0xff]
        %v2808 = vld [vmem:[%s2733 + $0x250] sm:$0xff]
        %v2809 = vld [vmem:[%s2733 + $0x258] sm:$0xff]
        %v2810 = vld [vmem:[%s2733 + $0x260] sm:$0xff]
        %v2811 = vld [vmem:[%s2733 + $0x268] sm:$0xff]
        %v2812 = vld [vmem:[%s2733 + $0x270] sm:$0xff]
        %v2813 = vld [vmem:[%s2733 + $0x278] sm:$0xff]
        %v2814 = vld [vmem:[%s2733 + $0x280] sm:$0xff]
        %v2815 = vld [vmem:[%s2733 + $0x288] sm:$0xff]
        %v2816 = vld [vmem:[%s2733 + $0x290] sm:$0xff]
        %v2817 = vld [vmem:[%s2733 + $0x298] sm:$0xff]
        %v2818 = vld [vmem:[%s2733 + $0x2a0] sm:$0xff]
        %v2819 = vld [vmem:[%s2733 + $0x2a8] sm:$0xff]
        %v2820 = vld [vmem:[%s2733 + $0x2b0] sm:$0xff]
        %v2821 = vld [vmem:[%s2733 + $0x2b8] sm:$0xff]
        %v2822 = vld [vmem:[%s2733 + $0x2c0] sm:$0xff]
        %v2823 = vld [vmem:[%s2733 + $0x2c8] sm:$0xff]
        %v2824 = vld [vmem:[%s2733 + $0x2d0] sm:$0xff]
        %v2825 = vld [vmem:[%s2733 + $0x2d8] sm:$0xff]
        %v2826 = vld [vmem:[%s2733 + $0x2e0] sm:$0xff]
        %v2827 = vld [vmem:[%s2733 + $0x2e8] sm:$0xff]
        %v2828 = vld [vmem:[%s2733 + $0x2f0] sm:$0xff]
        %v2829 = vld [vmem:[%s2733 + $0x2f8] sm:$0xff]
        %v2830 = vld [vmem:[%s2733 + $0x300] sm:$0xff]
        %v2831 = vld [vmem:[%s2733 + $0x308] sm:$0xff]
        %v2832 = vld [vmem:[%s2733 + $0x310] sm:$0xff]
        %v2833 = vld [vmem:[%s2733 + $0x318] sm:$0xff]
        %v2834 = vld [vmem:[%s2733 + $0x320] sm:$0xff]
        %v2835 = vld [vmem:[%s2733 + $0x328] sm:$0xff]
        %v2836 = vld [vmem:[%s2733 + $0x330] sm:$0xff]
        %v2837 = vld [vmem:[%s2733 + $0x338] sm:$0xff]
        %v2838 = vld [vmem:[%s2733 + $0x340] sm:$0xff]
        %v2839 = vld [vmem:[%s2733 + $0x348] sm:$0xff]
        %v2840 = vld [vmem:[%s2733 + $0x350] sm:$0xff]
        %v2841 = vld [vmem:[%s2733 + $0x358] sm:$0xff]
        %v2842 = vld [vmem:[%s2733 + $0x360] sm:$0xff]
        %v2843 = vld [vmem:[%s2733 + $0x368] sm:$0xff]
        %v2844 = vld [vmem:[%s2733 + $0x370] sm:$0xff]
        %v2845 = vld [vmem:[%s2733 + $0x378] sm:$0xff]
        %v2846 = vld [vmem:[%s2733 + $0x380] sm:$0xff]
        %v2847 = vld [vmem:[%s2733 + $0x388] sm:$0xff]
        %v2848 = vld [vmem:[%s2733 + $0x390] sm:$0xff]
        %v2849 = vld [vmem:[%s2733 + $0x398] sm:$0xff]
        %v2850 = vld [vmem:[%s2733 + $0x3a0] sm:$0xff]
        %v2851 = vld [vmem:[%s2733 + $0x3a8] sm:$0xff]
        %v2852 = vld [vmem:[%s2733 + $0x3b0] sm:$0xff]
        %v2853 = vld [vmem:[%s2733 + $0x3b8] sm:$0xff]
        %v2854 = vld [vmem:[%s2733 + $0x3c0] sm:$0xff]
        %v2855 = vld [vmem:[%s2733 + $0x3c8] sm:$0xff]
        %v2856 = vld [vmem:[%s2733 + $0x3d0] sm:$0xff]
        %v2857 = vld [vmem:[%s2733 + $0x3d8] sm:$0xff]
        %v2858 = vld [vmem:[%s2733 + $0x3e0] sm:$0xff]
        %v2859 = vld [vmem:[%s2733 + $0x3e8] sm:$0xff]
        %v2860 = vld [vmem:[%s2733 + $0x3f0] sm:$0xff]
        %v2861 = vld [vmem:[%s2733 + $0x3f8] sm:$0xff]
        %s2862 = smul.u32 %s2730, 4
        %s2863 = scalar_lea.vmem [#allocation11], %s2862
        %v2864 = vld [vmem:[%s2863] sm:$0xf]
        %v2866 = vlaneseq
        %v2867 = vshrl.u32 %v2866, 7
        %v2868 = vsub.s32 0, %v2867
        %v2869 = vrot.slane %v2864, %v2868
        %v2870 = vlaneseq
        %v2871 = vshrl.u32 %v2870, 7
        %v2872 = vsub.s32 1, %v2871
        %v2873 = vrot.slane %v2864, %v2872
        %v2874 = vlaneseq
        %v2875 = vshrl.u32 %v2874, 7
        %v2876 = vsub.s32 2, %v2875
        %v2877 = vrot.slane %v2864, %v2876
        %v2878 = vlaneseq
        %v2879 = vshrl.u32 %v2878, 7
        %v2880 = vsub.s32 3, %v2879
        %v2881 = vrot.slane %v2864, %v2880
        %v2888 = vunpack.c.l.b16 %v2731
        %v2889 = vunpack.c.h.b16 %v2731
        %v2890 = vunpack.c.l.b16 %v2732
        %v2891 = vunpack.c.h.b16 %v2732
        %v2892 = vpack.c.b16 %v2888, %v2888
        %v2893 = vpack.c.b16 %v2889, %v2889
        %v2894 = vpack.c.b16 %v2890, %v2890
        %v2895 = vpack.c.b16 %v2891, %v2891
        %v3028 = vunpack.c.l.b16 %v2734
        %v3029 = vunpack.c.h.b16 %v2734
        %v3030 = vunpack.c.l.b16 %v2735
        %v3031 = vunpack.c.h.b16 %v2735
        %v3032 = vunpack.c.l.b16 %v2736
        %v3033 = vunpack.c.h.b16 %v2736
        %v3034 = vunpack.c.l.b16 %v2737
        %v3035 = vunpack.c.h.b16 %v2737
        %v3036 = vunpack.c.l.b16 %v2738
        %v3037 = vunpack.c.h.b16 %v2738
        %v3038 = vunpack.c.l.b16 %v2739
        %v3039 = vunpack.c.h.b16 %v2739
        %v3040 = vunpack.c.l.b16 %v2740
        %v3041 = vunpack.c.h.b16 %v2740
        %v3042 = vunpack.c.l.b16 %v2741
        %v3043 = vunpack.c.h.b16 %v2741
        %v3044 = vunpack.c.l.b16 %v2742
        %v3045 = vunpack.c.h.b16 %v2742
        %v3046 = vunpack.c.l.b16 %v2743
        %v3047 = vunpack.c.h.b16 %v2743
        %v3048 = vunpack.c.l.b16 %v2744
        %v3049 = vunpack.c.h.b16 %v2744
        %v3050 = vunpack.c.l.b16 %v2745
        %v3051 = vunpack.c.h.b16 %v2745
        %v3052 = vunpack.c.l.b16 %v2746
        %v3053 = vunpack.c.h.b16 %v2746
        %v3054 = vunpack.c.l.b16 %v2747
        %v3055 = vunpack.c.h.b16 %v2747
        %v3056 = vunpack.c.l.b16 %v2748
        %v3057 = vunpack.c.h.b16 %v2748
        %v3058 = vunpack.c.l.b16 %v2749
        %v3059 = vunpack.c.h.b16 %v2749
        %v3060 = vunpack.c.l.b16 %v2750
        %v3061 = vunpack.c.h.b16 %v2750
        %v3062 = vunpack.c.l.b16 %v2751
        %v3063 = vunpack.c.h.b16 %v2751
        %v3064 = vunpack.c.l.b16 %v2752
        %v3065 = vunpack.c.h.b16 %v2752
        %v3066 = vunpack.c.l.b16 %v2753
        %v3067 = vunpack.c.h.b16 %v2753
        %v3068 = vunpack.c.l.b16 %v2754
        %v3069 = vunpack.c.h.b16 %v2754
        %v3070 = vunpack.c.l.b16 %v2755
        %v3071 = vunpack.c.h.b16 %v2755
        %v3072 = vunpack.c.l.b16 %v2756
        %v3073 = vunpack.c.h.b16 %v2756
        %v3074 = vunpack.c.l.b16 %v2757
        %v3075 = vunpack.c.h.b16 %v2757
        %v3076 = vunpack.c.l.b16 %v2758
        %v3077 = vunpack.c.h.b16 %v2758
        %v3078 = vunpack.c.l.b16 %v2759
        %v3079 = vunpack.c.h.b16 %v2759
        %v3080 = vunpack.c.l.b16 %v2760
        %v3081 = vunpack.c.h.b16 %v2760
        %v3082 = vunpack.c.l.b16 %v2761
        %v3083 = vunpack.c.h.b16 %v2761
        %v3084 = vunpack.c.l.b16 %v2762
        %v3085 = vunpack.c.h.b16 %v2762
        %v3086 = vunpack.c.l.b16 %v2763
        %v3087 = vunpack.c.h.b16 %v2763
        %v3088 = vunpack.c.l.b16 %v2764
        %v3089 = vunpack.c.h.b16 %v2764
        %v3090 = vunpack.c.l.b16 %v2765
        %v3091 = vunpack.c.h.b16 %v2765
        %v3092 = vunpack.c.l.b16 %v2766
        %v3093 = vunpack.c.h.b16 %v2766
        %v3094 = vunpack.c.l.b16 %v2767
        %v3095 = vunpack.c.h.b16 %v2767
        %v3096 = vunpack.c.l.b16 %v2768
        %v3097 = vunpack.c.h.b16 %v2768
        %v3098 = vunpack.c.l.b16 %v2769
        %v3099 = vunpack.c.h.b16 %v2769
        %v3100 = vunpack.c.l.b16 %v2770
        %v3101 = vunpack.c.h.b16 %v2770
        %v3102 = vunpack.c.l.b16 %v2771
        %v3103 = vunpack.c.h.b16 %v2771
        %v3104 = vunpack.c.l.b16 %v2772
        %v3105 = vunpack.c.h.b16 %v2772
        %v3106 = vunpack.c.l.b16 %v2773
        %v3107 = vunpack.c.h.b16 %v2773
        %v3108 = vunpack.c.l.b16 %v2774
        %v3109 = vunpack.c.h.b16 %v2774
        %v3110 = vunpack.c.l.b16 %v2775
        %v3111 = vunpack.c.h.b16 %v2775
        %v3112 = vunpack.c.l.b16 %v2776
        %v3113 = vunpack.c.h.b16 %v2776
        %v3114 = vunpack.c.l.b16 %v2777
        %v3115 = vunpack.c.h.b16 %v2777
        %v3116 = vunpack.c.l.b16 %v2778
        %v3117 = vunpack.c.h.b16 %v2778
        %v3118 = vunpack.c.l.b16 %v2779
        %v3119 = vunpack.c.h.b16 %v2779
        %v3120 = vunpack.c.l.b16 %v2780
        %v3121 = vunpack.c.h.b16 %v2780
        %v3122 = vunpack.c.l.b16 %v2781
        %v3123 = vunpack.c.h.b16 %v2781
        %v3124 = vunpack.c.l.b16 %v2782
        %v3125 = vunpack.c.h.b16 %v2782
        %v3126 = vunpack.c.l.b16 %v2783
        %v3127 = vunpack.c.h.b16 %v2783
        %v3128 = vunpack.c.l.b16 %v2784
        %v3129 = vunpack.c.h.b16 %v2784
        %v3130 = vunpack.c.l.b16 %v2785
        %v3131 = vunpack.c.h.b16 %v2785
        %v3132 = vunpack.c.l.b16 %v2786
        %v3133 = vunpack.c.h.b16 %v2786
        %v3134 = vunpack.c.l.b16 %v2787
        %v3135 = vunpack.c.h.b16 %v2787
        %v3136 = vunpack.c.l.b16 %v2788
        %v3137 = vunpack.c.h.b16 %v2788
        %v3138 = vunpack.c.l.b16 %v2789
        %v3139 = vunpack.c.h.b16 %v2789
        %v3140 = vunpack.c.l.b16 %v2790
        %v3141 = vunpack.c.h.b16 %v2790
        %v3142 = vunpack.c.l.b16 %v2791
        %v3143 = vunpack.c.h.b16 %v2791
        %v3144 = vunpack.c.l.b16 %v2792
        %v3145 = vunpack.c.h.b16 %v2792
        %v3146 = vunpack.c.l.b16 %v2793
        %v3147 = vunpack.c.h.b16 %v2793
        %v3148 = vunpack.c.l.b16 %v2794
        %v3149 = vunpack.c.h.b16 %v2794
        %v3150 = vunpack.c.l.b16 %v2795
        %v3151 = vunpack.c.h.b16 %v2795
        %v3152 = vunpack.c.l.b16 %v2796
        %v3153 = vunpack.c.h.b16 %v2796
        %v3154 = vunpack.c.l.b16 %v2797
        %v3155 = vunpack.c.h.b16 %v2797
        %v3156 = vunpack.c.l.b16 %v2798
        %v3157 = vunpack.c.h.b16 %v2798
        %v3158 = vunpack.c.l.b16 %v2799
        %v3159 = vunpack.c.h.b16 %v2799
        %v3160 = vunpack.c.l.b16 %v2800
        %v3161 = vunpack.c.h.b16 %v2800
        %v3162 = vunpack.c.l.b16 %v2801
        %v3163 = vunpack.c.h.b16 %v2801
        %v3164 = vunpack.c.l.b16 %v2802
        %v3165 = vunpack.c.h.b16 %v2802
        %v3166 = vunpack.c.l.b16 %v2803
        %v3167 = vunpack.c.h.b16 %v2803
        %v3168 = vunpack.c.l.b16 %v2804
        %v3169 = vunpack.c.h.b16 %v2804
        %v3170 = vunpack.c.l.b16 %v2805
        %v3171 = vunpack.c.h.b16 %v2805
        %v3172 = vunpack.c.l.b16 %v2806
        %v3173 = vunpack.c.h.b16 %v2806
        %v3174 = vunpack.c.l.b16 %v2807
        %v3175 = vunpack.c.h.b16 %v2807
        %v3176 = vunpack.c.l.b16 %v2808
        %v3177 = vunpack.c.h.b16 %v2808
        %v3178 = vunpack.c.l.b16 %v2809
        %v3179 = vunpack.c.h.b16 %v2809
        %v3180 = vunpack.c.l.b16 %v2810
        %v3181 = vunpack.c.h.b16 %v2810
        %v3182 = vunpack.c.l.b16 %v2811
        %v3183 = vunpack.c.h.b16 %v2811
        %v3184 = vunpack.c.l.b16 %v2812
        %v3185 = vunpack.c.h.b16 %v2812
        %v3186 = vunpack.c.l.b16 %v2813
        %v3187 = vunpack.c.h.b16 %v2813
        %v3188 = vunpack.c.l.b16 %v2814
        %v3189 = vunpack.c.h.b16 %v2814
        %v3190 = vunpack.c.l.b16 %v2815
        %v3191 = vunpack.c.h.b16 %v2815
        %v3192 = vunpack.c.l.b16 %v2816
        %v3193 = vunpack.c.h.b16 %v2816
        %v3194 = vunpack.c.l.b16 %v2817
        %v3195 = vunpack.c.h.b16 %v2817
        %v3196 = vunpack.c.l.b16 %v2818
        %v3197 = vunpack.c.h.b16 %v2818
        %v3198 = vunpack.c.l.b16 %v2819
        %v3199 = vunpack.c.h.b16 %v2819
        %v3200 = vunpack.c.l.b16 %v2820
        %v3201 = vunpack.c.h.b16 %v2820
        %v3202 = vunpack.c.l.b16 %v2821
        %v3203 = vunpack.c.h.b16 %v2821
        %v3204 = vunpack.c.l.b16 %v2822
        %v3205 = vunpack.c.h.b16 %v2822
        %v3206 = vunpack.c.l.b16 %v2823
        %v3207 = vunpack.c.h.b16 %v2823
        %v3208 = vunpack.c.l.b16 %v2824
        %v3209 = vunpack.c.h.b16 %v2824
        %v3210 = vunpack.c.l.b16 %v2825
        %v3211 = vunpack.c.h.b16 %v2825
        %v3212 = vunpack.c.l.b16 %v2826
        %v3213 = vunpack.c.h.b16 %v2826
        %v3214 = vunpack.c.l.b16 %v2827
        %v3215 = vunpack.c.h.b16 %v2827
        %v3216 = vunpack.c.l.b16 %v2828
        %v3217 = vunpack.c.h.b16 %v2828
        %v3218 = vunpack.c.l.b16 %v2829
        %v3219 = vunpack.c.h.b16 %v2829
        %v3220 = vunpack.c.l.b16 %v2830
        %v3221 = vunpack.c.h.b16 %v2830
        %v3222 = vunpack.c.l.b16 %v2831
        %v3223 = vunpack.c.h.b16 %v2831
        %v3224 = vunpack.c.l.b16 %v2832
        %v3225 = vunpack.c.h.b16 %v2832
        %v3226 = vunpack.c.l.b16 %v2833
        %v3227 = vunpack.c.h.b16 %v2833
        %v3228 = vunpack.c.l.b16 %v2834
        %v3229 = vunpack.c.h.b16 %v2834
        %v3230 = vunpack.c.l.b16 %v2835
        %v3231 = vunpack.c.h.b16 %v2835
        %v3232 = vunpack.c.l.b16 %v2836
        %v3233 = vunpack.c.h.b16 %v2836
        %v3234 = vunpack.c.l.b16 %v2837
        %v3235 = vunpack.c.h.b16 %v2837
        %v3236 = vunpack.c.l.b16 %v2838
        %v3237 = vunpack.c.h.b16 %v2838
        %v3238 = vunpack.c.l.b16 %v2839
        %v3239 = vunpack.c.h.b16 %v2839
        %v3240 = vunpack.c.l.b16 %v2840
        %v3241 = vunpack.c.h.b16 %v2840
        %v3242 = vunpack.c.l.b16 %v2841
        %v3243 = vunpack.c.h.b16 %v2841
        %v3244 = vunpack.c.l.b16 %v2842
        %v3245 = vunpack.c.h.b16 %v2842
        %v3246 = vunpack.c.l.b16 %v2843
        %v3247 = vunpack.c.h.b16 %v2843
        %v3248 = vunpack.c.l.b16 %v2844
        %v3249 = vunpack.c.h.b16 %v2844
        %v3250 = vunpack.c.l.b16 %v2845
        %v3251 = vunpack.c.h.b16 %v2845
        %v3252 = vunpack.c.l.b16 %v2846
        %v3253 = vunpack.c.h.b16 %v2846
        %v3254 = vunpack.c.l.b16 %v2847
        %v3255 = vunpack.c.h.b16 %v2847
        %v3256 = vunpack.c.l.b16 %v2848
        %v3257 = vunpack.c.h.b16 %v2848
        %v3258 = vunpack.c.l.b16 %v2849
        %v3259 = vunpack.c.h.b16 %v2849
        %v3260 = vunpack.c.l.b16 %v2850
        %v3261 = vunpack.c.h.b16 %v2850
        %v3262 = vunpack.c.l.b16 %v2851
        %v3263 = vunpack.c.h.b16 %v2851
        %v3264 = vunpack.c.l.b16 %v2852
        %v3265 = vunpack.c.h.b16 %v2852
        %v3266 = vunpack.c.l.b16 %v2853
        %v3267 = vunpack.c.h.b16 %v2853
        %v3268 = vunpack.c.l.b16 %v2854
        %v3269 = vunpack.c.h.b16 %v2854
        %v3270 = vunpack.c.l.b16 %v2855
        %v3271 = vunpack.c.h.b16 %v2855
        %v3272 = vunpack.c.l.b16 %v2856
        %v3273 = vunpack.c.h.b16 %v2856
        %v3274 = vunpack.c.l.b16 %v2857
        %v3275 = vunpack.c.h.b16 %v2857
        %v3276 = vunpack.c.l.b16 %v2858
        %v3277 = vunpack.c.h.b16 %v2858
        %v3278 = vunpack.c.l.b16 %v2859
        %v3279 = vunpack.c.h.b16 %v2859
        %v3280 = vunpack.c.l.b16 %v2860
        %v3281 = vunpack.c.h.b16 %v2860
        %v3282 = vunpack.c.l.b16 %v2861
        %v3283 = vunpack.c.h.b16 %v2861
        %v3284 = vpack.c.b16 %v3032, %v3028
        %v3285 = vpack.c.b16 %v3033, %v3029
        %v3286 = vpack.c.b16 %v3034, %v3030
        %v3287 = vpack.c.b16 %v3035, %v3031
        %v3288 = vpack.c.b16 %v3040, %v3036
        %v3289 = vpack.c.b16 %v3041, %v3037
        %v3290 = vpack.c.b16 %v3042, %v3038
        %v3291 = vpack.c.b16 %v3043, %v3039
        %v3292 = vpack.c.b16 %v3048, %v3044
        %v3293 = vpack.c.b16 %v3049, %v3045
        %v3294 = vpack.c.b16 %v3050, %v3046
        %v3295 = vpack.c.b16 %v3051, %v3047
        %v3296 = vpack.c.b16 %v3056, %v3052
        %v3297 = vpack.c.b16 %v3057, %v3053
        %v3298 = vpack.c.b16 %v3058, %v3054
        %v3299 = vpack.c.b16 %v3059, %v3055
        %v3300 = vpack.c.b16 %v3064, %v3060
        %v3301 = vpack.c.b16 %v3065, %v3061
        %v3302 = vpack.c.b16 %v3066, %v3062
        %v3303 = vpack.c.b16 %v3067, %v3063
        %v3304 = vpack.c.b16 %v3072, %v3068
        %v3305 = vpack.c.b16 %v3073, %v3069
        %v3306 = vpack.c.b16 %v3074, %v3070
        %v3307 = vpack.c.b16 %v3075, %v3071
        %v3308 = vpack.c.b16 %v3080, %v3076
        %v3309 = vpack.c.b16 %v3081, %v3077
        %v3310 = vpack.c.b16 %v3082, %v3078
        %v3311 = vpack.c.b16 %v3083, %v3079
        %v3312 = vpack.c.b16 %v3088, %v3084
        %v3313 = vpack.c.b16 %v3089, %v3085
        %v3314 = vpack.c.b16 %v3090, %v3086
        %v3315 = vpack.c.b16 %v3091, %v3087
        %v3316 = vpack.c.b16 %v3096, %v3092
        %v3317 = vpack.c.b16 %v3097, %v3093
        %v3318 = vpack.c.b16 %v3098, %v3094
        %v3319 = vpack.c.b16 %v3099, %v3095
        %v3320 = vpack.c.b16 %v3104, %v3100
        %v3321 = vpack.c.b16 %v3105, %v3101
        %v3322 = vpack.c.b16 %v3106, %v3102
        %v3323 = vpack.c.b16 %v3107, %v3103
        %v3324 = vpack.c.b16 %v3112, %v3108
        %v3325 = vpack.c.b16 %v3113, %v3109
        %v3326 = vpack.c.b16 %v3114, %v3110
        %v3327 = vpack.c.b16 %v3115, %v3111
        %v3328 = vpack.c.b16 %v3120, %v3116
        %v3329 = vpack.c.b16 %v3121, %v3117
        %v3330 = vpack.c.b16 %v3122, %v3118
        %v3331 = vpack.c.b16 %v3123, %v3119
        %v3332 = vpack.c.b16 %v3128, %v3124
        %v3333 = vpack.c.b16 %v3129, %v3125
        %v3334 = vpack.c.b16 %v3130, %v3126
        %v3335 = vpack.c.b16 %v3131, %v3127
        %v3336 = vpack.c.b16 %v3136, %v3132
        %v3337 = vpack.c.b16 %v3137, %v3133
        %v3338 = vpack.c.b16 %v3138, %v3134
        %v3339 = vpack.c.b16 %v3139, %v3135
        %v3340 = vpack.c.b16 %v3144, %v3140
        %v3341 = vpack.c.b16 %v3145, %v3141
        %v3342 = vpack.c.b16 %v3146, %v3142
        %v3343 = vpack.c.b16 %v3147, %v3143
        %v3344 = vpack.c.b16 %v3152, %v3148
        %v3345 = vpack.c.b16 %v3153, %v3149
        %v3346 = vpack.c.b16 %v3154, %v3150
        %v3347 = vpack.c.b16 %v3155, %v3151
        %v3348 = vpack.c.b16 %v3160, %v3156
        %v3349 = vpack.c.b16 %v3161, %v3157
        %v3350 = vpack.c.b16 %v3162, %v3158
        %v3351 = vpack.c.b16 %v3163, %v3159
        %v3352 = vpack.c.b16 %v3168, %v3164
        %v3353 = vpack.c.b16 %v3169, %v3165
        %v3354 = vpack.c.b16 %v3170, %v3166
        %v3355 = vpack.c.b16 %v3171, %v3167
        %v3356 = vpack.c.b16 %v3176, %v3172
        %v3357 = vpack.c.b16 %v3177, %v3173
        %v3358 = vpack.c.b16 %v3178, %v3174
        %v3359 = vpack.c.b16 %v3179, %v3175
        %v3360 = vpack.c.b16 %v3184, %v3180
        %v3361 = vpack.c.b16 %v3185, %v3181
        %v3362 = vpack.c.b16 %v3186, %v3182
        %v3363 = vpack.c.b16 %v3187, %v3183
        %v3364 = vpack.c.b16 %v3192, %v3188
        %v3365 = vpack.c.b16 %v3193, %v3189
        %v3366 = vpack.c.b16 %v3194, %v3190
        %v3367 = vpack.c.b16 %v3195, %v3191
        %v3368 = vpack.c.b16 %v3200, %v3196
        %v3369 = vpack.c.b16 %v3201, %v3197
        %v3370 = vpack.c.b16 %v3202, %v3198
        %v3371 = vpack.c.b16 %v3203, %v3199
        %v3372 = vpack.c.b16 %v3208, %v3204
        %v3373 = vpack.c.b16 %v3209, %v3205
        %v3374 = vpack.c.b16 %v3210, %v3206
        %v3375 = vpack.c.b16 %v3211, %v3207
        %v3376 = vpack.c.b16 %v3216, %v3212
        %v3377 = vpack.c.b16 %v3217, %v3213
        %v3378 = vpack.c.b16 %v3218, %v3214
        %v3379 = vpack.c.b16 %v3219, %v3215
        %v3380 = vpack.c.b16 %v3224, %v3220
        %v3381 = vpack.c.b16 %v3225, %v3221
        %v3382 = vpack.c.b16 %v3226, %v3222
        %v3383 = vpack.c.b16 %v3227, %v3223
        %v3384 = vpack.c.b16 %v3232, %v3228
        %v3385 = vpack.c.b16 %v3233, %v3229
        %v3386 = vpack.c.b16 %v3234, %v3230
        %v3387 = vpack.c.b16 %v3235, %v3231
        %v3388 = vpack.c.b16 %v3240, %v3236
        %v3389 = vpack.c.b16 %v3241, %v3237
        %v3390 = vpack.c.b16 %v3242, %v3238
        %v3391 = vpack.c.b16 %v3243, %v3239
        %v3392 = vpack.c.b16 %v3248, %v3244
        %v3393 = vpack.c.b16 %v3249, %v3245
        %v3394 = vpack.c.b16 %v3250, %v3246
        %v3395 = vpack.c.b16 %v3251, %v3247
        %v3396 = vpack.c.b16 %v3256, %v3252
        %v3397 = vpack.c.b16 %v3257, %v3253
        %v3398 = vpack.c.b16 %v3258, %v3254
        %v3399 = vpack.c.b16 %v3259, %v3255
        %v3400 = vpack.c.b16 %v3264, %v3260
        %v3401 = vpack.c.b16 %v3265, %v3261
        %v3402 = vpack.c.b16 %v3266, %v3262
        %v3403 = vpack.c.b16 %v3267, %v3263
        %v3404 = vpack.c.b16 %v3272, %v3268
        %v3405 = vpack.c.b16 %v3273, %v3269
        %v3406 = vpack.c.b16 %v3274, %v3270
        %v3407 = vpack.c.b16 %v3275, %v3271
        %v3408 = vpack.c.b16 %v3280, %v3276
        %v3409 = vpack.c.b16 %v3281, %v3277
        %v3410 = vpack.c.b16 %v3282, %v3278
        %v3411 = vpack.c.b16 %v3283, %v3279
        %3540 = vmatprep.subr.bf16.mxu0 %v3285
        %3541 = vmatpush1.bf16.msra.mxu0 %v3284
        %3542 = vmatprep.subr.bf16.mxu0 %v3289
        %3543 = vmatpush1.bf16.msra.mxu0 %v3288
        %3544 = vmatprep.subr.bf16.mxu0 %v3293
        %3545 = vmatpush1.bf16.msra.mxu0 %v3292
        %3546 = vmatprep.subr.bf16.mxu0 %v3297
        %3547 = vmatpush1.bf16.msra.mxu0 %v3296
        %3548 = vmatprep.subr.bf16.mxu0 %v3301
        %3549 = vmatpush1.bf16.msra.mxu0 %v3300
        %3550 = vmatprep.subr.bf16.mxu0 %v3305
        %3551 = vmatpush1.bf16.msra.mxu0 %v3304
        %3552 = vmatprep.subr.bf16.mxu0 %v3309
        %3553 = vmatpush1.bf16.msra.mxu0 %v3308
        %3554 = vmatprep.subr.bf16.mxu0 %v3313
        %3555 = vmatpush1.bf16.msra.mxu0 %v3312
        %3556 = vmatprep.subr.bf16.mxu0 %v3317
        %3557 = vmatpush1.bf16.msra.mxu0 %v3316
        %3558 = vmatprep.subr.bf16.mxu0 %v3321
        %3559 = vmatpush1.bf16.msra.mxu0 %v3320
        %3560 = vmatprep.subr.bf16.mxu0 %v3325
        %3561 = vmatpush1.bf16.msra.mxu0 %v3324
        %3562 = vmatprep.subr.bf16.mxu0 %v3329
        %3563 = vmatpush1.bf16.msra.mxu0 %v3328
        %3564 = vmatprep.subr.bf16.mxu0 %v3333
        %3565 = vmatpush1.bf16.msra.mxu0 %v3332
        %3566 = vmatprep.subr.bf16.mxu0 %v3337
        %3567 = vmatpush1.bf16.msra.mxu0 %v3336
        %3568 = vmatprep.subr.bf16.mxu0 %v3341
        %3569 = vmatpush1.bf16.msra.mxu0 %v3340
        %3570 = vmatprep.subr.bf16.mxu0 %v3345
        %3571 = vmatpush1.bf16.msra.mxu0 %v3344
        %3572 = vmatprep.mubr.bf16.mxu0 %v2893
        %3573 = vmatmul.mubr.bf16.gmra.mrb[0].mxu0 %v2892
        %v3574 = vpop.f32.mrb[0].mxu0
        %v3575 = vadd.f32 %v2869, %v3574
        %v3576 = vpop.f32.mrb[0].mxu0
        %v3577 = vadd.f32 %v2873, %v3576
        %v3578 = vpop.f32.mrb[0].mxu0
        %v3579 = vpop.f32.mrb[0].mxu0
        %3580 = vdwg.mxu0
        %3581 = vmatprep.subr.bf16.mxu0 %v3349
        %3582 = vmatpush1.bf16.msra.mxu0 %v3348
        %3583 = vmatprep.subr.bf16.mxu0 %v3353
        %3584 = vmatpush1.bf16.msra.mxu0 %v3352
        %3585 = vmatprep.subr.bf16.mxu0 %v3357
        %3586 = vmatpush1.bf16.msra.mxu0 %v3356
        %3587 = vmatprep.subr.bf16.mxu0 %v3361
        %3588 = vmatpush1.bf16.msra.mxu0 %v3360
        %3589 = vmatprep.subr.bf16.mxu0 %v3365
        %3590 = vmatpush1.bf16.msra.mxu0 %v3364
        %3591 = vmatprep.subr.bf16.mxu0 %v3369
        %3592 = vmatpush1.bf16.msra.mxu0 %v3368
        %3593 = vmatprep.subr.bf16.mxu0 %v3373
        %3594 = vmatpush1.bf16.msra.mxu0 %v3372
        %3595 = vmatprep.subr.bf16.mxu0 %v3377
        %3596 = vmatpush1.bf16.msra.mxu0 %v3376
        %3597 = vmatprep.subr.bf16.mxu0 %v3381
        %3598 = vmatpush1.bf16.msra.mxu0 %v3380
        %3599 = vmatprep.subr.bf16.mxu0 %v3385
        %3600 = vmatpush1.bf16.msra.mxu0 %v3384
        %3601 = vmatprep.subr.bf16.mxu0 %v3389
        %3602 = vmatpush1.bf16.msra.mxu0 %v3388
        %3603 = vmatprep.subr.bf16.mxu0 %v3393
        %3604 = vmatpush1.bf16.msra.mxu0 %v3392
        %3605 = vmatprep.subr.bf16.mxu0 %v3397
        %3606 = vmatpush1.bf16.msra.mxu0 %v3396
        %3607 = vmatprep.subr.bf16.mxu0 %v3401
        %3608 = vmatpush1.bf16.msra.mxu0 %v3400
        %3609 = vmatprep.subr.bf16.mxu0 %v3405
        %3610 = vmatpush1.bf16.msra.mxu0 %v3404
        %3611 = vmatprep.subr.bf16.mxu0 %v3409
        %3612 = vmatpush1.bf16.msra.mxu0 %v3408
        %3613 = vmatprep.mubr.bf16.mxu0 %v2895
        %3614 = vmatmul.mubr.bf16.gmra.mrb[0].mxu0 %v2894
        %v3615 = vpop.f32.mrb[0].mxu0
        %v3616 = vadd.f32 %v3575, %v3615
        %v3617 = vpop.f32.mrb[0].mxu0
        %v3618 = vadd.f32 %v3577, %v3617
        %v3619 = vpop.f32.mrb[0].mxu0
        %v3620 = vpop.f32.mrb[0].mxu0
        %3621 = vdwg.mxu0
        %3622 = vmatprep.subr.bf16.mxu0 %v3287
        %3623 = vmatpush1.bf16.msra.mxu0 %v3286
        %3624 = vmatprep.subr.bf16.mxu0 %v3291
        %3625 = vmatpush1.bf16.msra.mxu0 %v3290
        %3626 = vmatprep.subr.bf16.mxu0 %v3295
        %3627 = vmatpush1.bf16.msra.mxu0 %v3294
        %3628 = vmatprep.subr.bf16.mxu0 %v3299
        %3629 = vmatpush1.bf16.msra.mxu0 %v3298
        %3630 = vmatprep.subr.bf16.mxu0 %v3303
        %3631 = vmatpush1.bf16.msra.mxu0 %v3302
        %3632 = vmatprep.subr.bf16.mxu0 %v3307
        %3633 = vmatpush1.bf16.msra.mxu0 %v3306
        %3634 = vmatprep.subr.bf16.mxu0 %v3311
        %3635 = vmatpush1.bf16.msra.mxu0 %v3310
        %3636 = vmatprep.subr.bf16.mxu0 %v3315
        %3637 = vmatpush1.bf16.msra.mxu0 %v3314
        %3638 = vmatprep.subr.bf16.mxu0 %v3319
        %3639 = vmatpush1.bf16.msra.mxu0 %v3318
        %3640 = vmatprep.subr.bf16.mxu0 %v3323
        %3641 = vmatpush1.bf16.msra.mxu0 %v3322
        %3642 = vmatprep.subr.bf16.mxu0 %v3327
        %3643 = vmatpush1.bf16.msra.mxu0 %v3326
        %3644 = vmatprep.subr.bf16.mxu0 %v3331
        %3645 = vmatpush1.bf16.msra.mxu0 %v3330
        %3646 = vmatprep.subr.bf16.mxu0 %v3335
        %3647 = vmatpush1.bf16.msra.mxu0 %v3334
        %3648 = vmatprep.subr.bf16.mxu0 %v3339
        %3649 = vmatpush1.bf16.msra.mxu0 %v3338
        %3650 = vmatprep.subr.bf16.mxu0 %v3343
        %3651 = vmatpush1.bf16.msra.mxu0 %v3342
        %3652 = vmatprep.subr.bf16.mxu0 %v3347
        %3653 = vmatpush1.bf16.msra.mxu0 %v3346
        %3654 = vmatprep.mubr.bf16.mxu0 %v2893
        %3655 = vmatmul.mubr.bf16.gmra.mrb[0].mxu0 %v2892
        %v3656 = vpop.f32.mrb[0].mxu0
        %v3657 = vadd.f32 %v2877, %v3656
        %v3658 = vpop.f32.mrb[0].mxu0
        %v3659 = vadd.f32 %v2881, %v3658
        %v3660 = vpop.f32.mrb[0].mxu0
        %v3661 = vpop.f32.mrb[0].mxu0
        %3662 = vdwg.mxu0
        %3663 = vmatprep.subr.bf16.mxu0 %v3351
        %3664 = vmatpush1.bf16.msra.mxu0 %v3350
        %3665 = vmatprep.subr.bf16.mxu0 %v3355
        %3666 = vmatpush1.bf16.msra.mxu0 %v3354
        %3667 = vmatprep.subr.bf16.mxu0 %v3359
        %3668 = vmatpush1.bf16.msra.mxu0 %v3358
        %3669 = vmatprep.subr.bf16.mxu0 %v3363
        %3670 = vmatpush1.bf16.msra.mxu0 %v3362
        %3671 = vmatprep.subr.bf16.mxu0 %v3367
        %3672 = vmatpush1.bf16.msra.mxu0 %v3366
        %3673 = vmatprep.subr.bf16.mxu0 %v3371
        %3674 = vmatpush1.bf16.msra.mxu0 %v3370
        %3675 = vmatprep.subr.bf16.mxu0 %v3375
        %3676 = vmatpush1.bf16.msra.mxu0 %v3374
        %3677 = vmatprep.subr.bf16.mxu0 %v3379
        %3678 = vmatpush1.bf16.msra.mxu0 %v3378
        %3679 = vmatprep.subr.bf16.mxu0 %v3383
        %3680 = vmatpush1.bf16.msra.mxu0 %v3382
        %3681 = vmatprep.subr.bf16.mxu0 %v3387
        %3682 = vmatpush1.bf16.msra.mxu0 %v3386
        %3683 = vmatprep.subr.bf16.mxu0 %v3391
        %3684 = vmatpush1.bf16.msra.mxu0 %v3390
        %3685 = vmatprep.subr.bf16.mxu0 %v3395
        %3686 = vmatpush1.bf16.msra.mxu0 %v3394
        %3687 = vmatprep.subr.bf16.mxu0 %v3399
        %3688 = vmatpush1.bf16.msra.mxu0 %v3398
        %3689 = vmatprep.subr.bf16.mxu0 %v3403
        %3690 = vmatpush1.bf16.msra.mxu0 %v3402
        %3691 = vmatprep.subr.bf16.mxu0 %v3407
        %3692 = vmatpush1.bf16.msra.mxu0 %v3406
        %3693 = vmatprep.subr.bf16.mxu0 %v3411
        %3694 = vmatpush1.bf16.msra.mxu0 %v3410
        %3695 = vmatprep.mubr.bf16.mxu0 %v2895
        %3696 = vmatmul.mubr.bf16.gmra.mrb[0].mxu0 %v2894
        %v3697 = vpop.f32.mrb[0].mxu0
        %v3698 = vadd.f32 %v3657, %v3697
        %v3699 = vpop.f32.mrb[0].mxu0
        %v3700 = vadd.f32 %v3659, %v3699
        %v3701 = vpop.f32.mrb[0].mxu0
        %v3702 = vpop.f32.mrb[0].mxu0
        %3703 = vdwg.mxu0
        %p3704 = scmp.lt.s32.totalorder %s2730, 5
        // Predicated region
        $region97: #{gcn_forward.1} parent=47 // pred_check
          %p3705 = pneg %p3704
        $region98: #{gcn_forward.1} parent=47 // pred_check_branch
          %3707 = sbr.rel (%p3705) target = $region100
        $region99: #{gcn_forward.1} parent=47 // pred_region
          %v3708 = vld [vmem:[#allocation3] sm:$0xf]
          %v3709 = vpack.c.bf16 %v3616, %v3616
          %v3710 = vpack.c.bf16 %v3618, %v3618
          %v3711 = vpack.c.bf16 %v3698, %v3698
          %v3712 = vpack.c.bf16 %v3700, %v3700
          %vm3713 = vcmask 64512
          %v3715 = vsel %vm3713, %v3708, 0
          %vm3717 = vcmask 1043456
          %v3719 = vsel %vm3717, %v3709, 0
          %v3722 = vsel %vm3717, %v3710, 0
          %v3725 = vsel %vm3717, %v3711, 0
          %v3728 = vsel %vm3717, %v3712, 0
          %3730 = vmatprep.subr.bf16.mxu0 %v3722
          %3731 = vmatpush1.bf16.msra.mxu0 %v3719
          %3732 = vmatprep.subr.bf16.mxu0 0
          %3733 = vmatpush1.bf16.msra.mxu0 0
          %3734 = vmatprep.subr.bf16.mxu0 0
          %3735 = vmatpush1.bf16.msra.mxu0 0
          %3736 = vmatprep.subr.bf16.mxu0 0
          %3737 = vmatpush1.bf16.msra.mxu0 0
          %3738 = vmatprep.subr.bf16.mxu0 0
          %3739 = vmatpush1.bf16.msra.mxu0 0
          %3740 = vmatprep.subr.bf16.mxu0 0
          %3741 = vmatpush1.bf16.msra.mxu0 0
          %3742 = vmatprep.subr.bf16.mxu0 0
          %3743 = vmatpush1.bf16.msra.mxu0 0
          %3744 = vmatprep.subr.bf16.mxu0 0
          %3745 = vmatpush1.bf16.msra.mxu0 0
          %3746 = vmatprep.subr.bf16.mxu0 0
          %3747 = vmatpush1.bf16.msra.mxu0 0
          %3748 = vmatprep.subr.bf16.mxu0 0
          %3749 = vmatpush1.bf16.msra.mxu0 0
          %3750 = vmatprep.subr.bf16.mxu0 0
          %3751 = vmatpush1.bf16.msra.mxu0 0
          %3752 = vmatprep.subr.bf16.mxu0 0
          %3753 = vmatpush1.bf16.msra.mxu0 0
          %3754 = vmatprep.subr.bf16.mxu0 0
          %3755 = vmatpush1.bf16.msra.mxu0 0
          %3756 = vmatprep.subr.bf16.mxu0 0
          %3757 = vmatpush1.bf16.msra.mxu0 0
          %3758 = vmatprep.subr.bf16.mxu0 0
          %3759 = vmatpush1.bf16.msra.mxu0 0
          %3760 = vmatprep.subr.bf16.mxu0 0
          %3761 = vmatpush1.bf16.msra.mxu0 0
          %3762 = vmatprep.mubr.bf16.mxu0 0
          %3763 = vmatmul.mubr.bf16.gmra.mrb[0].mxu0 %v3715
          %v3764 = vpop.f32.mrb[0].mxu0
          %v3765 = vadd.f32 0.0, %v3764
          %v3766 = vpop.f32.mrb[0].mxu0
          %v3767 = vadd.f32 0.0, %v3766
          %v3768 = vpop.f32.mrb[0].mxu0
          %v3769 = vpop.f32.mrb[0].mxu0
          %3770 = vdwg.mxu0
          %3771 = vmatprep.subr.bf16.mxu0 %v3728
          %3772 = vmatpush1.bf16.msra.mxu0 %v3725
          %3773 = vmatprep.subr.bf16.mxu0 0
          %3774 = vmatpush1.bf16.msra.mxu0 0
          %3775 = vmatprep.subr.bf16.mxu0 0
          %3776 = vmatpush1.bf16.msra.mxu0 0
          %3777 = vmatprep.subr.bf16.mxu0 0
          %3778 = vmatpush1.bf16.msra.mxu0 0
          %3779 = vmatprep.subr.bf16.mxu0 0
          %3780 = vmatpush1.bf16.msra.mxu0 0
          %3781 = vmatprep.subr.bf16.mxu0 0
          %3782 = vmatpush1.bf16.msra.mxu0 0
          %3783 = vmatprep.subr.bf16.mxu0 0
          %3784 = vmatpush1.bf16.msra.mxu0 0
          %3785 = vmatprep.subr.bf16.mxu0 0
          %3786 = vmatpush1.bf16.msra.mxu0 0
          %3787 = vmatprep.subr.bf16.mxu0 0
          %3788 = vmatpush1.bf16.msra.mxu0 0
          %3789 = vmatprep.subr.bf16.mxu0 0
          %3790 = vmatpush1.bf16.msra.mxu0 0
          %3791 = vmatprep.subr.bf16.mxu0 0
          %3792 = vmatpush1.bf16.msra.mxu0 0
          %3793 = vmatprep.subr.bf16.mxu0 0
          %3794 = vmatpush1.bf16.msra.mxu0 0
          %3795 = vmatprep.subr.bf16.mxu0 0
          %3796 = vmatpush1.bf16.msra.mxu0 0
          %3797 = vmatprep.subr.bf16.mxu0 0
          %3798 = vmatpush1.bf16.msra.mxu0 0
          %3799 = vmatprep.subr.bf16.mxu0 0
          %3800 = vmatpush1.bf16.msra.mxu0 0
          %3801 = vmatprep.subr.bf16.mxu0 0
          %3802 = vmatpush1.bf16.msra.mxu0 0
          %3803 = vmatprep.mubr.bf16.mxu0 0
          %3804 = vmatmul.mubr.bf16.gmra.mrb[0].mxu0 %v3715
          %v3805 = vpop.f32.mrb[0].mxu0
          %v3806 = vadd.f32 0.0, %v3805
          %v3807 = vpop.f32.mrb[0].mxu0
          %v3808 = vadd.f32 0.0, %v3807
          %v3809 = vpop.f32.mrb[0].mxu0
          %v3810 = vpop.f32.mrb[0].mxu0
          %3811 = vdwg.mxu0
          %v3812 = vmax.f32 %v3765, 0.0
          %v3813 = vmax.f32 %v3767, 0.0
          %v3814 = vmax.f32 %v3806, 0.0
          %v3815 = vmax.f32 %v3808, 0.0
          %v3816 = vpack.c.bf16 %v3812, %v3812
          %v3817 = vpack.c.bf16 %v3813, %v3813
          %v3818 = vpack.c.bf16 %v3814, %v3814
          %v3819 = vpack.c.bf16 %v3815, %v3815
          %v3824 = vunpack.c.l.b16 %v3816
          %v3825 = vunpack.c.l.b16 %v3817
          %v3826 = vunpack.c.l.b16 %v3818
          %v3827 = vunpack.c.l.b16 %v3819
          %v3828 = vpack.c.b16 %v3825, %v3824
          %v3829 = vpack.c.b16 %v3827, %v3826
          %3832 = vst [vmem:[#allocation2] sm:$0xff] %v3828
          %3833 = vst [vmem:[#allocation2 + $0x8] sm:$0xff] %v3829
        $region100: #{gcn_forward.1} parent=47 // pred_fallthru
          _
        %p3834 = scmp.ge.s32.totalorder %s2730, 5
        // Predicated region
        $region101: #{gcn_forward.1} parent=47 // pred_check
          %p3835 = pneg %p3834
        $region102: #{gcn_forward.1} parent=47 // pred_check_branch
          %3837 = sbr.rel (%p3835) target = $region104
        $region103: #{gcn_forward.1} parent=47 // pred_region
          %v3838 = vmax.f32 %v3616, 0.0
          %v3839 = vmax.f32 %v3618, 0.0
          %v3840 = vmax.f32 %v3698, 0.0
          %v3841 = vmax.f32 %v3700, 0.0
          %v3842 = vpack.c.bf16 %v3838, %v3838
          %v3843 = vpack.c.bf16 %v3839, %v3839
          %v3844 = vpack.c.bf16 %v3840, %v3840
          %v3845 = vpack.c.bf16 %v3841, %v3841
          %v3850 = vunpack.c.l.b16 %v3842
          %v3851 = vunpack.c.l.b16 %v3843
          %v3852 = vunpack.c.l.b16 %v3844
          %v3853 = vunpack.c.l.b16 %v3845
          %v3854 = vpack.c.b16 %v3851, %v3850
          %v3855 = vpack.c.b16 %v3853, %v3852
          %3858 = vst [vmem:[#allocation2] sm:$0xff] %v3854
          %3859 = vst [vmem:[#allocation2 + $0x8] sm:$0xff] %v3855
        $region104: #{gcn_forward.1} parent=47 // pred_fallthru
          _
        %s3860 = sadd.s32 %s471, 3
        %v3861 = vld [vmem:[#allocation2] sm:$0xff]
        %v3862 = vld [vmem:[#allocation2 + $0x8] sm:$0xff]
        %s3863 = scalar_lea.vmem %s326, 3072 [#allocation9]
        %v3864 = vld [vmem:[%s3863] sm:$0xff]
        %v3865 = vld [vmem:[%s3863 + $0x8] sm:$0xff]
        %v3866 = vld [vmem:[%s3863 + $0x10] sm:$0xff]
        %v3867 = vld [vmem:[%s3863 + $0x18] sm:$0xff]
        %v3868 = vld [vmem:[%s3863 + $0x20] sm:$0xff]
        %v3869 = vld [vmem:[%s3863 + $0x28] sm:$0xff]
        %v3870 = vld [vmem:[%s3863 + $0x30] sm:$0xff]
        %v3871 = vld [vmem:[%s3863 + $0x38] sm:$0xff]
        %v3872 = vld [vmem:[%s3863 + $0x40] sm:$0xff]
        %v3873 = vld [vmem:[%s3863 + $0x48] sm:$0xff]
        %v3874 = vld [vmem:[%s3863 + $0x50] sm:$0xff]
        %v3875 = vld [vmem:[%s3863 + $0x58] sm:$0xff]
        %v3876 = vld [vmem:[%s3863 + $0x60] sm:$0xff]
        %v3877 = vld [vmem:[%s3863 + $0x68] sm:$0xff]
        %v3878 = vld [vmem:[%s3863 + $0x70] sm:$0xff]
        %v3879 = vld [vmem:[%s3863 + $0x78] sm:$0xff]
        %v3880 = vld [vmem:[%s3863 + $0x80] sm:$0xff]
        %v3881 = vld [vmem:[%s3863 + $0x88] sm:$0xff]
        %v3882 = vld [vmem:[%s3863 + $0x90] sm:$0xff]
        %v3883 = vld [vmem:[%s3863 + $0x98] sm:$0xff]
        %v3884 = vld [vmem:[%s3863 + $0xa0] sm:$0xff]
        %v3885 = vld [vmem:[%s3863 + $0xa8] sm:$0xff]
        %v3886 = vld [vmem:[%s3863 + $0xb0] sm:$0xff]
        %v3887 = vld [vmem:[%s3863 + $0xb8] sm:$0xff]
        %v3888 = vld [vmem:[%s3863 + $0xc0] sm:$0xff]
        %v3889 = vld [vmem:[%s3863 + $0xc8] sm:$0xff]
        %v3890 = vld [vmem:[%s3863 + $0xd0] sm:$0xff]
        %v3891 = vld [vmem:[%s3863 + $0xd8] sm:$0xff]
        %v3892 = vld [vmem:[%s3863 + $0xe0] sm:$0xff]
        %v3893 = vld [vmem:[%s3863 + $0xe8] sm:$0xff]
        %v3894 = vld [vmem:[%s3863 + $0xf0] sm:$0xff]
        %v3895 = vld [vmem:[%s3863 + $0xf8] sm:$0xff]
        %v3896 = vld [vmem:[%s3863 + $0x100] sm:$0xff]
        %v3897 = vld [vmem:[%s3863 + $0x108] sm:$0xff]
        %v3898 = vld [vmem:[%s3863 + $0x110] sm:$0xff]
        %v3899 = vld [vmem:[%s3863 + $0x118] sm:$0xff]
        %v3900 = vld [vmem:[%s3863 + $0x120] sm:$0xff]
        %v3901 = vld [vmem:[%s3863 + $0x128] sm:$0xff]
        %v3902 = vld [vmem:[%s3863 + $0x130] sm:$0xff]
        %v3903 = vld [vmem:[%s3863 + $0x138] sm:$0xff]
        %v3904 = vld [vmem:[%s3863 + $0x140] sm:$0xff]
        %v3905 = vld [vmem:[%s3863 + $0x148] sm:$0xff]
        %v3906 = vld [vmem:[%s3863 + $0x150] sm:$0xff]
        %v3907 = vld [vmem:[%s3863 + $0x158] sm:$0xff]
        %v3908 = vld [vmem:[%s3863 + $0x160] sm:$0xff]
        %v3909 = vld [vmem:[%s3863 + $0x168] sm:$0xff]
        %v3910 = vld [vmem:[%s3863 + $0x170] sm:$0xff]
        %v3911 = vld [vmem:[%s3863 + $0x178] sm:$0xff]
        %v3912 = vld [vmem:[%s3863 + $0x180] sm:$0xff]
        %v3913 = vld [vmem:[%s3863 + $0x188] sm:$0xff]
        %v3914 = vld [vmem:[%s3863 + $0x190] sm:$0xff]
        %v3915 = vld [vmem:[%s3863 + $0x198] sm:$0xff]
        %v3916 = vld [vmem:[%s3863 + $0x1a0] sm:$0xff]
        %v3917 = vld [vmem:[%s3863 + $0x1a8] sm:$0xff]
        %v3918 = vld [vmem:[%s3863 + $0x1b0] sm:$0xff]
        %v3919 = vld [vmem:[%s3863 + $0x1b8] sm:$0xff]
        %v3920 = vld [vmem:[%s3863 + $0x1c0] sm:$0xff]
        %v3921 = vld [vmem:[%s3863 + $0x1c8] sm:$0xff]
        %v3922 = vld [vmem:[%s3863 + $0x1d0] sm:$0xff]
        %v3923 = vld [vmem:[%s3863 + $0x1d8] sm:$0xff]
        %v3924 = vld [vmem:[%s3863 + $0x1e0] sm:$0xff]
        %v3925 = vld [vmem:[%s3863 + $0x1e8] sm:$0xff]
        %v3926 = vld [vmem:[%s3863 + $0x1f0] sm:$0xff]
        %v3927 = vld [vmem:[%s3863 + $0x1f8] sm:$0xff]
        %v3928 = vld [vmem:[%s3863 + $0x200] sm:$0xff]
        %v3929 = vld [vmem:[%s3863 + $0x208] sm:$0xff]
        %v3930 = vld [vmem:[%s3863 + $0x210] sm:$0xff]
        %v3931 = vld [vmem:[%s3863 + $0x218] sm:$0xff]
        %v3932 = vld [vmem:[%s3863 + $0x220] sm:$0xff]
        %v3933 = vld [vmem:[%s3863 + $0x228] sm:$0xff]
        %v3934 = vld [vmem:[%s3863 + $0x230] sm:$0xff]
        %v3935 = vld [vmem:[%s3863 + $0x238] sm:$0xff]
        %v3936 = vld [vmem:[%s3863 + $0x240] sm:$0xff]
        %v3937 = vld [vmem:[%s3863 + $0x248] sm:$0xff]
        %v3938 = vld [vmem:[%s3863 + $0x250] sm:$0xff]
        %v3939 = vld [vmem:[%s3863 + $0x258] sm:$0xff]
        %v3940 = vld [vmem:[%s3863 + $0x260] sm:$0xff]
        %v3941 = vld [vmem:[%s3863 + $0x268] sm:$0xff]
        %v3942 = vld [vmem:[%s3863 + $0x270] sm:$0xff]
        %v3943 = vld [vmem:[%s3863 + $0x278] sm:$0xff]
        %v3944 = vld [vmem:[%s3863 + $0x280] sm:$0xff]
        %v3945 = vld [vmem:[%s3863 + $0x288] sm:$0xff]
        %v3946 = vld [vmem:[%s3863 + $0x290] sm:$0xff]
        %v3947 = vld [vmem:[%s3863 + $0x298] sm:$0xff]
        %v3948 = vld [vmem:[%s3863 + $0x2a0] sm:$0xff]
        %v3949 = vld [vmem:[%s3863 + $0x2a8] sm:$0xff]
        %v3950 = vld [vmem:[%s3863 + $0x2b0] sm:$0xff]
        %v3951 = vld [vmem:[%s3863 + $0x2b8] sm:$0xff]
        %v3952 = vld [vmem:[%s3863 + $0x2c0] sm:$0xff]
        %v3953 = vld [vmem:[%s3863 + $0x2c8] sm:$0xff]
        %v3954 = vld [vmem:[%s3863 + $0x2d0] sm:$0xff]
        %v3955 = vld [vmem:[%s3863 + $0x2d8] sm:$0xff]
        %v3956 = vld [vmem:[%s3863 + $0x2e0] sm:$0xff]
        %v3957 = vld [vmem:[%s3863 + $0x2e8] sm:$0xff]
        %v3958 = vld [vmem:[%s3863 + $0x2f0] sm:$0xff]
        %v3959 = vld [vmem:[%s3863 + $0x2f8] sm:$0xff]
        %v3960 = vld [vmem:[%s3863 + $0x300] sm:$0xff]
        %v3961 = vld [vmem:[%s3863 + $0x308] sm:$0xff]
        %v3962 = vld [vmem:[%s3863 + $0x310] sm:$0xff]
        %v3963 = vld [vmem:[%s3863 + $0x318] sm:$0xff]
        %v3964 = vld [vmem:[%s3863 + $0x320] sm:$0xff]
        %v3965 = vld [vmem:[%s3863 + $0x328] sm:$0xff]
        %v3966 = vld [vmem:[%s3863 + $0x330] sm:$0xff]
        %v3967 = vld [vmem:[%s3863 + $0x338] sm:$0xff]
        %v3968 = vld [vmem:[%s3863 + $0x340] sm:$0xff]
        %v3969 = vld [vmem:[%s3863 + $0x348] sm:$0xff]
        %v3970 = vld [vmem:[%s3863 + $0x350] sm:$0xff]
        %v3971 = vld [vmem:[%s3863 + $0x358] sm:$0xff]
        %v3972 = vld [vmem:[%s3863 + $0x360] sm:$0xff]
        %v3973 = vld [vmem:[%s3863 + $0x368] sm:$0xff]
        %v3974 = vld [vmem:[%s3863 + $0x370] sm:$0xff]
        %v3975 = vld [vmem:[%s3863 + $0x378] sm:$0xff]
        %v3976 = vld [vmem:[%s3863 + $0x380] sm:$0xff]
        %v3977 = vld [vmem:[%s3863 + $0x388] sm:$0xff]
        %v3978 = vld [vmem:[%s3863 + $0x390] sm:$0xff]
        %v3979 = vld [vmem:[%s3863 + $0x398] sm:$0xff]
        %v3980 = vld [vmem:[%s3863 + $0x3a0] sm:$0xff]
        %v3981 = vld [vmem:[%s3863 + $0x3a8] sm:$0xff]
        %v3982 = vld [vmem:[%s3863 + $0x3b0] sm:$0xff]
        %v3983 = vld [vmem:[%s3863 + $0x3b8] sm:$0xff]
        %v3984 = vld [vmem:[%s3863 + $0x3c0] sm:$0xff]
        %v3985 = vld [vmem:[%s3863 + $0x3c8] sm:$0xff]
        %v3986 = vld [vmem:[%s3863 + $0x3d0] sm:$0xff]
        %v3987 = vld [vmem:[%s3863 + $0x3d8] sm:$0xff]
        %v3988 = vld [vmem:[%s3863 + $0x3e0] sm:$0xff]
        %v3989 = vld [vmem:[%s3863 + $0x3e8] sm:$0xff]
        %v3990 = vld [vmem:[%s3863 + $0x3f0] sm:$0xff]
        %v3991 = vld [vmem:[%s3863 + $0x3f8] sm:$0xff]
        %s3992 = smul.u32 %s3860, 4
        %s3993 = scalar_lea.vmem [#allocation11], %s3992
        %v3994 = vld [vmem:[%s3993] sm:$0xf]
        %v3996 = vlaneseq
        %v3997 = vshrl.u32 %v3996, 7
        %v3998 = vsub.s32 0, %v3997
        %v3999 = vrot.slane %v3994, %v3998
        %v4000 = vlaneseq
        %v4001 = vshrl.u32 %v4000, 7
        %v4002 = vsub.s32 1, %v4001
        %v4003 = vrot.slane %v3994, %v4002
        %v4004 = vlaneseq
        %v4005 = vshrl.u32 %v4004, 7
        %v4006 = vsub.s32 2, %v4005
        %v4007 = vrot.slane %v3994, %v4006
        %v4008 = vlaneseq
        %v4009 = vshrl.u32 %v4008, 7
        %v4010 = vsub.s32 3, %v4009
        %v4011 = vrot.slane %v3994, %v4010
        %v4018 = vunpack.c.l.b16 %v3861
        %v4019 = vunpack.c.h.b16 %v3861
        %v4020 = vunpack.c.l.b16 %v3862
        %v4021 = vunpack.c.h.b16 %v3862
        %v4022 = vpack.c.b16 %v4018, %v4018
        %v4023 = vpack.c.b16 %v4019, %v4019
        %v4024 = vpack.c.b16 %v4020, %v4020
        %v4025 = vpack.c.b16 %v4021, %v4021
        %v4158 = vunpack.c.l.b16 %v3864
        %v4159 = vunpack.c.h.b16 %v3864
        %v4160 = vunpack.c.l.b16 %v3865
        %v4161 = vunpack.c.h.b16 %v3865
        %v4162 = vunpack.c.l.b16 %v3866
        %v4163 = vunpack.c.h.b16 %v3866
        %v4164 = vunpack.c.l.b16 %v3867
        %v4165 = vunpack.c.h.b16 %v3867
        %v4166 = vunpack.c.l.b16 %v3868
        %v4167 = vunpack.c.h.b16 %v3868
        %v4168 = vunpack.c.l.b16 %v3869
        %v4169 = vunpack.c.h.b16 %v3869
        %v4170 = vunpack.c.l.b16 %v3870
        %v4171 = vunpack.c.h.b16 %v3870
        %v4172 = vunpack.c.l.b16 %v3871
        %v4173 = vunpack.c.h.b16 %v3871
        %v4174 = vunpack.c.l.b16 %v3872
        %v4175 = vunpack.c.h.b16 %v3872
        %v4176 = vunpack.c.l.b16 %v3873
        %v4177 = vunpack.c.h.b16 %v3873
        %v4178 = vunpack.c.l.b16 %v3874
        %v4179 = vunpack.c.h.b16 %v3874
        %v4180 = vunpack.c.l.b16 %v3875
        %v4181 = vunpack.c.h.b16 %v3875
        %v4182 = vunpack.c.l.b16 %v3876
        %v4183 = vunpack.c.h.b16 %v3876
        %v4184 = vunpack.c.l.b16 %v3877
        %v4185 = vunpack.c.h.b16 %v3877
        %v4186 = vunpack.c.l.b16 %v3878
        %v4187 = vunpack.c.h.b16 %v3878
        %v4188 = vunpack.c.l.b16 %v3879
        %v4189 = vunpack.c.h.b16 %v3879
        %v4190 = vunpack.c.l.b16 %v3880
        %v4191 = vunpack.c.h.b16 %v3880
        %v4192 = vunpack.c.l.b16 %v3881
        %v4193 = vunpack.c.h.b16 %v3881
        %v4194 = vunpack.c.l.b16 %v3882
        %v4195 = vunpack.c.h.b16 %v3882
        %v4196 = vunpack.c.l.b16 %v3883
        %v4197 = vunpack.c.h.b16 %v3883
        %v4198 = vunpack.c.l.b16 %v3884
        %v4199 = vunpack.c.h.b16 %v3884
        %v4200 = vunpack.c.l.b16 %v3885
        %v4201 = vunpack.c.h.b16 %v3885
        %v4202 = vunpack.c.l.b16 %v3886
        %v4203 = vunpack.c.h.b16 %v3886
        %v4204 = vunpack.c.l.b16 %v3887
        %v4205 = vunpack.c.h.b16 %v3887
        %v4206 = vunpack.c.l.b16 %v3888
        %v4207 = vunpack.c.h.b16 %v3888
        %v4208 = vunpack.c.l.b16 %v3889
        %v4209 = vunpack.c.h.b16 %v3889
        %v4210 = vunpack.c.l.b16 %v3890
        %v4211 = vunpack.c.h.b16 %v3890
        %v4212 = vunpack.c.l.b16 %v3891
        %v4213 = vunpack.c.h.b16 %v3891
        %v4214 = vunpack.c.l.b16 %v3892
        %v4215 = vunpack.c.h.b16 %v3892
        %v4216 = vunpack.c.l.b16 %v3893
        %v4217 = vunpack.c.h.b16 %v3893
        %v4218 = vunpack.c.l.b16 %v3894
        %v4219 = vunpack.c.h.b16 %v3894
        %v4220 = vunpack.c.l.b16 %v3895
        %v4221 = vunpack.c.h.b16 %v3895
        %v4222 = vunpack.c.l.b16 %v3896
        %v4223 = vunpack.c.h.b16 %v3896
        %v4224 = vunpack.c.l.b16 %v3897
        %v4225 = vunpack.c.h.b16 %v3897
        %v4226 = vunpack.c.l.b16 %v3898
        %v4227 = vunpack.c.h.b16 %v3898
        %v4228 = vunpack.c.l.b16 %v3899
        %v4229 = vunpack.c.h.b16 %v3899
        %v4230 = vunpack.c.l.b16 %v3900
        %v4231 = vunpack.c.h.b16 %v3900
        %v4232 = vunpack.c.l.b16 %v3901
        %v4233 = vunpack.c.h.b16 %v3901
        %v4234 = vunpack.c.l.b16 %v3902
        %v4235 = vunpack.c.h.b16 %v3902
        %v4236 = vunpack.c.l.b16 %v3903
        %v4237 = vunpack.c.h.b16 %v3903
        %v4238 = vunpack.c.l.b16 %v3904
        %v4239 = vunpack.c.h.b16 %v3904
        %v4240 = vunpack.c.l.b16 %v3905
        %v4241 = vunpack.c.h.b16 %v3905
        %v4242 = vunpack.c.l.b16 %v3906
        %v4243 = vunpack.c.h.b16 %v3906
        %v4244 = vunpack.c.l.b16 %v3907
        %v4245 = vunpack.c.h.b16 %v3907
        %v4246 = vunpack.c.l.b16 %v3908
        %v4247 = vunpack.c.h.b16 %v3908
        %v4248 = vunpack.c.l.b16 %v3909
        %v4249 = vunpack.c.h.b16 %v3909
        %v4250 = vunpack.c.l.b16 %v3910
        %v4251 = vunpack.c.h.b16 %v3910
        %v4252 = vunpack.c.l.b16 %v3911
        %v4253 = vunpack.c.h.b16 %v3911
        %v4254 = vunpack.c.l.b16 %v3912
        %v4255 = vunpack.c.h.b16 %v3912
        %v4256 = vunpack.c.l.b16 %v3913
        %v4257 = vunpack.c.h.b16 %v3913
        %v4258 = vunpack.c.l.b16 %v3914
        %v4259 = vunpack.c.h.b16 %v3914
        %v4260 = vunpack.c.l.b16 %v3915
        %v4261 = vunpack.c.h.b16 %v3915
        %v4262 = vunpack.c.l.b16 %v3916
        %v4263 = vunpack.c.h.b16 %v3916
        %v4264 = vunpack.c.l.b16 %v3917
        %v4265 = vunpack.c.h.b16 %v3917
        %v4266 = vunpack.c.l.b16 %v3918
        %v4267 = vunpack.c.h.b16 %v3918
        %v4268 = vunpack.c.l.b16 %v3919
        %v4269 = vunpack.c.h.b16 %v3919
        %v4270 = vunpack.c.l.b16 %v3920
        %v4271 = vunpack.c.h.b16 %v3920
        %v4272 = vunpack.c.l.b16 %v3921
        %v4273 = vunpack.c.h.b16 %v3921
        %v4274 = vunpack.c.l.b16 %v3922
        %v4275 = vunpack.c.h.b16 %v3922
        %v4276 = vunpack.c.l.b16 %v3923
        %v4277 = vunpack.c.h.b16 %v3923
        %v4278 = vunpack.c.l.b16 %v3924
        %v4279 = vunpack.c.h.b16 %v3924
        %v4280 = vunpack.c.l.b16 %v3925
        %v4281 = vunpack.c.h.b16 %v3925
        %v4282 = vunpack.c.l.b16 %v3926
        %v4283 = vunpack.c.h.b16 %v3926
        %v4284 = vunpack.c.l.b16 %v3927
        %v4285 = vunpack.c.h.b16 %v3927
        %v4286 = vunpack.c.l.b16 %v3928
        %v4287 = vunpack.c.h.b16 %v3928
        %v4288 = vunpack.c.l.b16 %v3929
        %v4289 = vunpack.c.h.b16 %v3929
        %v4290 = vunpack.c.l.b16 %v3930
        %v4291 = vunpack.c.h.b16 %v3930
        %v4292 = vunpack.c.l.b16 %v3931
        %v4293 = vunpack.c.h.b16 %v3931
        %v4294 = vunpack.c.l.b16 %v3932
        %v4295 = vunpack.c.h.b16 %v3932
        %v4296 = vunpack.c.l.b16 %v3933
        %v4297 = vunpack.c.h.b16 %v3933
        %v4298 = vunpack.c.l.b16 %v3934
        %v4299 = vunpack.c.h.b16 %v3934
        %v4300 = vunpack.c.l.b16 %v3935
        %v4301 = vunpack.c.h.b16 %v3935
        %v4302 = vunpack.c.l.b16 %v3936
        %v4303 = vunpack.c.h.b16 %v3936
        %v4304 = vunpack.c.l.b16 %v3937
        %v4305 = vunpack.c.h.b16 %v3937
        %v4306 = vunpack.c.l.b16 %v3938
        %v4307 = vunpack.c.h.b16 %v3938
        %v4308 = vunpack.c.l.b16 %v3939
        %v4309 = vunpack.c.h.b16 %v3939
        %v4310 = vunpack.c.l.b16 %v3940
        %v4311 = vunpack.c.h.b16 %v3940
        %v4312 = vunpack.c.l.b16 %v3941
        %v4313 = vunpack.c.h.b16 %v3941
        %v4314 = vunpack.c.l.b16 %v3942
        %v4315 = vunpack.c.h.b16 %v3942
        %v4316 = vunpack.c.l.b16 %v3943
        %v4317 = vunpack.c.h.b16 %v3943
        %v4318 = vunpack.c.l.b16 %v3944
        %v4319 = vunpack.c.h.b16 %v3944
        %v4320 = vunpack.c.l.b16 %v3945
        %v4321 = vunpack.c.h.b16 %v3945
        %v4322 = vunpack.c.l.b16 %v3946
        %v4323 = vunpack.c.h.b16 %v3946
        %v4324 = vunpack.c.l.b16 %v3947
        %v4325 = vunpack.c.h.b16 %v3947
        %v4326 = vunpack.c.l.b16 %v3948
        %v4327 = vunpack.c.h.b16 %v3948
        %v4328 = vunpack.c.l.b16 %v3949
        %v4329 = vunpack.c.h.b16 %v3949
        %v4330 = vunpack.c.l.b16 %v3950
        %v4331 = vunpack.c.h.b16 %v3950
        %v4332 = vunpack.c.l.b16 %v3951
        %v4333 = vunpack.c.h.b16 %v3951
        %v4334 = vunpack.c.l.b16 %v3952
        %v4335 = vunpack.c.h.b16 %v3952
        %v4336 = vunpack.c.l.b16 %v3953
        %v4337 = vunpack.c.h.b16 %v3953
        %v4338 = vunpack.c.l.b16 %v3954
        %v4339 = vunpack.c.h.b16 %v3954
        %v4340 = vunpack.c.l.b16 %v3955
        %v4341 = vunpack.c.h.b16 %v3955
        %v4342 = vunpack.c.l.b16 %v3956
        %v4343 = vunpack.c.h.b16 %v3956
        %v4344 = vunpack.c.l.b16 %v3957
        %v4345 = vunpack.c.h.b16 %v3957
        %v4346 = vunpack.c.l.b16 %v3958
        %v4347 = vunpack.c.h.b16 %v3958
        %v4348 = vunpack.c.l.b16 %v3959
        %v4349 = vunpack.c.h.b16 %v3959
        %v4350 = vunpack.c.l.b16 %v3960
        %v4351 = vunpack.c.h.b16 %v3960
        %v4352 = vunpack.c.l.b16 %v3961
        %v4353 = vunpack.c.h.b16 %v3961
        %v4354 = vunpack.c.l.b16 %v3962
        %v4355 = vunpack.c.h.b16 %v3962
        %v4356 = vunpack.c.l.b16 %v3963
        %v4357 = vunpack.c.h.b16 %v3963
        %v4358 = vunpack.c.l.b16 %v3964
        %v4359 = vunpack.c.h.b16 %v3964
        %v4360 = vunpack.c.l.b16 %v3965
        %v4361 = vunpack.c.h.b16 %v3965
        %v4362 = vunpack.c.l.b16 %v3966
        %v4363 = vunpack.c.h.b16 %v3966
        %v4364 = vunpack.c.l.b16 %v3967
        %v4365 = vunpack.c.h.b16 %v3967
        %v4366 = vunpack.c.l.b16 %v3968
        %v4367 = vunpack.c.h.b16 %v3968
        %v4368 = vunpack.c.l.b16 %v3969
        %v4369 = vunpack.c.h.b16 %v3969
        %v4370 = vunpack.c.l.b16 %v3970
        %v4371 = vunpack.c.h.b16 %v3970
        %v4372 = vunpack.c.l.b16 %v3971
        %v4373 = vunpack.c.h.b16 %v3971
        %v4374 = vunpack.c.l.b16 %v3972
        %v4375 = vunpack.c.h.b16 %v3972
        %v4376 = vunpack.c.l.b16 %v3973
        %v4377 = vunpack.c.h.b16 %v3973
        %v4378 = vunpack.c.l.b16 %v3974
        %v4379 = vunpack.c.h.b16 %v3974
        %v4380 = vunpack.c.l.b16 %v3975
        %v4381 = vunpack.c.h.b16 %v3975
        %v4382 = vunpack.c.l.b16 %v3976
        %v4383 = vunpack.c.h.b16 %v3976
        %v4384 = vunpack.c.l.b16 %v3977
        %v4385 = vunpack.c.h.b16 %v3977
        %v4386 = vunpack.c.l.b16 %v3978
        %v4387 = vunpack.c.h.b16 %v3978
        %v4388 = vunpack.c.l.b16 %v3979
        %v4389 = vunpack.c.h.b16 %v3979
        %v4390 = vunpack.c.l.b16 %v3980
        %v4391 = vunpack.c.h.b16 %v3980
        %v4392 = vunpack.c.l.b16 %v3981
        %v4393 = vunpack.c.h.b16 %v3981
        %v4394 = vunpack.c.l.b16 %v3982
        %v4395 = vunpack.c.h.b16 %v3982
        %v4396 = vunpack.c.l.b16 %v3983
        %v4397 = vunpack.c.h.b16 %v3983
        %v4398 = vunpack.c.l.b16 %v3984
        %v4399 = vunpack.c.h.b16 %v3984
        %v4400 = vunpack.c.l.b16 %v3985
        %v4401 = vunpack.c.h.b16 %v3985
        %v4402 = vunpack.c.l.b16 %v3986
        %v4403 = vunpack.c.h.b16 %v3986
        %v4404 = vunpack.c.l.b16 %v3987
        %v4405 = vunpack.c.h.b16 %v3987
        %v4406 = vunpack.c.l.b16 %v3988
        %v4407 = vunpack.c.h.b16 %v3988
        %v4408 = vunpack.c.l.b16 %v3989
        %v4409 = vunpack.c.h.b16 %v3989
        %v4410 = vunpack.c.l.b16 %v3990
        %v4411 = vunpack.c.h.b16 %v3990
        %v4412 = vunpack.c.l.b16 %v3991
        %v4413 = vunpack.c.h.b16 %v3991
        %v4414 = vpack.c.b16 %v4162, %v4158
        %v4415 = vpack.c.b16 %v4163, %v4159
        %v4416 = vpack.c.b16 %v4164, %v4160
        %v4417 = vpack.c.b16 %v4165, %v4161
        %v4418 = vpack.c.b16 %v4170, %v4166
        %v4419 = vpack.c.b16 %v4171, %v4167
        %v4420 = vpack.c.b16 %v4172, %v4168
        %v4421 = vpack.c.b16 %v4173, %v4169
        %v4422 = vpack.c.b16 %v4178, %v4174
        %v4423 = vpack.c.b16 %v4179, %v4175
        %v4424 = vpack.c.b16 %v4180, %v4176
        %v4425 = vpack.c.b16 %v4181, %v4177
        %v4426 = vpack.c.b16 %v4186, %v4182
        %v4427 = vpack.c.b16 %v4187, %v4183
        %v4428 = vpack.c.b16 %v4188, %v4184
        %v4429 = vpack.c.b16 %v4189, %v4185
        %v4430 = vpack.c.b16 %v4194, %v4190
        %v4431 = vpack.c.b16 %v4195, %v4191
        %v4432 = vpack.c.b16 %v4196, %v4192
        %v4433 = vpack.c.b16 %v4197, %v4193
        %v4434 = vpack.c.b16 %v4202, %v4198
        %v4435 = vpack.c.b16 %v4203, %v4199
        %v4436 = vpack.c.b16 %v4204, %v4200
        %v4437 = vpack.c.b16 %v4205, %v4201
        %v4438 = vpack.c.b16 %v4210, %v4206
        %v4439 = vpack.c.b16 %v4211, %v4207
        %v4440 = vpack.c.b16 %v4212, %v4208
        %v4441 = vpack.c.b16 %v4213, %v4209
        %v4442 = vpack.c.b16 %v4218, %v4214
        %v4443 = vpack.c.b16 %v4219, %v4215
        %v4444 = vpack.c.b16 %v4220, %v4216
        %v4445 = vpack.c.b16 %v4221, %v4217
        %v4446 = vpack.c.b16 %v4226, %v4222
        %v4447 = vpack.c.b16 %v4227, %v4223
        %v4448 = vpack.c.b16 %v4228, %v4224
        %v4449 = vpack.c.b16 %v4229, %v4225
        %v4450 = vpack.c.b16 %v4234, %v4230
        %v4451 = vpack.c.b16 %v4235, %v4231
        %v4452 = vpack.c.b16 %v4236, %v4232
        %v4453 = vpack.c.b16 %v4237, %v4233
        %v4454 = vpack.c.b16 %v4242, %v4238
        %v4455 = vpack.c.b16 %v4243, %v4239
        %v4456 = vpack.c.b16 %v4244, %v4240
        %v4457 = vpack.c.b16 %v4245, %v4241
        %v4458 = vpack.c.b16 %v4250, %v4246
        %v4459 = vpack.c.b16 %v4251, %v4247
        %v4460 = vpack.c.b16 %v4252, %v4248
        %v4461 = vpack.c.b16 %v4253, %v4249
        %v4462 = vpack.c.b16 %v4258, %v4254
        %v4463 = vpack.c.b16 %v4259, %v4255
        %v4464 = vpack.c.b16 %v4260, %v4256
        %v4465 = vpack.c.b16 %v4261, %v4257
        %v4466 = vpack.c.b16 %v4266, %v4262
        %v4467 = vpack.c.b16 %v4267, %v4263
        %v4468 = vpack.c.b16 %v4268, %v4264
        %v4469 = vpack.c.b16 %v4269, %v4265
        %v4470 = vpack.c.b16 %v4274, %v4270
        %v4471 = vpack.c.b16 %v4275, %v4271
        %v4472 = vpack.c.b16 %v4276, %v4272
        %v4473 = vpack.c.b16 %v4277, %v4273
        %v4474 = vpack.c.b16 %v4282, %v4278
        %v4475 = vpack.c.b16 %v4283, %v4279
        %v4476 = vpack.c.b16 %v4284, %v4280
        %v4477 = vpack.c.b16 %v4285, %v4281
        %v4478 = vpack.c.b16 %v4290, %v4286
        %v4479 = vpack.c.b16 %v4291, %v4287
        %v4480 = vpack.c.b16 %v4292, %v4288
        %v4481 = vpack.c.b16 %v4293, %v4289
        %v4482 = vpack.c.b16 %v4298, %v4294
        %v4483 = vpack.c.b16 %v4299, %v4295
        %v4484 = vpack.c.b16 %v4300, %v4296
        %v4485 = vpack.c.b16 %v4301, %v4297
        %v4486 = vpack.c.b16 %v4306, %v4302
        %v4487 = vpack.c.b16 %v4307, %v4303
        %v4488 = vpack.c.b16 %v4308, %v4304
        %v4489 = vpack.c.b16 %v4309, %v4305
        %v4490 = vpack.c.b16 %v4314, %v4310
        %v4491 = vpack.c.b16 %v4315, %v4311
        %v4492 = vpack.c.b16 %v4316, %v4312
        %v4493 = vpack.c.b16 %v4317, %v4313
        %v4494 = vpack.c.b16 %v4322, %v4318
        %v4495 = vpack.c.b16 %v4323, %v4319
        %v4496 = vpack.c.b16 %v4324, %v4320
        %v4497 = vpack.c.b16 %v4325, %v4321
        %v4498 = vpack.c.b16 %v4330, %v4326
        %v4499 = vpack.c.b16 %v4331, %v4327
        %v4500 = vpack.c.b16 %v4332, %v4328
        %v4501 = vpack.c.b16 %v4333, %v4329
        %v4502 = vpack.c.b16 %v4338, %v4334
        %v4503 = vpack.c.b16 %v4339, %v4335
        %v4504 = vpack.c.b16 %v4340, %v4336
        %v4505 = vpack.c.b16 %v4341, %v4337
        %v4506 = vpack.c.b16 %v4346, %v4342
        %v4507 = vpack.c.b16 %v4347, %v4343
        %v4508 = vpack.c.b16 %v4348, %v4344
        %v4509 = vpack.c.b16 %v4349, %v4345
        %v4510 = vpack.c.b16 %v4354, %v4350
        %v4511 = vpack.c.b16 %v4355, %v4351
        %v4512 = vpack.c.b16 %v4356, %v4352
        %v4513 = vpack.c.b16 %v4357, %v4353
        %v4514 = vpack.c.b16 %v4362, %v4358
        %v4515 = vpack.c.b16 %v4363, %v4359
        %v4516 = vpack.c.b16 %v4364, %v4360
        %v4517 = vpack.c.b16 %v4365, %v4361
        %v4518 = vpack.c.b16 %v4370, %v4366
        %v4519 = vpack.c.b16 %v4371, %v4367
        %v4520 = vpack.c.b16 %v4372, %v4368
        %v4521 = vpack.c.b16 %v4373, %v4369
        %v4522 = vpack.c.b16 %v4378, %v4374
        %v4523 = vpack.c.b16 %v4379, %v4375
        %v4524 = vpack.c.b16 %v4380, %v4376
        %v4525 = vpack.c.b16 %v4381, %v4377
        %v4526 = vpack.c.b16 %v4386, %v4382
        %v4527 = vpack.c.b16 %v4387, %v4383
        %v4528 = vpack.c.b16 %v4388, %v4384
        %v4529 = vpack.c.b16 %v4389, %v4385
        %v4530 = vpack.c.b16 %v4394, %v4390
        %v4531 = vpack.c.b16 %v4395, %v4391
        %v4532 = vpack.c.b16 %v4396, %v4392
        %v4533 = vpack.c.b16 %v4397, %v4393
        %v4534 = vpack.c.b16 %v4402, %v4398
        %v4535 = vpack.c.b16 %v4403, %v4399
        %v4536 = vpack.c.b16 %v4404, %v4400
        %v4537 = vpack.c.b16 %v4405, %v4401
        %v4538 = vpack.c.b16 %v4410, %v4406
        %v4539 = vpack.c.b16 %v4411, %v4407
        %v4540 = vpack.c.b16 %v4412, %v4408
        %v4541 = vpack.c.b16 %v4413, %v4409
        %4670 = vmatprep.subr.bf16.mxu0 %v4415
        %4671 = vmatpush1.bf16.msra.mxu0 %v4414
        %4672 = vmatprep.subr.bf16.mxu0 %v4419
        %4673 = vmatpush1.bf16.msra.mxu0 %v4418
        %4674 = vmatprep.subr.bf16.mxu0 %v4423
        %4675 = vmatpush1.bf16.msra.mxu0 %v4422
        %4676 = vmatprep.subr.bf16.mxu0 %v4427
        %4677 = vmatpush1.bf16.msra.mxu0 %v4426
        %4678 = vmatprep.subr.bf16.mxu0 %v4431
        %4679 = vmatpush1.bf16.msra.mxu0 %v4430
        %4680 = vmatprep.subr.bf16.mxu0 %v4435
        %4681 = vmatpush1.bf16.msra.mxu0 %v4434
        %4682 = vmatprep.subr.bf16.mxu0 %v4439
        %4683 = vmatpush1.bf16.msra.mxu0 %v4438
        %4684 = vmatprep.subr.bf16.mxu0 %v4443
        %4685 = vmatpush1.bf16.msra.mxu0 %v4442
        %4686 = vmatprep.subr.bf16.mxu0 %v4447
        %4687 = vmatpush1.bf16.msra.mxu0 %v4446
        %4688 = vmatprep.subr.bf16.mxu0 %v4451
        %4689 = vmatpush1.bf16.msra.mxu0 %v4450
        %4690 = vmatprep.subr.bf16.mxu0 %v4455
        %4691 = vmatpush1.bf16.msra.mxu0 %v4454
        %4692 = vmatprep.subr.bf16.mxu0 %v4459
        %4693 = vmatpush1.bf16.msra.mxu0 %v4458
        %4694 = vmatprep.subr.bf16.mxu0 %v4463
        %4695 = vmatpush1.bf16.msra.mxu0 %v4462
        %4696 = vmatprep.subr.bf16.mxu0 %v4467
        %4697 = vmatpush1.bf16.msra.mxu0 %v4466
        %4698 = vmatprep.subr.bf16.mxu0 %v4471
        %4699 = vmatpush1.bf16.msra.mxu0 %v4470
        %4700 = vmatprep.subr.bf16.mxu0 %v4475
        %4701 = vmatpush1.bf16.msra.mxu0 %v4474
        %4702 = vmatprep.mubr.bf16.mxu0 %v4023
        %4703 = vmatmul.mubr.bf16.gmra.mrb[0].mxu0 %v4022
        %v4704 = vpop.f32.mrb[0].mxu0
        %v4705 = vadd.f32 %v3999, %v4704
        %v4706 = vpop.f32.mrb[0].mxu0
        %v4707 = vadd.f32 %v4003, %v4706
        %v4708 = vpop.f32.mrb[0].mxu0
        %v4709 = vpop.f32.mrb[0].mxu0
        %4710 = vdwg.mxu0
        %4711 = vmatprep.subr.bf16.mxu0 %v4479
        %4712 = vmatpush1.bf16.msra.mxu0 %v4478
        %4713 = vmatprep.subr.bf16.mxu0 %v4483
        %4714 = vmatpush1.bf16.msra.mxu0 %v4482
        %4715 = vmatprep.subr.bf16.mxu0 %v4487
        %4716 = vmatpush1.bf16.msra.mxu0 %v4486
        %4717 = vmatprep.subr.bf16.mxu0 %v4491
        %4718 = vmatpush1.bf16.msra.mxu0 %v4490
        %4719 = vmatprep.subr.bf16.mxu0 %v4495
        %4720 = vmatpush1.bf16.msra.mxu0 %v4494
        %4721 = vmatprep.subr.bf16.mxu0 %v4499
        %4722 = vmatpush1.bf16.msra.mxu0 %v4498
        %4723 = vmatprep.subr.bf16.mxu0 %v4503
        %4724 = vmatpush1.bf16.msra.mxu0 %v4502
        %4725 = vmatprep.subr.bf16.mxu0 %v4507
        %4726 = vmatpush1.bf16.msra.mxu0 %v4506
        %4727 = vmatprep.subr.bf16.mxu0 %v4511
        %4728 = vmatpush1.bf16.msra.mxu0 %v4510
        %4729 = vmatprep.subr.bf16.mxu0 %v4515
        %4730 = vmatpush1.bf16.msra.mxu0 %v4514
        %4731 = vmatprep.subr.bf16.mxu0 %v4519
        %4732 = vmatpush1.bf16.msra.mxu0 %v4518
        %4733 = vmatprep.subr.bf16.mxu0 %v4523
        %4734 = vmatpush1.bf16.msra.mxu0 %v4522
        %4735 = vmatprep.subr.bf16.mxu0 %v4527
        %4736 = vmatpush1.bf16.msra.mxu0 %v4526
        %4737 = vmatprep.subr.bf16.mxu0 %v4531
        %4738 = vmatpush1.bf16.msra.mxu0 %v4530
        %4739 = vmatprep.subr.bf16.mxu0 %v4535
        %4740 = vmatpush1.bf16.msra.mxu0 %v4534
        %4741 = vmatprep.subr.bf16.mxu0 %v4539
        %4742 = vmatpush1.bf16.msra.mxu0 %v4538
        %4743 = vmatprep.mubr.bf16.mxu0 %v4025
        %4744 = vmatmul.mubr.bf16.gmra.mrb[0].mxu0 %v4024
        %v4745 = vpop.f32.mrb[0].mxu0
        %v4746 = vadd.f32 %v4705, %v4745
        %v4747 = vpop.f32.mrb[0].mxu0
        %v4748 = vadd.f32 %v4707, %v4747
        %v4749 = vpop.f32.mrb[0].mxu0
        %v4750 = vpop.f32.mrb[0].mxu0
        %4751 = vdwg.mxu0
        %4752 = vmatprep.subr.bf16.mxu0 %v4417
        %4753 = vmatpush1.bf16.msra.mxu0 %v4416
        %4754 = vmatprep.subr.bf16.mxu0 %v4421
        %4755 = vmatpush1.bf16.msra.mxu0 %v4420
        %4756 = vmatprep.subr.bf16.mxu0 %v4425
        %4757 = vmatpush1.bf16.msra.mxu0 %v4424
        %4758 = vmatprep.subr.bf16.mxu0 %v4429
        %4759 = vmatpush1.bf16.msra.mxu0 %v4428
        %4760 = vmatprep.subr.bf16.mxu0 %v4433
        %4761 = vmatpush1.bf16.msra.mxu0 %v4432
        %4762 = vmatprep.subr.bf16.mxu0 %v4437
        %4763 = vmatpush1.bf16.msra.mxu0 %v4436
        %4764 = vmatprep.subr.bf16.mxu0 %v4441
        %4765 = vmatpush1.bf16.msra.mxu0 %v4440
        %4766 = vmatprep.subr.bf16.mxu0 %v4445
        %4767 = vmatpush1.bf16.msra.mxu0 %v4444
        %4768 = vmatprep.subr.bf16.mxu0 %v4449
        %4769 = vmatpush1.bf16.msra.mxu0 %v4448
        %4770 = vmatprep.subr.bf16.mxu0 %v4453
        %4771 = vmatpush1.bf16.msra.mxu0 %v4452
        %4772 = vmatprep.subr.bf16.mxu0 %v4457
        %4773 = vmatpush1.bf16.msra.mxu0 %v4456
        %4774 = vmatprep.subr.bf16.mxu0 %v4461
        %4775 = vmatpush1.bf16.msra.mxu0 %v4460
        %4776 = vmatprep.subr.bf16.mxu0 %v4465
        %4777 = vmatpush1.bf16.msra.mxu0 %v4464
        %4778 = vmatprep.subr.bf16.mxu0 %v4469
        %4779 = vmatpush1.bf16.msra.mxu0 %v4468
        %4780 = vmatprep.subr.bf16.mxu0 %v4473
        %4781 = vmatpush1.bf16.msra.mxu0 %v4472
        %4782 = vmatprep.subr.bf16.mxu0 %v4477
        %4783 = vmatpush1.bf16.msra.mxu0 %v4476
        %4784 = vmatprep.mubr.bf16.mxu0 %v4023
        %4785 = vmatmul.mubr.bf16.gmra.mrb[0].mxu0 %v4022
        %v4786 = vpop.f32.mrb[0].mxu0
        %v4787 = vadd.f32 %v4007, %v4786
        %v4788 = vpop.f32.mrb[0].mxu0
        %v4789 = vadd.f32 %v4011, %v4788
        %v4790 = vpop.f32.mrb[0].mxu0
        %v4791 = vpop.f32.mrb[0].mxu0
        %4792 = vdwg.mxu0
        %4793 = vmatprep.subr.bf16.mxu0 %v4481
        %4794 = vmatpush1.bf16.msra.mxu0 %v4480
        %4795 = vmatprep.subr.bf16.mxu0 %v4485
        %4796 = vmatpush1.bf16.msra.mxu0 %v4484
        %4797 = vmatprep.subr.bf16.mxu0 %v4489
        %4798 = vmatpush1.bf16.msra.mxu0 %v4488
        %4799 = vmatprep.subr.bf16.mxu0 %v4493
        %4800 = vmatpush1.bf16.msra.mxu0 %v4492
        %4801 = vmatprep.subr.bf16.mxu0 %v4497
        %4802 = vmatpush1.bf16.msra.mxu0 %v4496
        %4803 = vmatprep.subr.bf16.mxu0 %v4501
        %4804 = vmatpush1.bf16.msra.mxu0 %v4500
        %4805 = vmatprep.subr.bf16.mxu0 %v4505
        %4806 = vmatpush1.bf16.msra.mxu0 %v4504
        %4807 = vmatprep.subr.bf16.mxu0 %v4509
        %4808 = vmatpush1.bf16.msra.mxu0 %v4508
        %4809 = vmatprep.subr.bf16.mxu0 %v4513
        %4810 = vmatpush1.bf16.msra.mxu0 %v4512
        %4811 = vmatprep.subr.bf16.mxu0 %v4517
        %4812 = vmatpush1.bf16.msra.mxu0 %v4516
        %4813 = vmatprep.subr.bf16.mxu0 %v4521
        %4814 = vmatpush1.bf16.msra.mxu0 %v4520
        %4815 = vmatprep.subr.bf16.mxu0 %v4525
        %4816 = vmatpush1.bf16.msra.mxu0 %v4524
        %4817 = vmatprep.subr.bf16.mxu0 %v4529
        %4818 = vmatpush1.bf16.msra.mxu0 %v4528
        %4819 = vmatprep.subr.bf16.mxu0 %v4533
        %4820 = vmatpush1.bf16.msra.mxu0 %v4532
        %4821 = vmatprep.subr.bf16.mxu0 %v4537
        %4822 = vmatpush1.bf16.msra.mxu0 %v4536
        %4823 = vmatprep.subr.bf16.mxu0 %v4541
        %4824 = vmatpush1.bf16.msra.mxu0 %v4540
        %4825 = vmatprep.mubr.bf16.mxu0 %v4025
        %4826 = vmatmul.mubr.bf16.gmra.mrb[0].mxu0 %v4024
        %v4827 = vpop.f32.mrb[0].mxu0
        %v4828 = vadd.f32 %v4787, %v4827
        %v4829 = vpop.f32.mrb[0].mxu0
        %v4830 = vadd.f32 %v4789, %v4829
        %v4831 = vpop.f32.mrb[0].mxu0
        %v4832 = vpop.f32.mrb[0].mxu0
        %4833 = vdwg.mxu0
        %p4834 = scmp.lt.s32.totalorder %s3860, 5
        // Predicated region
        $region105: #{gcn_forward.1} parent=47 // pred_check
          %p4835 = pneg %p4834
        $region106: #{gcn_forward.1} parent=47 // pred_check_branch
          %4837 = sbr.rel (%p4835) target = $region108
        $region107: #{gcn_forward.1} parent=47 // pred_region
          %v4838 = vld [vmem:[#allocation3] sm:$0xf]
          %v4839 = vpack.c.bf16 %v4746, %v4746
          %v4840 = vpack.c.bf16 %v4748, %v4748
          %v4841 = vpack.c.bf16 %v4828, %v4828
          %v4842 = vpack.c.bf16 %v4830, %v4830
          %vm4843 = vcmask 64512
          %v4845 = vsel %vm4843, %v4838, 0
          %vm4847 = vcmask 1043456
          %v4849 = vsel %vm4847, %v4839, 0
          %v4852 = vsel %vm4847, %v4840, 0
          %v4855 = vsel %vm4847, %v4841, 0
          %v4858 = vsel %vm4847, %v4842, 0
          %4860 = vmatprep.subr.bf16.mxu0 %v4852
          %4861 = vmatpush1.bf16.msra.mxu0 %v4849
          %4862 = vmatprep.subr.bf16.mxu0 0
          %4863 = vmatpush1.bf16.msra.mxu0 0
          %4864 = vmatprep.subr.bf16.mxu0 0
          %4865 = vmatpush1.bf16.msra.mxu0 0
          %4866 = vmatprep.subr.bf16.mxu0 0
          %4867 = vmatpush1.bf16.msra.mxu0 0
          %4868 = vmatprep.subr.bf16.mxu0 0
          %4869 = vmatpush1.bf16.msra.mxu0 0
          %4870 = vmatprep.subr.bf16.mxu0 0
          %4871 = vmatpush1.bf16.msra.mxu0 0
          %4872 = vmatprep.subr.bf16.mxu0 0
          %4873 = vmatpush1.bf16.msra.mxu0 0
          %4874 = vmatprep.subr.bf16.mxu0 0
          %4875 = vmatpush1.bf16.msra.mxu0 0
          %4876 = vmatprep.subr.bf16.mxu0 0
          %4877 = vmatpush1.bf16.msra.mxu0 0
          %4878 = vmatprep.subr.bf16.mxu0 0
          %4879 = vmatpush1.bf16.msra.mxu0 0
          %4880 = vmatprep.subr.bf16.mxu0 0
          %4881 = vmatpush1.bf16.msra.mxu0 0
          %4882 = vmatprep.subr.bf16.mxu0 0
          %4883 = vmatpush1.bf16.msra.mxu0 0
          %4884 = vmatprep.subr.bf16.mxu0 0
          %4885 = vmatpush1.bf16.msra.mxu0 0
          %4886 = vmatprep.subr.bf16.mxu0 0
          %4887 = vmatpush1.bf16.msra.mxu0 0
          %4888 = vmatprep.subr.bf16.mxu0 0
          %4889 = vmatpush1.bf16.msra.mxu0 0
          %4890 = vmatprep.subr.bf16.mxu0 0
          %4891 = vmatpush1.bf16.msra.mxu0 0
          %4892 = vmatprep.mubr.bf16.mxu0 0
          %4893 = vmatmul.mubr.bf16.gmra.mrb[0].mxu0 %v4845
          %v4894 = vpop.f32.mrb[0].mxu0
          %v4895 = vadd.f32 0.0, %v4894
          %v4896 = vpop.f32.mrb[0].mxu0
          %v4897 = vadd.f32 0.0, %v4896
          %v4898 = vpop.f32.mrb[0].mxu0
          %v4899 = vpop.f32.mrb[0].mxu0
          %4900 = vdwg.mxu0
          %4901 = vmatprep.subr.bf16.mxu0 %v4858
          %4902 = vmatpush1.bf16.msra.mxu0 %v4855
          %4903 = vmatprep.subr.bf16.mxu0 0
          %4904 = vmatpush1.bf16.msra.mxu0 0
          %4905 = vmatprep.subr.bf16.mxu0 0
          %4906 = vmatpush1.bf16.msra.mxu0 0
          %4907 = vmatprep.subr.bf16.mxu0 0
          %4908 = vmatpush1.bf16.msra.mxu0 0
          %4909 = vmatprep.subr.bf16.mxu0 0
          %4910 = vmatpush1.bf16.msra.mxu0 0
          %4911 = vmatprep.subr.bf16.mxu0 0
          %4912 = vmatpush1.bf16.msra.mxu0 0
          %4913 = vmatprep.subr.bf16.mxu0 0
          %4914 = vmatpush1.bf16.msra.mxu0 0
          %4915 = vmatprep.subr.bf16.mxu0 0
          %4916 = vmatpush1.bf16.msra.mxu0 0
          %4917 = vmatprep.subr.bf16.mxu0 0
          %4918 = vmatpush1.bf16.msra.mxu0 0
          %4919 = vmatprep.subr.bf16.mxu0 0
          %4920 = vmatpush1.bf16.msra.mxu0 0
          %4921 = vmatprep.subr.bf16.mxu0 0
          %4922 = vmatpush1.bf16.msra.mxu0 0
          %4923 = vmatprep.subr.bf16.mxu0 0
          %4924 = vmatpush1.bf16.msra.mxu0 0
          %4925 = vmatprep.subr.bf16.mxu0 0
          %4926 = vmatpush1.bf16.msra.mxu0 0
          %4927 = vmatprep.subr.bf16.mxu0 0
          %4928 = vmatpush1.bf16.msra.mxu0 0
          %4929 = vmatprep.subr.bf16.mxu0 0
          %4930 = vmatpush1.bf16.msra.mxu0 0
          %4931 = vmatprep.subr.bf16.mxu0 0
          %4932 = vmatpush1.bf16.msra.mxu0 0
          %4933 = vmatprep.mubr.bf16.mxu0 0
          %4934 = vmatmul.mubr.bf16.gmra.mrb[0].mxu0 %v4845
          %v4935 = vpop.f32.mrb[0].mxu0
          %v4936 = vadd.f32 0.0, %v4935
          %v4937 = vpop.f32.mrb[0].mxu0
          %v4938 = vadd.f32 0.0, %v4937
          %v4939 = vpop.f32.mrb[0].mxu0
          %v4940 = vpop.f32.mrb[0].mxu0
          %4941 = vdwg.mxu0
          %v4942 = vmax.f32 %v4895, 0.0
          %v4943 = vmax.f32 %v4897, 0.0
          %v4944 = vmax.f32 %v4936, 0.0
          %v4945 = vmax.f32 %v4938, 0.0
          %v4946 = vpack.c.bf16 %v4942, %v4942
          %v4947 = vpack.c.bf16 %v4943, %v4943
          %v4948 = vpack.c.bf16 %v4944, %v4944
          %v4949 = vpack.c.bf16 %v4945, %v4945
          %v4954 = vunpack.c.l.b16 %v4946
          %v4955 = vunpack.c.l.b16 %v4947
          %v4956 = vunpack.c.l.b16 %v4948
          %v4957 = vunpack.c.l.b16 %v4949
          %v4958 = vpack.c.b16 %v4955, %v4954
          %v4959 = vpack.c.b16 %v4957, %v4956
          %4962 = vst [vmem:[#allocation2] sm:$0xff] %v4958
          %4963 = vst [vmem:[#allocation2 + $0x8] sm:$0xff] %v4959
        $region108: #{gcn_forward.1} parent=47 // pred_fallthru
          _
        %p4964 = scmp.ge.s32.totalorder %s3860, 5
        // Predicated region
        $region109: #{gcn_forward.1} parent=47 // pred_check
          %p4965 = pneg %p4964
        $region110: #{gcn_forward.1} parent=47 // pred_check_branch
          %4967 = sbr.rel (%p4965) target = $region112
        $region111: #{gcn_forward.1} parent=47 // pred_region
          %v4968 = vmax.f32 %v4746, 0.0
          %v4969 = vmax.f32 %v4748, 0.0
          %v4970 = vmax.f32 %v4828, 0.0
          %v4971 = vmax.f32 %v4830, 0.0
          %v4972 = vpack.c.bf16 %v4968, %v4968
          %v4973 = vpack.c.bf16 %v4969, %v4969
          %v4974 = vpack.c.bf16 %v4970, %v4970
          %v4975 = vpack.c.bf16 %v4971, %v4971
          %v4980 = vunpack.c.l.b16 %v4972
          %v4981 = vunpack.c.l.b16 %v4973
          %v4982 = vunpack.c.l.b16 %v4974
          %v4983 = vunpack.c.l.b16 %v4975
          %v4984 = vpack.c.b16 %v4981, %v4980
          %v4985 = vpack.c.b16 %v4983, %v4982
          %4988 = vst [vmem:[#allocation2] sm:$0xff] %v4984
          %4989 = vst [vmem:[#allocation2 + $0x8] sm:$0xff] %v4985
        $region112: #{gcn_forward.1} parent=47 // pred_fallthru
          _
        %p4990 = scmp.eq.s32.totalorder %s24, 1
        // Predicated region
        $region113: #{gcn_forward.1} parent=47 // pred_check
          %p4991 = pneg %p4990
        $region114: #{gcn_forward.1} parent=47 // pred_check_branch
          %4993 = sbr.rel (%p4991) target = $region116
        $region115: #{gcn_forward.1} parent=47 // pred_region
          %v4994 = vld [vmem:[#allocation2] sm:$0xff]
          %v4995 = vld [vmem:[#allocation2 + $0x8] sm:$0xff]
          %v4996 = vld [vmem:[#allocation12] sm:$0xf]
          %v4997 = vld [vmem:[#allocation12 + $0x4] sm:$0xf]
          %v4998 = vld [vmem:[#allocation12 + $0x8] sm:$0xf]
          %v4999 = vld [vmem:[#allocation12 + $0xc] sm:$0xf]
          %v5000 = vld [vmem:[#allocation12 + $0x10] sm:$0xf]
          %v5001 = vld [vmem:[#allocation12 + $0x14] sm:$0xf]
          %v5002 = vld [vmem:[#allocation12 + $0x18] sm:$0xf]
          %v5003 = vld [vmem:[#allocation12 + $0x1c] sm:$0xf]
          %v5004 = vld [vmem:[#allocation12 + $0x20] sm:$0xf]
          %v5005 = vld [vmem:[#allocation12 + $0x24] sm:$0xf]
          %v5006 = vld [vmem:[#allocation12 + $0x28] sm:$0xf]
          %v5007 = vld [vmem:[#allocation12 + $0x2c] sm:$0xf]
          %v5008 = vld [vmem:[#allocation12 + $0x30] sm:$0xf]
          %v5009 = vld [vmem:[#allocation12 + $0x34] sm:$0xf]
          %v5010 = vld [vmem:[#allocation12 + $0x38] sm:$0xf]
          %v5011 = vld [vmem:[#allocation12 + $0x3c] sm:$0xf]
          %v5012 = vld [vmem:[#allocation12 + $0x40] sm:$0xf]
          %v5013 = vld [vmem:[#allocation12 + $0x44] sm:$0xf]
          %v5014 = vld [vmem:[#allocation12 + $0x48] sm:$0xf]
          %v5015 = vld [vmem:[#allocation12 + $0x4c] sm:$0xf]
          %v5016 = vld [vmem:[#allocation12 + $0x50] sm:$0xf]
          %v5017 = vld [vmem:[#allocation12 + $0x54] sm:$0xf]
          %v5018 = vld [vmem:[#allocation12 + $0x58] sm:$0xf]
          %v5019 = vld [vmem:[#allocation12 + $0x5c] sm:$0xf]
          %v5020 = vld [vmem:[#allocation12 + $0x60] sm:$0xf]
          %v5021 = vld [vmem:[#allocation12 + $0x64] sm:$0xf]
          %v5022 = vld [vmem:[#allocation12 + $0x68] sm:$0xf]
          %v5023 = vld [vmem:[#allocation12 + $0x6c] sm:$0xf]
          %v5024 = vld [vmem:[#allocation12 + $0x70] sm:$0xf]
          %v5025 = vld [vmem:[#allocation12 + $0x74] sm:$0xf]
          %v5026 = vld [vmem:[#allocation12 + $0x78] sm:$0xf]
          %v5027 = vld [vmem:[#allocation12 + $0x7c] sm:$0xf]
          %v5028 = vld [vmem:[#allocation12 + $0x80] sm:$0xf]
          %v5029 = vld [vmem:[#allocation12 + $0x84] sm:$0xf]
          %v5030 = vld [vmem:[#allocation12 + $0x88] sm:$0xf]
          %v5031 = vld [vmem:[#allocation12 + $0x8c] sm:$0xf]
          %v5032 = vld [vmem:[#allocation12 + $0x90] sm:$0xf]
          %v5033 = vld [vmem:[#allocation12 + $0x94] sm:$0xf]
          %v5034 = vld [vmem:[#allocation12 + $0x98] sm:$0xf]
          %v5035 = vld [vmem:[#allocation12 + $0x9c] sm:$0xf]
          %v5036 = vld [vmem:[#allocation12 + $0xa0] sm:$0xf]
          %v5037 = vld [vmem:[#allocation12 + $0xa4] sm:$0xf]
          %v5038 = vld [vmem:[#allocation12 + $0xa8] sm:$0xf]
          %v5039 = vld [vmem:[#allocation12 + $0xac] sm:$0xf]
          %v5040 = vld [vmem:[#allocation12 + $0xb0] sm:$0xf]
          %v5041 = vld [vmem:[#allocation12 + $0xb4] sm:$0xf]
          %v5042 = vld [vmem:[#allocation12 + $0xb8] sm:$0xf]
          %v5043 = vld [vmem:[#allocation12 + $0xbc] sm:$0xf]
          %v5044 = vld [vmem:[#allocation12 + $0xc0] sm:$0xf]
          %v5045 = vld [vmem:[#allocation12 + $0xc4] sm:$0xf]
          %v5046 = vld [vmem:[#allocation12 + $0xc8] sm:$0xf]
          %v5047 = vld [vmem:[#allocation12 + $0xcc] sm:$0xf]
          %v5048 = vld [vmem:[#allocation12 + $0xd0] sm:$0xf]
          %v5049 = vld [vmem:[#allocation12 + $0xd4] sm:$0xf]
          %v5050 = vld [vmem:[#allocation12 + $0xd8] sm:$0xf]
          %v5051 = vld [vmem:[#allocation12 + $0xdc] sm:$0xf]
          %v5052 = vld [vmem:[#allocation12 + $0xe0] sm:$0xf]
          %v5053 = vld [vmem:[#allocation12 + $0xe4] sm:$0xf]
          %v5054 = vld [vmem:[#allocation12 + $0xe8] sm:$0xf]
          %v5055 = vld [vmem:[#allocation12 + $0xec] sm:$0xf]
          %v5056 = vld [vmem:[#allocation12 + $0xf0] sm:$0xf]
          %v5057 = vld [vmem:[#allocation12 + $0xf4] sm:$0xf]
          %v5058 = vld [vmem:[#allocation12 + $0xf8] sm:$0xf]
          %v5059 = vld [vmem:[#allocation12 + $0xfc] sm:$0xf]
          %v5060 = vld [vmem:[#allocation14] sm:$0x1]
          %v5062 = vlaneseq
          %v5063 = vshrl.u32 %v5062, 7
          %v5064 = vsub.s32 0, %v5063
          %v5065 = vrot.slane %v5060, %v5064
          %v5069 = vunpack.c.l.b16 %v4994
          %v5070 = vunpack.c.h.b16 %v4994
          %v5071 = vunpack.c.l.b16 %v4995
          %v5072 = vunpack.c.h.b16 %v4995
          %v5073 = vpack.c.b16 %v5069, %v5069
          %v5074 = vpack.c.b16 %v5070, %v5070
          %v5075 = vpack.c.b16 %v5071, %v5071
          %v5076 = vpack.c.b16 %v5072, %v5072
          %v5145 = vunpack.c.l.b16 %v4996
          %v5146 = vunpack.c.l.b16 %v4997
          %v5147 = vunpack.c.l.b16 %v4998
          %v5148 = vunpack.c.l.b16 %v4999
          %v5149 = vunpack.c.l.b16 %v5000
          %v5150 = vunpack.c.l.b16 %v5001
          %v5151 = vunpack.c.l.b16 %v5002
          %v5152 = vunpack.c.l.b16 %v5003
          %v5153 = vunpack.c.l.b16 %v5004
          %v5154 = vunpack.c.l.b16 %v5005
          %v5155 = vunpack.c.l.b16 %v5006
          %v5156 = vunpack.c.l.b16 %v5007
          %v5157 = vunpack.c.l.b16 %v5008
          %v5158 = vunpack.c.l.b16 %v5009
          %v5159 = vunpack.c.l.b16 %v5010
          %v5160 = vunpack.c.l.b16 %v5011
          %v5161 = vunpack.c.l.b16 %v5012
          %v5162 = vunpack.c.l.b16 %v5013
          %v5163 = vunpack.c.l.b16 %v5014
          %v5164 = vunpack.c.l.b16 %v5015
          %v5165 = vunpack.c.l.b16 %v5016
          %v5166 = vunpack.c.l.b16 %v5017
          %v5167 = vunpack.c.l.b16 %v5018
          %v5168 = vunpack.c.l.b16 %v5019
          %v5169 = vunpack.c.l.b16 %v5020
          %v5170 = vunpack.c.l.b16 %v5021
          %v5171 = vunpack.c.l.b16 %v5022
          %v5172 = vunpack.c.l.b16 %v5023
          %v5173 = vunpack.c.l.b16 %v5024
          %v5174 = vunpack.c.l.b16 %v5025
          %v5175 = vunpack.c.l.b16 %v5026
          %v5176 = vunpack.c.l.b16 %v5027
          %v5177 = vunpack.c.l.b16 %v5028
          %v5178 = vunpack.c.l.b16 %v5029
          %v5179 = vunpack.c.l.b16 %v5030
          %v5180 = vunpack.c.l.b16 %v5031
          %v5181 = vunpack.c.l.b16 %v5032
          %v5182 = vunpack.c.l.b16 %v5033
          %v5183 = vunpack.c.l.b16 %v5034
          %v5184 = vunpack.c.l.b16 %v5035
          %v5185 = vunpack.c.l.b16 %v5036
          %v5186 = vunpack.c.l.b16 %v5037
          %v5187 = vunpack.c.l.b16 %v5038
          %v5188 = vunpack.c.l.b16 %v5039
          %v5189 = vunpack.c.l.b16 %v5040
          %v5190 = vunpack.c.l.b16 %v5041
          %v5191 = vunpack.c.l.b16 %v5042
          %v5192 = vunpack.c.l.b16 %v5043
          %v5193 = vunpack.c.l.b16 %v5044
          %v5194 = vunpack.c.l.b16 %v5045
          %v5195 = vunpack.c.l.b16 %v5046
          %v5196 = vunpack.c.l.b16 %v5047
          %v5197 = vunpack.c.l.b16 %v5048
          %v5198 = vunpack.c.l.b16 %v5049
          %v5199 = vunpack.c.l.b16 %v5050
          %v5200 = vunpack.c.l.b16 %v5051
          %v5201 = vunpack.c.l.b16 %v5052
          %v5202 = vunpack.c.l.b16 %v5053
          %v5203 = vunpack.c.l.b16 %v5054
          %v5204 = vunpack.c.l.b16 %v5055
          %v5205 = vunpack.c.l.b16 %v5056
          %v5206 = vunpack.c.l.b16 %v5057
          %v5207 = vunpack.c.l.b16 %v5058
          %v5208 = vunpack.c.l.b16 %v5059
          %v5209 = vpack.c.b16 %v5146, %v5145
          %v5210 = vpack.c.b16 %v5148, %v5147
          %v5211 = vpack.c.b16 %v5150, %v5149
          %v5212 = vpack.c.b16 %v5152, %v5151
          %v5213 = vpack.c.b16 %v5154, %v5153
          %v5214 = vpack.c.b16 %v5156, %v5155
          %v5215 = vpack.c.b16 %v5158, %v5157
          %v5216 = vpack.c.b16 %v5160, %v5159
          %v5217 = vpack.c.b16 %v5162, %v5161
          %v5218 = vpack.c.b16 %v5164, %v5163
          %v5219 = vpack.c.b16 %v5166, %v5165
          %v5220 = vpack.c.b16 %v5168, %v5167
          %v5221 = vpack.c.b16 %v5170, %v5169
          %v5222 = vpack.c.b16 %v5172, %v5171
          %v5223 = vpack.c.b16 %v5174, %v5173
          %v5224 = vpack.c.b16 %v5176, %v5175
          %v5225 = vpack.c.b16 %v5178, %v5177
          %v5226 = vpack.c.b16 %v5180, %v5179
          %v5227 = vpack.c.b16 %v5182, %v5181
          %v5228 = vpack.c.b16 %v5184, %v5183
          %v5229 = vpack.c.b16 %v5186, %v5185
          %v5230 = vpack.c.b16 %v5188, %v5187
          %v5231 = vpack.c.b16 %v5190, %v5189
          %v5232 = vpack.c.b16 %v5192, %v5191
          %v5233 = vpack.c.b16 %v5194, %v5193
          %v5234 = vpack.c.b16 %v5196, %v5195
          %v5235 = vpack.c.b16 %v5198, %v5197
          %v5236 = vpack.c.b16 %v5200, %v5199
          %v5237 = vpack.c.b16 %v5202, %v5201
          %v5238 = vpack.c.b16 %v5204, %v5203
          %v5239 = vpack.c.b16 %v5206, %v5205
          %v5240 = vpack.c.b16 %v5208, %v5207
          %5273 = vmatprep.subr.bf16.mxu0 0
          %5274 = vmatpush1.bf16.msra.mxu0 %v5209
          %5275 = vmatprep.subr.bf16.mxu0 0
          %5276 = vmatpush1.bf16.msra.mxu0 %v5210
          %5277 = vmatprep.subr.bf16.mxu0 0
          %5278 = vmatpush1.bf16.msra.mxu0 %v5211
          %5279 = vmatprep.subr.bf16.mxu0 0
          %5280 = vmatpush1.bf16.msra.mxu0 %v5212
          %5281 = vmatprep.subr.bf16.mxu0 0
          %5282 = vmatpush1.bf16.msra.mxu0 %v5213
          %5283 = vmatprep.subr.bf16.mxu0 0
          %5284 = vmatpush1.bf16.msra.mxu0 %v5214
          %5285 = vmatprep.subr.bf16.mxu0 0
          %5286 = vmatpush1.bf16.msra.mxu0 %v5215
          %5287 = vmatprep.subr.bf16.mxu0 0
          %5288 = vmatpush1.bf16.msra.mxu0 %v5216
          %5289 = vmatprep.subr.bf16.mxu0 0
          %5290 = vmatpush1.bf16.msra.mxu0 %v5217
          %5291 = vmatprep.subr.bf16.mxu0 0
          %5292 = vmatpush1.bf16.msra.mxu0 %v5218
          %5293 = vmatprep.subr.bf16.mxu0 0
          %5294 = vmatpush1.bf16.msra.mxu0 %v5219
          %5295 = vmatprep.subr.bf16.mxu0 0
          %5296 = vmatpush1.bf16.msra.mxu0 %v5220
          %5297 = vmatprep.subr.bf16.mxu0 0
          %5298 = vmatpush1.bf16.msra.mxu0 %v5221
          %5299 = vmatprep.subr.bf16.mxu0 0
          %5300 = vmatpush1.bf16.msra.mxu0 %v5222
          %5301 = vmatprep.subr.bf16.mxu0 0
          %5302 = vmatpush1.bf16.msra.mxu0 %v5223
          %5303 = vmatprep.subr.bf16.mxu0 0
          %5304 = vmatpush1.bf16.msra.mxu0 %v5224
          %5305 = vmatprep.mubr.bf16.mxu0 %v5074
          %5306 = vmatmul.mubr.bf16.gmra.mrb[0].mxu0 %v5073
          %v5307 = vpop.f32.mrb[0].mxu0
          %v5308 = vadd.f32 %v5065, %v5307
          %v5309 = vpop.f32.mrb[0].mxu0
          %v5310 = vpop.f32.mrb[0].mxu0
          %v5311 = vpop.f32.mrb[0].mxu0
          %5312 = vdwg.mxu0
          %5313 = vmatprep.subr.bf16.mxu0 0
          %5314 = vmatpush1.bf16.msra.mxu0 %v5225
          %5315 = vmatprep.subr.bf16.mxu0 0
          %5316 = vmatpush1.bf16.msra.mxu0 %v5226
          %5317 = vmatprep.subr.bf16.mxu0 0
          %5318 = vmatpush1.bf16.msra.mxu0 %v5227
          %5319 = vmatprep.subr.bf16.mxu0 0
          %5320 = vmatpush1.bf16.msra.mxu0 %v5228
          %5321 = vmatprep.subr.bf16.mxu0 0
          %5322 = vmatpush1.bf16.msra.mxu0 %v5229
          %5323 = vmatprep.subr.bf16.mxu0 0
          %5324 = vmatpush1.bf16.msra.mxu0 %v5230
          %5325 = vmatprep.subr.bf16.mxu0 0
          %5326 = vmatpush1.bf16.msra.mxu0 %v5231
          %5327 = vmatprep.subr.bf16.mxu0 0
          %5328 = vmatpush1.bf16.msra.mxu0 %v5232
          %5329 = vmatprep.subr.bf16.mxu0 0
          %5330 = vmatpush1.bf16.msra.mxu0 %v5233
          %5331 = vmatprep.subr.bf16.mxu0 0
          %5332 = vmatpush1.bf16.msra.mxu0 %v5234
          %5333 = vmatprep.subr.bf16.mxu0 0
          %5334 = vmatpush1.bf16.msra.mxu0 %v5235
          %5335 = vmatprep.subr.bf16.mxu0 0
          %5336 = vmatpush1.bf16.msra.mxu0 %v5236
          %5337 = vmatprep.subr.bf16.mxu0 0
          %5338 = vmatpush1.bf16.msra.mxu0 %v5237
          %5339 = vmatprep.subr.bf16.mxu0 0
          %5340 = vmatpush1.bf16.msra.mxu0 %v5238
          %5341 = vmatprep.subr.bf16.mxu0 0
          %5342 = vmatpush1.bf16.msra.mxu0 %v5239
          %5343 = vmatprep.subr.bf16.mxu0 0
          %5344 = vmatpush1.bf16.msra.mxu0 %v5240
          %5345 = vmatprep.mubr.bf16.mxu0 %v5076
          %5346 = vmatmul.mubr.bf16.gmra.mrb[0].mxu0 %v5075
          %v5347 = vpop.f32.mrb[0].mxu0
          %v5348 = vadd.f32 %v5308, %v5347
          %v5349 = vpop.f32.mrb[0].mxu0
          %v5350 = vpop.f32.mrb[0].mxu0
          %v5351 = vpop.f32.mrb[0].mxu0
          %5352 = vdwg.mxu0
          %5353 = vst [vmem:[%s7] sm:$0xff] %v5348
        $region116: #{gcn_forward.1} parent=47 // pred_fallthru
          _
        // Predicated region
        $region117: #{gcn_forward.1} parent=47 // pred_check
          %p5354 = pneg %p189
        $region118: #{gcn_forward.1} parent=47 // pred_check_branch
          %5356 = sbr.rel (%p5354) target = $region120
        $region119: #{gcn_forward.1} parent=47 // pred_region
          _
        $region120: #{gcn_forward.1} parent=47 // pred_fallthru
          _
        // Predicated region
        $region121: #{gcn_forward.1} parent=47 // pred_check
          %p5357 = pneg %p189
        $region122: #{gcn_forward.1} parent=47 // pred_check_branch
          %5359 = sbr.rel (%p5357) target = $region124
        $region123: #{gcn_forward.1} parent=47 // pred_region
          _
        $region124: #{gcn_forward.1} parent=47 // pred_fallthru
          _
      $region48: #{gcn_forward.1} parent=5 // pred_fallthru
        _
      %p5360 = scmp.le.s32.totalorder 2, %s19
      // Predicated region
      $region125: #{gcn_forward.1} parent=5 // pred_check
        %p5361 = pneg %p5360
      $region126: #{gcn_forward.1} parent=5 // pred_check_branch
        %5363 = sbr.rel (%p5361) target = $region128
      $region127: #{gcn_forward.1} parent=5 // pred_region
        %s5364 = ssub.s32 %s19, 2
      $region128: #{gcn_forward.1} parent=5 // pred_fallthru
        _
    $region6: #{gcn_forward.1} parent=1 // loop_footer
      %s23 = sadd.s32 1, %s19
    $region7: #{gcn_forward.1} parent=1 // loop_footer_branch
      %18 = sbr.rel target = $region3
    $region8: #{gcn_forward.1} parent=1 // loop_exit
      _
    %5365 = vsyncpa [#allocation5], 1
    %s5366 = scalar_lea.sflag [#allocation5], 1
    %5367 = vsyncpa %s5366, 1
    %5368 = vsyncpa [#allocation7], 1
    %5369 = vsyncpa [#allocation10], 1
    %s5370 = scalar_lea.sflag [#allocation10], 1
    %5371 = vsyncpa %s5370, 1
    %5372 = vsyncpa [#allocation13], 1

</llo_original>
